<compile_context>
chip_gen: v7x
topology: tpu7x:2x2x1
jax: 0.10.0
libtpu: 0.0.40
codegen_flags: <defaults>
</compile_context>

<pallas_src>
import functools

import jax
import jax.numpy as jnp
from jax.experimental import pallas as pl
from jax.experimental.pallas import tpu as pltpu


def _round_up(x, m):
    return (x + m - 1) // m * m


def _query_attention_kernel(len_ref, inp_ref, q_ref, out_ref, *, tb, inv_d):
    """One batch tile: inp (TB, S_pad, D), q (TB, 1, D), lens in SMEM, out (TB, S_pad)."""
    x = inp_ref[...]                      # (TB, S_pad, D) f32
    q = q_ref[...]                        # (TB, 1, D)     f32

    # att[b, s] = <x[b, s, :], q[b, :]> / D  -- batched contraction on the MXU.
    att = jnp.einsum(
        "bqd,bkd->bqk", q, x,
        preferred_element_type=jnp.float32,
        precision=jax.lax.Precision.HIGHEST,
    )[:, 0, :]                            # (TB, S_pad)
    att = att * jnp.float32(inv_d)        # divide-by-D as a constant multiply

    # mask[i, s] = s < len[b0 + i]   (lengths read as scalars from SMEM)
    b0 = pl.program_id(0) * tb
    rid = jax.lax.broadcasted_iota(jnp.int32, (tb, 1), 0)
    lens_col = jnp.zeros((tb, 1), jnp.int32)
    for i in range(tb):                   # tb is static & capped -> small unrolled loop
        lens_col = jnp.where(rid == i, len_ref[b0 + i], lens_col)
    col = jax.lax.broadcasted_iota(jnp.int32, att.shape, 1)
    mask = (col < lens_col).astype(jnp.float32)

    # Masked unnormalized-exp softmax (no max-subtraction, matching the PyTorch module).
    e = jnp.exp(att) * mask
    s = jnp.sum(e, axis=-1, keepdims=True) + jnp.float32(1e-4)
    inv = pl.reciprocal(s, approx=True)               # EUP slot (otherwise idle)
    inv = inv * (jnp.float32(2.0) - s * inv)          # one Newton step -> f32-accurate
    out_ref[...] = e * inv


def query_attention(inp, query, len_inp, *, vmem_tile_budget_bytes=16 * 1024 * 1024):
    """inp: (B, S, D) f32, query: (B, D) f32, len_inp: length-B ints. Returns (B, S)."""
    inp = jnp.asarray(inp, jnp.float32)
    query = jnp.asarray(query, jnp.float32)
    B, S, D = inp.shape

    # Lane-dense output / aligned blocks: pad S up to a multiple of 128.
    s_pad = _round_up(S, 128)

    # Batch tile: multiple of 8 sublanes; keep the double-buffered input tile within
    # the budget (well under v7x's 64 MiB physical VMEM).
    row_bytes = s_pad * D * 4 * 2                       # x2: double buffering
    tb = max(8, (vmem_tile_budget_bytes // (row_bytes * 8)) * 8)
    tb = min(tb, 256, _round_up(B, 8))
    b_pad = _round_up(B, tb)

    inp_p = jnp.pad(inp, ((0, b_pad - B), (0, s_pad - S), (0, 0)))
    q_p = jnp.pad(query, ((0, b_pad - B), (0, 0))).reshape(b_pad, 1, D)
    lens_p = jnp.zeros((b_pad,), jnp.int32).at[:B].set(
        jnp.asarray(len_inp, dtype=jnp.int32))          # padded rows: len 0 -> output 0

    kernel = functools.partial(_query_attention_kernel, tb=tb, inv_d=1.0 / D)

    out = pl.pallas_call(
        kernel,
        out_shape=jax.ShapeDtypeStruct((b_pad, s_pad), jnp.float32),
        grid_spec=pltpu.PrefetchScalarGridSpec(
            num_scalar_prefetch=1,                      # lengths -> SMEM
            grid=(b_pad // tb,),
            in_specs=[
                pl.BlockSpec((tb, s_pad, D), lambda b, lens: (b, 0, 0)),
                pl.BlockSpec((tb, 1, D), lambda b, lens: (b, 0, 0)),
            ],
            out_specs=pl.BlockSpec((tb, s_pad), lambda b, lens: (b, 0)),
        ),
        compiler_params=pltpu.CompilerParams(
            dimension_semantics=("parallel",),          # megacore sharding on v7x
            vmem_limit_bytes=32 * 1024 * 1024,          # lift v5e's 16 MiB scoped default
        ),
    )(lens_p, inp_p, q_p)

    return out[:B, :S]


def query_attention_ref(inp, query, len_inp):
    """Pure-JAX reference for correctness checking."""
    B, S, D = inp.shape
    att = jnp.einsum("bsd,bd->bs", inp, query,
                     precision=jax.lax.Precision.HIGHEST) / D
    lens = jnp.asarray(len_inp, dtype=jnp.int32)[:, None]
    mask = (jnp.arange(S)[None, :] < lens).astype(att.dtype)
    e = jnp.exp(att) * mask
    s = jnp.sum(e, axis=-1, keepdims=True) + 1e-4
    return e / s


if __name__ == "__main__":
    B, S, D = 2, 8, 32
    key = jax.random.PRNGKey(0)
    k_inp, k_q = jax.random.split(key)
    inp = jax.random.normal(k_inp, (B, S, D), dtype=jnp.float32)
    query = jax.random.normal(k_q, (B, D), dtype=jnp.float32)
    len_inp = [8, 5]  # per-batch valid lengths

    out = query_attention(inp, query, len_inp)
    out = jax.block_until_ready(out)

    ref = query_attention_ref(inp, query, len_inp)
    assert out.shape == (B, S)
    assert jnp.allclose(out, ref, atol=1e-5, rtol=1e-5), "mismatch vs reference"

    print("KERNEL_OK")
</pallas_src>

<mosaic_0001>
module attributes {stable_mosaic.version = 11 : i64} {
  func.func @_query_attention_kernel(%arg0: i32, %arg1: memref<8xi32, #tpu.memory_space<smem>>, %arg2: memref<8x128x32xf32, #tpu.memory_space<vmem>>, %arg3: memref<8x1x32xf32, #tpu.memory_space<vmem>>, %arg4: memref<8x128xf32, #tpu.memory_space<vmem>>) attributes {dimension_semantics = [#tpu.dimension_semantics<parallel>], iteration_bounds = array<i64: 1>, scalar_prefetch = 1 : i64, scratch_operands = 0 : i64, tpu.core_type = #tpu.core_type<tc>, window_params = [{transform_indices = @transform_0, window_bounds = array<i64: 8, 128, 32>}, {transform_indices = @transform_1, window_bounds = array<i64: 8, 1, 32>}, {transform_indices = @transform_2, window_bounds = array<i64: 8, 128>}]} {
    %c0 = arith.constant 0 : index
    %c0_0 = arith.constant 0 : index
    %c0_1 = arith.constant 0 : index
    %0 = vector.load %arg2[%c0, %c0_0, %c0_1] : memref<8x128x32xf32, #tpu.memory_space<vmem>>, vector<8x128x32xf32>
    %c0_2 = arith.constant 0 : index
    %c0_3 = arith.constant 0 : index
    %c0_4 = arith.constant 0 : index
    %1 = vector.load %arg3[%c0_2, %c0_3, %c0_4] : memref<8x1x32xf32, #tpu.memory_space<vmem>>, vector<8x1x32xf32>
    "tpu.trace_start"() <{level = 10 : i32, message = "bqd,bkd->bqk"}> : () -> ()
    %cst = arith.constant dense<0.000000e+00> : vector<8x1x128xf32>
    %2 = tpu.matmul %1, %0, %cst {dimension_numbers = #tpu.dot_dimension_numbers<[2], [2], [1], [1], [0, 0, 0, 1, 1, 1], [0], [0]>, precision = #tpu.contract_precision<fp32>} : vector<8x1x32xf32>, vector<8x128x32xf32>, vector<8x1x128xf32> -> vector<8x1x128xf32>
    "tpu.trace_stop"() : () -> ()
    %3 = vector.shape_cast %2 : vector<8x1x128xf32> to vector<8x128xf32>
    %cst_5 = arith.constant 3.125000e-02 : f32
    %4 = vector.broadcast %cst_5 : f32 to vector<8x128xf32>
    %5 = arith.mulf %3, %4 : vector<8x128xf32>
    %c8_i32 = arith.constant 8 : i32
    %6 = arith.muli %arg0, %c8_i32 : i32
    %7 = tpu.iota {dimensions = array<i32: 0>} : vector<8x1xi32>
    %c0_i32 = arith.constant 0 : i32
    %8 = vector.broadcast %c0_i32 : i32 to vector<8x1xi32>
    %c0_i32_6 = arith.constant 0 : i32
    %9 = vector.broadcast %c0_i32_6 : i32 to vector<8x1xi32>
    %10 = arith.cmpi eq, %7, %9 : vector<8x1xi32>
    %c0_i32_7 = arith.constant 0 : i32
    %11 = arith.addi %6, %c0_i32_7 : i32
    %12 = arith.index_cast %11 : i32 to index
    %13 = memref.load %arg1[%12] : memref<8xi32, #tpu.memory_space<smem>>
    %14 = vector.broadcast %13 : i32 to vector<8x1xi32>
    %15 = arith.select %10, %14, %8 : vector<8x1xi1>, vector<8x1xi32>
    %c1_i32 = arith.constant 1 : i32
    %16 = vector.broadcast %c1_i32 : i32 to vector<8x1xi32>
    %17 = arith.cmpi eq, %7, %16 : vector<8x1xi32>
    %c1_i32_8 = arith.constant 1 : i32
    %18 = arith.addi %6, %c1_i32_8 : i32
    %19 = arith.index_cast %18 : i32 to index
    %20 = memref.load %arg1[%19] : memref<8xi32, #tpu.memory_space<smem>>
    %21 = vector.broadcast %20 : i32 to vector<8x1xi32>
    %22 = arith.select %17, %21, %15 : vector<8x1xi1>, vector<8x1xi32>
    %c2_i32 = arith.constant 2 : i32
    %23 = vector.broadcast %c2_i32 : i32 to vector<8x1xi32>
    %24 = arith.cmpi eq, %7, %23 : vector<8x1xi32>
    %c2_i32_9 = arith.constant 2 : i32
    %25 = arith.addi %6, %c2_i32_9 : i32
    %26 = arith.index_cast %25 : i32 to index
    %27 = memref.load %arg1[%26] : memref<8xi32, #tpu.memory_space<smem>>
    %28 = vector.broadcast %27 : i32 to vector<8x1xi32>
    %29 = arith.select %24, %28, %22 : vector<8x1xi1>, vector<8x1xi32>
    %c3_i32 = arith.constant 3 : i32
    %30 = vector.broadcast %c3_i32 : i32 to vector<8x1xi32>
    %31 = arith.cmpi eq, %7, %30 : vector<8x1xi32>
    %c3_i32_10 = arith.constant 3 : i32
    %32 = arith.addi %6, %c3_i32_10 : i32
    %33 = arith.index_cast %32 : i32 to index
    %34 = memref.load %arg1[%33] : memref<8xi32, #tpu.memory_space<smem>>
    %35 = vector.broadcast %34 : i32 to vector<8x1xi32>
    %36 = arith.select %31, %35, %29 : vector<8x1xi1>, vector<8x1xi32>
    %c4_i32 = arith.constant 4 : i32
    %37 = vector.broadcast %c4_i32 : i32 to vector<8x1xi32>
    %38 = arith.cmpi eq, %7, %37 : vector<8x1xi32>
    %c4_i32_11 = arith.constant 4 : i32
    %39 = arith.addi %6, %c4_i32_11 : i32
    %40 = arith.index_cast %39 : i32 to index
    %41 = memref.load %arg1[%40] : memref<8xi32, #tpu.memory_space<smem>>
    %42 = vector.broadcast %41 : i32 to vector<8x1xi32>
    %43 = arith.select %38, %42, %36 : vector<8x1xi1>, vector<8x1xi32>
    %c5_i32 = arith.constant 5 : i32
    %44 = vector.broadcast %c5_i32 : i32 to vector<8x1xi32>
    %45 = arith.cmpi eq, %7, %44 : vector<8x1xi32>
    %c5_i32_12 = arith.constant 5 : i32
    %46 = arith.addi %6, %c5_i32_12 : i32
    %47 = arith.index_cast %46 : i32 to index
    %48 = memref.load %arg1[%47] : memref<8xi32, #tpu.memory_space<smem>>
    %49 = vector.broadcast %48 : i32 to vector<8x1xi32>
    %50 = arith.select %45, %49, %43 : vector<8x1xi1>, vector<8x1xi32>
    %c6_i32 = arith.constant 6 : i32
    %51 = vector.broadcast %c6_i32 : i32 to vector<8x1xi32>
    %52 = arith.cmpi eq, %7, %51 : vector<8x1xi32>
    %c6_i32_13 = arith.constant 6 : i32
    %53 = arith.addi %6, %c6_i32_13 : i32
    %54 = arith.index_cast %53 : i32 to index
    %55 = memref.load %arg1[%54] : memref<8xi32, #tpu.memory_space<smem>>
    %56 = vector.broadcast %55 : i32 to vector<8x1xi32>
    %57 = arith.select %52, %56, %50 : vector<8x1xi1>, vector<8x1xi32>
    %c7_i32 = arith.constant 7 : i32
    %58 = vector.broadcast %c7_i32 : i32 to vector<8x1xi32>
    %59 = arith.cmpi eq, %7, %58 : vector<8x1xi32>
    %c7_i32_14 = arith.constant 7 : i32
    %60 = arith.addi %6, %c7_i32_14 : i32
    %61 = arith.index_cast %60 : i32 to index
    %62 = memref.load %arg1[%61] : memref<8xi32, #tpu.memory_space<smem>>
    %63 = vector.broadcast %62 : i32 to vector<8x1xi32>
    %64 = arith.select %59, %63, %57 : vector<8x1xi1>, vector<8x1xi32>
    %65 = tpu.iota {dimensions = array<i32: 1>} : vector<8x128xi32>
    %66 = vector.broadcast %64 : vector<8x1xi32> to vector<8x128xi32>
    %67 = arith.cmpi slt, %65, %66 : vector<8x128xi32>
    %68 = arith.extui %67 : vector<8x128xi1> to vector<8x128xi32>
    %69 = arith.sitofp %68 : vector<8x128xi32> to vector<8x128xf32>
    %70 = math.exp %5 : vector<8x128xf32>
    %71 = arith.mulf %70, %69 : vector<8x128xf32>
    %cst_15 = arith.constant dense<0.000000e+00> : vector<8xf32>
    %72 = vector.multi_reduction <add>, %71, %cst_15 [1] : vector<8x128xf32> to vector<8xf32>
    %73 = vector.shape_cast %72 : vector<8xf32> to vector<8x1xf32>
    %cst_16 = arith.constant 9.99999974E-5 : f32
    %74 = vector.broadcast %cst_16 : f32 to vector<8x1xf32>
    %75 = arith.addf %73, %74 : vector<8x1xf32>
    %76 = tpu.reciprocal %75 {approx = true} : vector<8x1xf32> -> vector<8x1xf32>
    %77 = arith.mulf %75, %76 : vector<8x1xf32>
    %cst_17 = arith.constant 2.000000e+00 : f32
    %78 = vector.broadcast %cst_17 : f32 to vector<8x1xf32>
    %79 = arith.subf %78, %77 : vector<8x1xf32>
    %80 = arith.mulf %76, %79 : vector<8x1xf32>
    %81 = vector.broadcast %80 : vector<8x1xf32> to vector<8x128xf32>
    %82 = arith.mulf %71, %81 : vector<8x128xf32>
    %c0_18 = arith.constant 0 : index
    %c0_19 = arith.constant 0 : index
    %83 = vector.load %arg4[%c0_18, %c0_19] : memref<8x128xf32, #tpu.memory_space<vmem>>, vector<8x128xf32>
    tpu.vector_store %arg4[%c0_18, %c0_19], %82 {strides = array<i32>} : memref<8x128xf32, #tpu.memory_space<vmem>>, vector<8x128xf32>,
    return
  }
  func.func @transform_0(%arg0: i32, %arg1: memref<8xi32, #tpu.memory_space<smem>>) -> (i32, i32, i32) {
    %c0_i32 = arith.constant 0 : i32
    %c0_i32_0 = arith.constant 0 : i32
    %c0_i32_1 = arith.constant 0 : i32
    return %arg0, %c0_i32, %c0_i32_0 : i32, i32, i32
  }
  func.func @transform_1(%arg0: i32, %arg1: memref<8xi32, #tpu.memory_space<smem>>) -> (i32, i32, i32) {
    %c0_i32 = arith.constant 0 : i32
    %c0_i32_0 = arith.constant 0 : i32
    %c0_i32_1 = arith.constant 0 : i32
    return %arg0, %c0_i32, %c0_i32_0 : i32, i32, i32
  }
  func.func @transform_2(%arg0: i32, %arg1: memref<8xi32, #tpu.memory_space<smem>>) -> (i32, i32) {
    %c0_i32 = arith.constant 0 : i32
    %c0_i32_0 = arith.constant 0 : i32
    return %arg0, %c0_i32 : i32, i32
  }
}

</mosaic_0001>

<llo_original>
// kernel: tpu_custom_call.1
$region0: #{tpu_custom_call.1}
  #allocation0 [shape = 'u32[]', space=smem, size = 0x4, offset = 0x4, fixed_abs, tag = 'smem constant byte address 0x4 - core index']
  #allocation1 [shape = 'u32[144,128]{1,0:T(1,128)}', space=vmem, size = 0x12000, scoped, tag = 'internal scratch']
  #allocation2 [shape = 's32[1]{0}', space=sflag, size = 0x4, scoped, tag = 'scoped memory for tpu_custom_call.1']
  #allocation3 [shape = 'u8[512]{0}', space=smem, size = 0x200, scoped, tag = 'prefetched SMEM operand 0']
  %s0 = inlined_call_operand.vmem [shape: s32[8], index: 0, kind: input, shape index: {}]
  %s1 = inlined_call_operand.vmem [shape: f32[8,128,32], index: 1, kind: input, shape index: {}]
  %s2 = inlined_call_operand.vmem [shape: f32[8,1,32], index: 2, kind: input, shape index: {}]
  %s3 = inlined_call_operand.hbm [shape: f32[8,128], index: 3, kind: output, shape index: {}]
  %s4 = sld [smem:[#allocation0]]
  $region18: #{tpu_custom_call.1} parent=0
    _
  %s6 = ssub.s32 1, %s4
  %s7 = scalar_select 0, %s6, %s4
  %s8 = sshll.u32 %s0, 4
  %s9 = int_to_ptr.vmem [resolvable:$true] %s8
  %11 = dma.vmem_to_smem %s9, 16, [#allocation3], [#allocation2]
  %12 = dma.done [#allocation2], 16
  %13 = sfence
  $region1: #{tpu_custom_call.1} parent=0
    #allocation4 [shape = 'u8[4096]{0}', space=vmem, size = 0x1000, scoped, tag = 'output window, operand 0, single buffered']
    #allocation5 [shape = 's32[1]{0}', space=sflag, size = 0x4, scoped, tag = 'scoped memory for tpu_custom_call.1']
    %14 = vsyncpa [#allocation5], 0
    // Predicated region
    $region2: #{tpu_custom_call.1} parent=1 // pred_check
      _
    $region3: #{tpu_custom_call.1} parent=1 // pred_check_branch
      %16 = sbr.rel (0) target = $region5
    $region4: #{tpu_custom_call.1} parent=1 // pred_region
      _
    $region5: #{tpu_custom_call.1} parent=1 // pred_fallthru
      _
    // Predicated region
    $region6: #{tpu_custom_call.1} parent=1 // pred_check
      _
    $region7: #{tpu_custom_call.1} parent=1 // pred_check_branch
      %18 = sbr.rel (0) target = $region9
    $region8: #{tpu_custom_call.1} parent=1 // pred_region
      _
    $region9: #{tpu_custom_call.1} parent=1 // pred_fallthru
      _
    %v19 = vld [vmem:[%s1] sm:$0xff]
    %v20 = vld [vmem:[%s1 + $0x8] sm:$0xff]
    %v21 = vld [vmem:[%s1 + $0x10] sm:$0xff]
    %v22 = vld [vmem:[%s1 + $0x18] sm:$0xff]
    %v23 = vld [vmem:[%s1 + $0x20] sm:$0xff]
    %v24 = vld [vmem:[%s1 + $0x28] sm:$0xff]
    %v25 = vld [vmem:[%s1 + $0x30] sm:$0xff]
    %v26 = vld [vmem:[%s1 + $0x38] sm:$0xff]
    %v27 = vld [vmem:[%s1 + $0x40] sm:$0xff]
    %v28 = vld [vmem:[%s1 + $0x48] sm:$0xff]
    %v29 = vld [vmem:[%s1 + $0x50] sm:$0xff]
    %v30 = vld [vmem:[%s1 + $0x58] sm:$0xff]
    %v31 = vld [vmem:[%s1 + $0x60] sm:$0xff]
    %v32 = vld [vmem:[%s1 + $0x68] sm:$0xff]
    %v33 = vld [vmem:[%s1 + $0x70] sm:$0xff]
    %v34 = vld [vmem:[%s1 + $0x78] sm:$0xff]
    %v35 = vld [vmem:[%s1 + $0x80] sm:$0xff]
    %v36 = vld [vmem:[%s1 + $0x88] sm:$0xff]
    %v37 = vld [vmem:[%s1 + $0x90] sm:$0xff]
    %v38 = vld [vmem:[%s1 + $0x98] sm:$0xff]
    %v39 = vld [vmem:[%s1 + $0xa0] sm:$0xff]
    %v40 = vld [vmem:[%s1 + $0xa8] sm:$0xff]
    %v41 = vld [vmem:[%s1 + $0xb0] sm:$0xff]
    %v42 = vld [vmem:[%s1 + $0xb8] sm:$0xff]
    %v43 = vld [vmem:[%s1 + $0xc0] sm:$0xff]
    %v44 = vld [vmem:[%s1 + $0xc8] sm:$0xff]
    %v45 = vld [vmem:[%s1 + $0xd0] sm:$0xff]
    %v46 = vld [vmem:[%s1 + $0xd8] sm:$0xff]
    %v47 = vld [vmem:[%s1 + $0xe0] sm:$0xff]
    %v48 = vld [vmem:[%s1 + $0xe8] sm:$0xff]
    %v49 = vld [vmem:[%s1 + $0xf0] sm:$0xff]
    %v50 = vld [vmem:[%s1 + $0xf8] sm:$0xff]
    %v51 = vld [vmem:[%s1 + $0x100] sm:$0xff]
    %v52 = vld [vmem:[%s1 + $0x108] sm:$0xff]
    %v53 = vld [vmem:[%s1 + $0x110] sm:$0xff]
    %v54 = vld [vmem:[%s1 + $0x118] sm:$0xff]
    %v55 = vld [vmem:[%s1 + $0x120] sm:$0xff]
    %v56 = vld [vmem:[%s1 + $0x128] sm:$0xff]
    %v57 = vld [vmem:[%s1 + $0x130] sm:$0xff]
    %v58 = vld [vmem:[%s1 + $0x138] sm:$0xff]
    %v59 = vld [vmem:[%s1 + $0x140] sm:$0xff]
    %v60 = vld [vmem:[%s1 + $0x148] sm:$0xff]
    %v61 = vld [vmem:[%s1 + $0x150] sm:$0xff]
    %v62 = vld [vmem:[%s1 + $0x158] sm:$0xff]
    %v63 = vld [vmem:[%s1 + $0x160] sm:$0xff]
    %v64 = vld [vmem:[%s1 + $0x168] sm:$0xff]
    %v65 = vld [vmem:[%s1 + $0x170] sm:$0xff]
    %v66 = vld [vmem:[%s1 + $0x178] sm:$0xff]
    %v67 = vld [vmem:[%s1 + $0x180] sm:$0xff]
    %v68 = vld [vmem:[%s1 + $0x188] sm:$0xff]
    %v69 = vld [vmem:[%s1 + $0x190] sm:$0xff]
    %v70 = vld [vmem:[%s1 + $0x198] sm:$0xff]
    %v71 = vld [vmem:[%s1 + $0x1a0] sm:$0xff]
    %v72 = vld [vmem:[%s1 + $0x1a8] sm:$0xff]
    %v73 = vld [vmem:[%s1 + $0x1b0] sm:$0xff]
    %v74 = vld [vmem:[%s1 + $0x1b8] sm:$0xff]
    %v75 = vld [vmem:[%s1 + $0x1c0] sm:$0xff]
    %v76 = vld [vmem:[%s1 + $0x1c8] sm:$0xff]
    %v77 = vld [vmem:[%s1 + $0x1d0] sm:$0xff]
    %v78 = vld [vmem:[%s1 + $0x1d8] sm:$0xff]
    %v79 = vld [vmem:[%s1 + $0x1e0] sm:$0xff]
    %v80 = vld [vmem:[%s1 + $0x1e8] sm:$0xff]
    %v81 = vld [vmem:[%s1 + $0x1f0] sm:$0xff]
    %v82 = vld [vmem:[%s1 + $0x1f8] sm:$0xff]
    %v83 = vld [vmem:[%s1 + $0x200] sm:$0xff]
    %v84 = vld [vmem:[%s1 + $0x208] sm:$0xff]
    %v85 = vld [vmem:[%s1 + $0x210] sm:$0xff]
    %v86 = vld [vmem:[%s1 + $0x218] sm:$0xff]
    %v87 = vld [vmem:[%s1 + $0x220] sm:$0xff]
    %v88 = vld [vmem:[%s1 + $0x228] sm:$0xff]
    %v89 = vld [vmem:[%s1 + $0x230] sm:$0xff]
    %v90 = vld [vmem:[%s1 + $0x238] sm:$0xff]
    %v91 = vld [vmem:[%s1 + $0x240] sm:$0xff]
    %v92 = vld [vmem:[%s1 + $0x248] sm:$0xff]
    %v93 = vld [vmem:[%s1 + $0x250] sm:$0xff]
    %v94 = vld [vmem:[%s1 + $0x258] sm:$0xff]
    %v95 = vld [vmem:[%s1 + $0x260] sm:$0xff]
    %v96 = vld [vmem:[%s1 + $0x268] sm:$0xff]
    %v97 = vld [vmem:[%s1 + $0x270] sm:$0xff]
    %v98 = vld [vmem:[%s1 + $0x278] sm:$0xff]
    %v99 = vld [vmem:[%s1 + $0x280] sm:$0xff]
    %v100 = vld [vmem:[%s1 + $0x288] sm:$0xff]
    %v101 = vld [vmem:[%s1 + $0x290] sm:$0xff]
    %v102 = vld [vmem:[%s1 + $0x298] sm:$0xff]
    %v103 = vld [vmem:[%s1 + $0x2a0] sm:$0xff]
    %v104 = vld [vmem:[%s1 + $0x2a8] sm:$0xff]
    %v105 = vld [vmem:[%s1 + $0x2b0] sm:$0xff]
    %v106 = vld [vmem:[%s1 + $0x2b8] sm:$0xff]
    %v107 = vld [vmem:[%s1 + $0x2c0] sm:$0xff]
    %v108 = vld [vmem:[%s1 + $0x2c8] sm:$0xff]
    %v109 = vld [vmem:[%s1 + $0x2d0] sm:$0xff]
    %v110 = vld [vmem:[%s1 + $0x2d8] sm:$0xff]
    %v111 = vld [vmem:[%s1 + $0x2e0] sm:$0xff]
    %v112 = vld [vmem:[%s1 + $0x2e8] sm:$0xff]
    %v113 = vld [vmem:[%s1 + $0x2f0] sm:$0xff]
    %v114 = vld [vmem:[%s1 + $0x2f8] sm:$0xff]
    %v115 = vld [vmem:[%s1 + $0x300] sm:$0xff]
    %v116 = vld [vmem:[%s1 + $0x308] sm:$0xff]
    %v117 = vld [vmem:[%s1 + $0x310] sm:$0xff]
    %v118 = vld [vmem:[%s1 + $0x318] sm:$0xff]
    %v119 = vld [vmem:[%s1 + $0x320] sm:$0xff]
    %v120 = vld [vmem:[%s1 + $0x328] sm:$0xff]
    %v121 = vld [vmem:[%s1 + $0x330] sm:$0xff]
    %v122 = vld [vmem:[%s1 + $0x338] sm:$0xff]
    %v123 = vld [vmem:[%s1 + $0x340] sm:$0xff]
    %v124 = vld [vmem:[%s1 + $0x348] sm:$0xff]
    %v125 = vld [vmem:[%s1 + $0x350] sm:$0xff]
    %v126 = vld [vmem:[%s1 + $0x358] sm:$0xff]
    %v127 = vld [vmem:[%s1 + $0x360] sm:$0xff]
    %v128 = vld [vmem:[%s1 + $0x368] sm:$0xff]
    %v129 = vld [vmem:[%s1 + $0x370] sm:$0xff]
    %v130 = vld [vmem:[%s1 + $0x378] sm:$0xff]
    %v131 = vld [vmem:[%s1 + $0x380] sm:$0xff]
    %v132 = vld [vmem:[%s1 + $0x388] sm:$0xff]
    %v133 = vld [vmem:[%s1 + $0x390] sm:$0xff]
    %v134 = vld [vmem:[%s1 + $0x398] sm:$0xff]
    %v135 = vld [vmem:[%s1 + $0x3a0] sm:$0xff]
    %v136 = vld [vmem:[%s1 + $0x3a8] sm:$0xff]
    %v137 = vld [vmem:[%s1 + $0x3b0] sm:$0xff]
    %v138 = vld [vmem:[%s1 + $0x3b8] sm:$0xff]
    %v139 = vld [vmem:[%s1 + $0x3c0] sm:$0xff]
    %v140 = vld [vmem:[%s1 + $0x3c8] sm:$0xff]
    %v141 = vld [vmem:[%s1 + $0x3d0] sm:$0xff]
    %v142 = vld [vmem:[%s1 + $0x3d8] sm:$0xff]
    %v143 = vld [vmem:[%s1 + $0x3e0] sm:$0xff]
    %v144 = vld [vmem:[%s1 + $0x3e8] sm:$0xff]
    %v145 = vld [vmem:[%s1 + $0x3f0] sm:$0xff]
    %v146 = vld [vmem:[%s1 + $0x3f8] sm:$0xff]
    %v147 = vld [vmem:[%s2] sm:$0x1]
    %v148 = vld [vmem:[%s2 + $0x1] sm:$0x1]
    %v149 = vld [vmem:[%s2 + $0x2] sm:$0x1]
    %v150 = vld [vmem:[%s2 + $0x3] sm:$0x1]
    %v151 = vld [vmem:[%s2 + $0x4] sm:$0x1]
    %v152 = vld [vmem:[%s2 + $0x5] sm:$0x1]
    %v153 = vld [vmem:[%s2 + $0x6] sm:$0x1]
    %v154 = vld [vmem:[%s2 + $0x7] sm:$0x1]
    %vm155 = vcmask 261120
    %v157 = vsel %vm155, %v147, 0
    %v160 = vsel %vm155, %v19, 0
    %v163 = vsel %vm155, %v20, 0
    %v166 = vsel %vm155, %v21, 0
    %v169 = vsel %vm155, %v22, 0
    %v172 = vsel %vm155, %v23, 0
    %v175 = vsel %vm155, %v24, 0
    %v178 = vsel %vm155, %v25, 0
    %v181 = vsel %vm155, %v26, 0
    %v184 = vsel %vm155, %v27, 0
    %v187 = vsel %vm155, %v28, 0
    %v190 = vsel %vm155, %v29, 0
    %v193 = vsel %vm155, %v30, 0
    %v196 = vsel %vm155, %v31, 0
    %v199 = vsel %vm155, %v32, 0
    %v202 = vsel %vm155, %v33, 0
    %v205 = vsel %vm155, %v34, 0
    %207 = vmatprep.subr.mxu0 0.0
    %v208 = vand.u32 %v160, 4294901760
    %209 = vmatpush1.xpose.msra.mxu0 %v208
    %210 = vmatprep.subr.mxu0 0.0
    %v211 = vand.u32 %v163, 4294901760
    %212 = vmatpush1.xpose.msra.mxu0 %v211
    %213 = vmatprep.subr.mxu0 0.0
    %v214 = vand.u32 %v166, 4294901760
    %215 = vmatpush1.xpose.msra.mxu0 %v214
    %216 = vmatprep.subr.mxu0 0.0
    %v217 = vand.u32 %v169, 4294901760
    %218 = vmatpush1.xpose.msra.mxu0 %v217
    %219 = vmatprep.subr.mxu0 0.0
    %v220 = vand.u32 %v172, 4294901760
    %221 = vmatpush1.xpose.msra.mxu0 %v220
    %222 = vmatprep.subr.mxu0 0.0
    %v223 = vand.u32 %v175, 4294901760
    %224 = vmatpush1.xpose.msra.mxu0 %v223
    %225 = vmatprep.subr.mxu0 0.0
    %v226 = vand.u32 %v178, 4294901760
    %227 = vmatpush1.xpose.msra.mxu0 %v226
    %228 = vmatprep.subr.mxu0 0.0
    %v229 = vand.u32 %v181, 4294901760
    %230 = vmatpush1.xpose.msra.mxu0 %v229
    %231 = vmatprep.subr.mxu0 0.0
    %v232 = vand.u32 %v184, 4294901760
    %233 = vmatpush1.xpose.msra.mxu0 %v232
    %234 = vmatprep.subr.mxu0 0.0
    %v235 = vand.u32 %v187, 4294901760
    %236 = vmatpush1.xpose.msra.mxu0 %v235
    %237 = vmatprep.subr.mxu0 0.0
    %v238 = vand.u32 %v190, 4294901760
    %239 = vmatpush1.xpose.msra.mxu0 %v238
    %240 = vmatprep.subr.mxu0 0.0
    %v241 = vand.u32 %v193, 4294901760
    %242 = vmatpush1.xpose.msra.mxu0 %v241
    %243 = vmatprep.subr.mxu0 0.0
    %v244 = vand.u32 %v196, 4294901760
    %245 = vmatpush1.xpose.msra.mxu0 %v244
    %246 = vmatprep.subr.mxu0 0.0
    %v247 = vand.u32 %v199, 4294901760
    %248 = vmatpush1.xpose.msra.mxu0 %v247
    %249 = vmatprep.subr.mxu0 0.0
    %v250 = vand.u32 %v202, 4294901760
    %251 = vmatpush1.xpose.msra.mxu0 %v250
    %252 = vmatprep.subr.mxu0 0.0
    %v253 = vand.u32 %v205, 4294901760
    %254 = vmatpush1.xpose.msra.mxu0 %v253
    %255 = vmatprep.subr.mxu0 0.0
    %256 = vmatpush1.xpose.msra.mxu0 0.0
    %257 = vmatprep.subr.mxu0 0.0
    %258 = vmatpush1.xpose.msra.mxu0 0.0
    %259 = vmatprep.subr.mxu0 0.0
    %260 = vmatpush1.xpose.msra.mxu0 0.0
    %261 = vmatprep.subr.mxu0 0.0
    %262 = vmatpush1.xpose.msra.mxu0 0.0
    %263 = vmatprep.subr.mxu0 0.0
    %264 = vmatpush1.xpose.msra.mxu0 0.0
    %265 = vmatprep.subr.mxu0 0.0
    %266 = vmatpush1.xpose.msra.mxu0 0.0
    %267 = vmatprep.subr.mxu0 0.0
    %268 = vmatpush1.xpose.msra.mxu0 0.0
    %269 = vmatprep.subr.mxu0 0.0
    %270 = vmatpush1.xpose.msra.mxu0 0.0
    %271 = vmatprep.subr.mxu0 0.0
    %272 = vmatpush1.xpose.msra.mxu0 0.0
    %273 = vmatprep.subr.mxu0 0.0
    %274 = vmatpush1.xpose.msra.mxu0 0.0
    %275 = vmatprep.subr.mxu0 0.0
    %276 = vmatpush1.xpose.msra.mxu0 0.0
    %277 = vmatprep.subr.mxu0 0.0
    %278 = vmatpush1.xpose.msra.mxu0 0.0
    %279 = vmatprep.subr.mxu0 0.0
    %280 = vmatpush1.xpose.msra.mxu0 0.0
    %281 = vmatprep.subr.mxu0 0.0
    %282 = vmatpush1.xpose.msra.mxu0 0.0
    %283 = vmatprep.subr.mxu0 0.0
    %284 = vmatpush1.xpose.msra.mxu0 0.0
    %285 = vmatprep.subr.mxu0 0.0
    %286 = vmatpush1.xpose.msra.mxu0 0.0
    %287 = vmatprep.mubr.f32.mxu0 0.0
    %v288 = vand.u32 %v157, 4294901760
    %v289 = vsub.f32 %v157, %v288
    %v290 = vand.u32 %v289, 4294901760
    %v291 = vsub.f32 %v289, %v290
    %v292 = vand.u32 %v291, 4294901760
    %293 = vmatmul.mubr.f32.gmra.mrb[0].mxu0 %v292
    %v294 = vpop.f32.mrb[0].mxu0
    %v295 = vadd.f32 0.0, %v294
    %v296 = vpop.f32.mrb[0].mxu0
    %297 = vdwg.mxu0
    %298 = vmatprep.subr.mxu0 0.0
    %v299 = vand.u32 %v160, 4294901760
    %v300 = vsub.f32 %v160, %v299
    %v301 = vand.u32 %v300, 4294901760
    %v302 = vsub.f32 %v300, %v301
    %v303 = vand.u32 %v302, 4294901760
    %304 = vmatpush1.xpose.msra.mxu0 %v303
    %305 = vmatprep.subr.mxu0 0.0
    %v306 = vand.u32 %v163, 4294901760
    %v307 = vsub.f32 %v163, %v306
    %v308 = vand.u32 %v307, 4294901760
    %v309 = vsub.f32 %v307, %v308
    %v310 = vand.u32 %v309, 4294901760
    %311 = vmatpush1.xpose.msra.mxu0 %v310
    %312 = vmatprep.subr.mxu0 0.0
    %v313 = vand.u32 %v166, 4294901760
    %v314 = vsub.f32 %v166, %v313
    %v315 = vand.u32 %v314, 4294901760
    %v316 = vsub.f32 %v314, %v315
    %v317 = vand.u32 %v316, 4294901760
    %318 = vmatpush1.xpose.msra.mxu0 %v317
    %319 = vmatprep.subr.mxu0 0.0
    %v320 = vand.u32 %v169, 4294901760
    %v321 = vsub.f32 %v169, %v320
    %v322 = vand.u32 %v321, 4294901760
    %v323 = vsub.f32 %v321, %v322
    %v324 = vand.u32 %v323, 4294901760
    %325 = vmatpush1.xpose.msra.mxu0 %v324
    %326 = vmatprep.subr.mxu0 0.0
    %v327 = vand.u32 %v172, 4294901760
    %v328 = vsub.f32 %v172, %v327
    %v329 = vand.u32 %v328, 4294901760
    %v330 = vsub.f32 %v328, %v329
    %v331 = vand.u32 %v330, 4294901760
    %332 = vmatpush1.xpose.msra.mxu0 %v331
    %333 = vmatprep.subr.mxu0 0.0
    %v334 = vand.u32 %v175, 4294901760
    %v335 = vsub.f32 %v175, %v334
    %v336 = vand.u32 %v335, 4294901760
    %v337 = vsub.f32 %v335, %v336
    %v338 = vand.u32 %v337, 4294901760
    %339 = vmatpush1.xpose.msra.mxu0 %v338
    %340 = vmatprep.subr.mxu0 0.0
    %v341 = vand.u32 %v178, 4294901760
    %v342 = vsub.f32 %v178, %v341
    %v343 = vand.u32 %v342, 4294901760
    %v344 = vsub.f32 %v342, %v343
    %v345 = vand.u32 %v344, 4294901760
    %346 = vmatpush1.xpose.msra.mxu0 %v345
    %347 = vmatprep.subr.mxu0 0.0
    %v348 = vand.u32 %v181, 4294901760
    %v349 = vsub.f32 %v181, %v348
    %v350 = vand.u32 %v349, 4294901760
    %v351 = vsub.f32 %v349, %v350
    %v352 = vand.u32 %v351, 4294901760
    %353 = vmatpush1.xpose.msra.mxu0 %v352
    %354 = vmatprep.subr.mxu0 0.0
    %v355 = vand.u32 %v184, 4294901760
    %v356 = vsub.f32 %v184, %v355
    %v357 = vand.u32 %v356, 4294901760
    %v358 = vsub.f32 %v356, %v357
    %v359 = vand.u32 %v358, 4294901760
    %360 = vmatpush1.xpose.msra.mxu0 %v359
    %361 = vmatprep.subr.mxu0 0.0
    %v362 = vand.u32 %v187, 4294901760
    %v363 = vsub.f32 %v187, %v362
    %v364 = vand.u32 %v363, 4294901760
    %v365 = vsub.f32 %v363, %v364
    %v366 = vand.u32 %v365, 4294901760
    %367 = vmatpush1.xpose.msra.mxu0 %v366
    %368 = vmatprep.subr.mxu0 0.0
    %v369 = vand.u32 %v190, 4294901760
    %v370 = vsub.f32 %v190, %v369
    %v371 = vand.u32 %v370, 4294901760
    %v372 = vsub.f32 %v370, %v371
    %v373 = vand.u32 %v372, 4294901760
    %374 = vmatpush1.xpose.msra.mxu0 %v373
    %375 = vmatprep.subr.mxu0 0.0
    %v376 = vand.u32 %v193, 4294901760
    %v377 = vsub.f32 %v193, %v376
    %v378 = vand.u32 %v377, 4294901760
    %v379 = vsub.f32 %v377, %v378
    %v380 = vand.u32 %v379, 4294901760
    %381 = vmatpush1.xpose.msra.mxu0 %v380
    %382 = vmatprep.subr.mxu0 0.0
    %v383 = vand.u32 %v196, 4294901760
    %v384 = vsub.f32 %v196, %v383
    %v385 = vand.u32 %v384, 4294901760
    %v386 = vsub.f32 %v384, %v385
    %v387 = vand.u32 %v386, 4294901760
    %388 = vmatpush1.xpose.msra.mxu0 %v387
    %389 = vmatprep.subr.mxu0 0.0
    %v390 = vand.u32 %v199, 4294901760
    %v391 = vsub.f32 %v199, %v390
    %v392 = vand.u32 %v391, 4294901760
    %v393 = vsub.f32 %v391, %v392
    %v394 = vand.u32 %v393, 4294901760
    %395 = vmatpush1.xpose.msra.mxu0 %v394
    %396 = vmatprep.subr.mxu0 0.0
    %v397 = vand.u32 %v202, 4294901760
    %v398 = vsub.f32 %v202, %v397
    %v399 = vand.u32 %v398, 4294901760
    %v400 = vsub.f32 %v398, %v399
    %v401 = vand.u32 %v400, 4294901760
    %402 = vmatpush1.xpose.msra.mxu0 %v401
    %403 = vmatprep.subr.mxu0 0.0
    %v404 = vand.u32 %v205, 4294901760
    %v405 = vsub.f32 %v205, %v404
    %v406 = vand.u32 %v405, 4294901760
    %v407 = vsub.f32 %v405, %v406
    %v408 = vand.u32 %v407, 4294901760
    %409 = vmatpush1.xpose.msra.mxu0 %v408
    %410 = vmatprep.subr.mxu0 0.0
    %411 = vmatpush1.xpose.msra.mxu0 0.0
    %412 = vmatprep.subr.mxu0 0.0
    %413 = vmatpush1.xpose.msra.mxu0 0.0
    %414 = vmatprep.subr.mxu0 0.0
    %415 = vmatpush1.xpose.msra.mxu0 0.0
    %416 = vmatprep.subr.mxu0 0.0
    %417 = vmatpush1.xpose.msra.mxu0 0.0
    %418 = vmatprep.subr.mxu0 0.0
    %419 = vmatpush1.xpose.msra.mxu0 0.0
    %420 = vmatprep.subr.mxu0 0.0
    %421 = vmatpush1.xpose.msra.mxu0 0.0
    %422 = vmatprep.subr.mxu0 0.0
    %423 = vmatpush1.xpose.msra.mxu0 0.0
    %424 = vmatprep.subr.mxu0 0.0
    %425 = vmatpush1.xpose.msra.mxu0 0.0
    %426 = vmatprep.subr.mxu0 0.0
    %427 = vmatpush1.xpose.msra.mxu0 0.0
    %428 = vmatprep.subr.mxu0 0.0
    %429 = vmatpush1.xpose.msra.mxu0 0.0
    %430 = vmatprep.subr.mxu0 0.0
    %431 = vmatpush1.xpose.msra.mxu0 0.0
    %432 = vmatprep.subr.mxu0 0.0
    %433 = vmatpush1.xpose.msra.mxu0 0.0
    %434 = vmatprep.subr.mxu0 0.0
    %435 = vmatpush1.xpose.msra.mxu0 0.0
    %436 = vmatprep.subr.mxu0 0.0
    %437 = vmatpush1.xpose.msra.mxu0 0.0
    %438 = vmatprep.subr.mxu0 0.0
    %439 = vmatpush1.xpose.msra.mxu0 0.0
    %440 = vmatprep.subr.mxu0 0.0
    %441 = vmatpush1.xpose.msra.mxu0 0.0
    %442 = vmatprep.mubr.f32.mxu0 0.0
    %v443 = vand.u32 %v157, 4294901760
    %444 = vmatmul.mubr.f32.gmra.mrb[0].mxu0 %v443
    %v445 = vpop.f32.mrb[0].mxu0
    %v446 = vadd.f32 %v295, %v445
    %v447 = vpop.f32.mrb[0].mxu0
    %448 = vdwg.mxu0
    %449 = vmatprep.subr.mxu0 0.0
    %v450 = vand.u32 %v160, 4294901760
    %v451 = vsub.f32 %v160, %v450
    %452 = vmatpush1.xpose.msra.mxu0 %v451
    %453 = vmatprep.subr.mxu0 0.0
    %v454 = vand.u32 %v163, 4294901760
    %v455 = vsub.f32 %v163, %v454
    %456 = vmatpush1.xpose.msra.mxu0 %v455
    %457 = vmatprep.subr.mxu0 0.0
    %v458 = vand.u32 %v166, 4294901760
    %v459 = vsub.f32 %v166, %v458
    %460 = vmatpush1.xpose.msra.mxu0 %v459
    %461 = vmatprep.subr.mxu0 0.0
    %v462 = vand.u32 %v169, 4294901760
    %v463 = vsub.f32 %v169, %v462
    %464 = vmatpush1.xpose.msra.mxu0 %v463
    %465 = vmatprep.subr.mxu0 0.0
    %v466 = vand.u32 %v172, 4294901760
    %v467 = vsub.f32 %v172, %v466
    %468 = vmatpush1.xpose.msra.mxu0 %v467
    %469 = vmatprep.subr.mxu0 0.0
    %v470 = vand.u32 %v175, 4294901760
    %v471 = vsub.f32 %v175, %v470
    %472 = vmatpush1.xpose.msra.mxu0 %v471
    %473 = vmatprep.subr.mxu0 0.0
    %v474 = vand.u32 %v178, 4294901760
    %v475 = vsub.f32 %v178, %v474
    %476 = vmatpush1.xpose.msra.mxu0 %v475
    %477 = vmatprep.subr.mxu0 0.0
    %v478 = vand.u32 %v181, 4294901760
    %v479 = vsub.f32 %v181, %v478
    %480 = vmatpush1.xpose.msra.mxu0 %v479
    %481 = vmatprep.subr.mxu0 0.0
    %v482 = vand.u32 %v184, 4294901760
    %v483 = vsub.f32 %v184, %v482
    %484 = vmatpush1.xpose.msra.mxu0 %v483
    %485 = vmatprep.subr.mxu0 0.0
    %v486 = vand.u32 %v187, 4294901760
    %v487 = vsub.f32 %v187, %v486
    %488 = vmatpush1.xpose.msra.mxu0 %v487
    %489 = vmatprep.subr.mxu0 0.0
    %v490 = vand.u32 %v190, 4294901760
    %v491 = vsub.f32 %v190, %v490
    %492 = vmatpush1.xpose.msra.mxu0 %v491
    %493 = vmatprep.subr.mxu0 0.0
    %v494 = vand.u32 %v193, 4294901760
    %v495 = vsub.f32 %v193, %v494
    %496 = vmatpush1.xpose.msra.mxu0 %v495
    %497 = vmatprep.subr.mxu0 0.0
    %v498 = vand.u32 %v196, 4294901760
    %v499 = vsub.f32 %v196, %v498
    %500 = vmatpush1.xpose.msra.mxu0 %v499
    %501 = vmatprep.subr.mxu0 0.0
    %v502 = vand.u32 %v199, 4294901760
    %v503 = vsub.f32 %v199, %v502
    %504 = vmatpush1.xpose.msra.mxu0 %v503
    %505 = vmatprep.subr.mxu0 0.0
    %v506 = vand.u32 %v202, 4294901760
    %v507 = vsub.f32 %v202, %v506
    %508 = vmatpush1.xpose.msra.mxu0 %v507
    %509 = vmatprep.subr.mxu0 0.0
    %v510 = vand.u32 %v205, 4294901760
    %v511 = vsub.f32 %v205, %v510
    %512 = vmatpush1.xpose.msra.mxu0 %v511
    %513 = vmatprep.subr.mxu0 0.0
    %514 = vmatpush1.xpose.msra.mxu0 0.0
    %515 = vmatprep.subr.mxu0 0.0
    %516 = vmatpush1.xpose.msra.mxu0 0.0
    %517 = vmatprep.subr.mxu0 0.0
    %518 = vmatpush1.xpose.msra.mxu0 0.0
    %519 = vmatprep.subr.mxu0 0.0
    %520 = vmatpush1.xpose.msra.mxu0 0.0
    %521 = vmatprep.subr.mxu0 0.0
    %522 = vmatpush1.xpose.msra.mxu0 0.0
    %523 = vmatprep.subr.mxu0 0.0
    %524 = vmatpush1.xpose.msra.mxu0 0.0
    %525 = vmatprep.subr.mxu0 0.0
    %526 = vmatpush1.xpose.msra.mxu0 0.0
    %527 = vmatprep.subr.mxu0 0.0
    %528 = vmatpush1.xpose.msra.mxu0 0.0
    %529 = vmatprep.subr.mxu0 0.0
    %530 = vmatpush1.xpose.msra.mxu0 0.0
    %531 = vmatprep.subr.mxu0 0.0
    %532 = vmatpush1.xpose.msra.mxu0 0.0
    %533 = vmatprep.subr.mxu0 0.0
    %534 = vmatpush1.xpose.msra.mxu0 0.0
    %535 = vmatprep.subr.mxu0 0.0
    %536 = vmatpush1.xpose.msra.mxu0 0.0
    %537 = vmatprep.subr.mxu0 0.0
    %538 = vmatpush1.xpose.msra.mxu0 0.0
    %539 = vmatprep.subr.mxu0 0.0
    %540 = vmatpush1.xpose.msra.mxu0 0.0
    %541 = vmatprep.subr.mxu0 0.0
    %542 = vmatpush1.xpose.msra.mxu0 0.0
    %543 = vmatprep.subr.mxu0 0.0
    %544 = vmatpush1.xpose.msra.mxu0 0.0
    %545 = vmatprep.mubr.f32.mxu0 0.0
    %v546 = vand.u32 %v157, 4294901760
    %v547 = vsub.f32 %v157, %v546
    %548 = vmatmul.mubr.f32.gmra.mrb[0].mxu0 %v547
    %v549 = vpop.f32.mrb[0].mxu0
    %v550 = vadd.f32 %v446, %v549
    %v551 = vpop.f32.mrb[0].mxu0
    %552 = vdwg.mxu0
    %553 = vmatprep.subr.mxu0 0.0
    %v554 = vand.u32 %v160, 4294901760
    %555 = vmatpush1.xpose.msra.mxu0 %v554
    %556 = vmatprep.subr.mxu0 0.0
    %v557 = vand.u32 %v163, 4294901760
    %558 = vmatpush1.xpose.msra.mxu0 %v557
    %559 = vmatprep.subr.mxu0 0.0
    %v560 = vand.u32 %v166, 4294901760
    %561 = vmatpush1.xpose.msra.mxu0 %v560
    %562 = vmatprep.subr.mxu0 0.0
    %v563 = vand.u32 %v169, 4294901760
    %564 = vmatpush1.xpose.msra.mxu0 %v563
    %565 = vmatprep.subr.mxu0 0.0
    %v566 = vand.u32 %v172, 4294901760
    %567 = vmatpush1.xpose.msra.mxu0 %v566
    %568 = vmatprep.subr.mxu0 0.0
    %v569 = vand.u32 %v175, 4294901760
    %570 = vmatpush1.xpose.msra.mxu0 %v569
    %571 = vmatprep.subr.mxu0 0.0
    %v572 = vand.u32 %v178, 4294901760
    %573 = vmatpush1.xpose.msra.mxu0 %v572
    %574 = vmatprep.subr.mxu0 0.0
    %v575 = vand.u32 %v181, 4294901760
    %576 = vmatpush1.xpose.msra.mxu0 %v575
    %577 = vmatprep.subr.mxu0 0.0
    %v578 = vand.u32 %v184, 4294901760
    %579 = vmatpush1.xpose.msra.mxu0 %v578
    %580 = vmatprep.subr.mxu0 0.0
    %v581 = vand.u32 %v187, 4294901760
    %582 = vmatpush1.xpose.msra.mxu0 %v581
    %583 = vmatprep.subr.mxu0 0.0
    %v584 = vand.u32 %v190, 4294901760
    %585 = vmatpush1.xpose.msra.mxu0 %v584
    %586 = vmatprep.subr.mxu0 0.0
    %v587 = vand.u32 %v193, 4294901760
    %588 = vmatpush1.xpose.msra.mxu0 %v587
    %589 = vmatprep.subr.mxu0 0.0
    %v590 = vand.u32 %v196, 4294901760
    %591 = vmatpush1.xpose.msra.mxu0 %v590
    %592 = vmatprep.subr.mxu0 0.0
    %v593 = vand.u32 %v199, 4294901760
    %594 = vmatpush1.xpose.msra.mxu0 %v593
    %595 = vmatprep.subr.mxu0 0.0
    %v596 = vand.u32 %v202, 4294901760
    %597 = vmatpush1.xpose.msra.mxu0 %v596
    %598 = vmatprep.subr.mxu0 0.0
    %v599 = vand.u32 %v205, 4294901760
    %600 = vmatpush1.xpose.msra.mxu0 %v599
    %601 = vmatprep.subr.mxu0 0.0
    %602 = vmatpush1.xpose.msra.mxu0 0.0
    %603 = vmatprep.subr.mxu0 0.0
    %604 = vmatpush1.xpose.msra.mxu0 0.0
    %605 = vmatprep.subr.mxu0 0.0
    %606 = vmatpush1.xpose.msra.mxu0 0.0
    %607 = vmatprep.subr.mxu0 0.0
    %608 = vmatpush1.xpose.msra.mxu0 0.0
    %609 = vmatprep.subr.mxu0 0.0
    %610 = vmatpush1.xpose.msra.mxu0 0.0
    %611 = vmatprep.subr.mxu0 0.0
    %612 = vmatpush1.xpose.msra.mxu0 0.0
    %613 = vmatprep.subr.mxu0 0.0
    %614 = vmatpush1.xpose.msra.mxu0 0.0
    %615 = vmatprep.subr.mxu0 0.0
    %616 = vmatpush1.xpose.msra.mxu0 0.0
    %617 = vmatprep.subr.mxu0 0.0
    %618 = vmatpush1.xpose.msra.mxu0 0.0
    %619 = vmatprep.subr.mxu0 0.0
    %620 = vmatpush1.xpose.msra.mxu0 0.0
    %621 = vmatprep.subr.mxu0 0.0
    %622 = vmatpush1.xpose.msra.mxu0 0.0
    %623 = vmatprep.subr.mxu0 0.0
    %624 = vmatpush1.xpose.msra.mxu0 0.0
    %625 = vmatprep.subr.mxu0 0.0
    %626 = vmatpush1.xpose.msra.mxu0 0.0
    %627 = vmatprep.subr.mxu0 0.0
    %628 = vmatpush1.xpose.msra.mxu0 0.0
    %629 = vmatprep.subr.mxu0 0.0
    %630 = vmatpush1.xpose.msra.mxu0 0.0
    %631 = vmatprep.subr.mxu0 0.0
    %632 = vmatpush1.xpose.msra.mxu0 0.0
    %633 = vmatprep.mubr.f32.mxu0 0.0
    %v634 = vand.u32 %v157, 4294901760
    %v635 = vsub.f32 %v157, %v634
    %v636 = vand.u32 %v635, 4294901760
    %637 = vmatmul.mubr.f32.gmra.mrb[0].mxu0 %v636
    %v638 = vpop.f32.mrb[0].mxu0
    %v639 = vadd.f32 %v550, %v638
    %v640 = vpop.f32.mrb[0].mxu0
    %641 = vdwg.mxu0
    %642 = vmatprep.subr.mxu0 0.0
    %v643 = vand.u32 %v160, 4294901760
    %v644 = vsub.f32 %v160, %v643
    %v645 = vand.u32 %v644, 4294901760
    %646 = vmatpush1.xpose.msra.mxu0 %v645
    %647 = vmatprep.subr.mxu0 0.0
    %v648 = vand.u32 %v163, 4294901760
    %v649 = vsub.f32 %v163, %v648
    %v650 = vand.u32 %v649, 4294901760
    %651 = vmatpush1.xpose.msra.mxu0 %v650
    %652 = vmatprep.subr.mxu0 0.0
    %v653 = vand.u32 %v166, 4294901760
    %v654 = vsub.f32 %v166, %v653
    %v655 = vand.u32 %v654, 4294901760
    %656 = vmatpush1.xpose.msra.mxu0 %v655
    %657 = vmatprep.subr.mxu0 0.0
    %v658 = vand.u32 %v169, 4294901760
    %v659 = vsub.f32 %v169, %v658
    %v660 = vand.u32 %v659, 4294901760
    %661 = vmatpush1.xpose.msra.mxu0 %v660
    %662 = vmatprep.subr.mxu0 0.0
    %v663 = vand.u32 %v172, 4294901760
    %v664 = vsub.f32 %v172, %v663
    %v665 = vand.u32 %v664, 4294901760
    %666 = vmatpush1.xpose.msra.mxu0 %v665
    %667 = vmatprep.subr.mxu0 0.0
    %v668 = vand.u32 %v175, 4294901760
    %v669 = vsub.f32 %v175, %v668
    %v670 = vand.u32 %v669, 4294901760
    %671 = vmatpush1.xpose.msra.mxu0 %v670
    %672 = vmatprep.subr.mxu0 0.0
    %v673 = vand.u32 %v178, 4294901760
    %v674 = vsub.f32 %v178, %v673
    %v675 = vand.u32 %v674, 4294901760
    %676 = vmatpush1.xpose.msra.mxu0 %v675
    %677 = vmatprep.subr.mxu0 0.0
    %v678 = vand.u32 %v181, 4294901760
    %v679 = vsub.f32 %v181, %v678
    %v680 = vand.u32 %v679, 4294901760
    %681 = vmatpush1.xpose.msra.mxu0 %v680
    %682 = vmatprep.subr.mxu0 0.0
    %v683 = vand.u32 %v184, 4294901760
    %v684 = vsub.f32 %v184, %v683
    %v685 = vand.u32 %v684, 4294901760
    %686 = vmatpush1.xpose.msra.mxu0 %v685
    %687 = vmatprep.subr.mxu0 0.0
    %v688 = vand.u32 %v187, 4294901760
    %v689 = vsub.f32 %v187, %v688
    %v690 = vand.u32 %v689, 4294901760
    %691 = vmatpush1.xpose.msra.mxu0 %v690
    %692 = vmatprep.subr.mxu0 0.0
    %v693 = vand.u32 %v190, 4294901760
    %v694 = vsub.f32 %v190, %v693
    %v695 = vand.u32 %v694, 4294901760
    %696 = vmatpush1.xpose.msra.mxu0 %v695
    %697 = vmatprep.subr.mxu0 0.0
    %v698 = vand.u32 %v193, 4294901760
    %v699 = vsub.f32 %v193, %v698
    %v700 = vand.u32 %v699, 4294901760
    %701 = vmatpush1.xpose.msra.mxu0 %v700
    %702 = vmatprep.subr.mxu0 0.0
    %v703 = vand.u32 %v196, 4294901760
    %v704 = vsub.f32 %v196, %v703
    %v705 = vand.u32 %v704, 4294901760
    %706 = vmatpush1.xpose.msra.mxu0 %v705
    %707 = vmatprep.subr.mxu0 0.0
    %v708 = vand.u32 %v199, 4294901760
    %v709 = vsub.f32 %v199, %v708
    %v710 = vand.u32 %v709, 4294901760
    %711 = vmatpush1.xpose.msra.mxu0 %v710
    %712 = vmatprep.subr.mxu0 0.0
    %v713 = vand.u32 %v202, 4294901760
    %v714 = vsub.f32 %v202, %v713
    %v715 = vand.u32 %v714, 4294901760
    %716 = vmatpush1.xpose.msra.mxu0 %v715
    %717 = vmatprep.subr.mxu0 0.0
    %v718 = vand.u32 %v205, 4294901760
    %v719 = vsub.f32 %v205, %v718
    %v720 = vand.u32 %v719, 4294901760
    %721 = vmatpush1.xpose.msra.mxu0 %v720
    %722 = vmatprep.subr.mxu0 0.0
    %723 = vmatpush1.xpose.msra.mxu0 0.0
    %724 = vmatprep.subr.mxu0 0.0
    %725 = vmatpush1.xpose.msra.mxu0 0.0
    %726 = vmatprep.subr.mxu0 0.0
    %727 = vmatpush1.xpose.msra.mxu0 0.0
    %728 = vmatprep.subr.mxu0 0.0
    %729 = vmatpush1.xpose.msra.mxu0 0.0
    %730 = vmatprep.subr.mxu0 0.0
    %731 = vmatpush1.xpose.msra.mxu0 0.0
    %732 = vmatprep.subr.mxu0 0.0
    %733 = vmatpush1.xpose.msra.mxu0 0.0
    %734 = vmatprep.subr.mxu0 0.0
    %735 = vmatpush1.xpose.msra.mxu0 0.0
    %736 = vmatprep.subr.mxu0 0.0
    %737 = vmatpush1.xpose.msra.mxu0 0.0
    %738 = vmatprep.subr.mxu0 0.0
    %739 = vmatpush1.xpose.msra.mxu0 0.0
    %740 = vmatprep.subr.mxu0 0.0
    %741 = vmatpush1.xpose.msra.mxu0 0.0
    %742 = vmatprep.subr.mxu0 0.0
    %743 = vmatpush1.xpose.msra.mxu0 0.0
    %744 = vmatprep.subr.mxu0 0.0
    %745 = vmatpush1.xpose.msra.mxu0 0.0
    %746 = vmatprep.subr.mxu0 0.0
    %747 = vmatpush1.xpose.msra.mxu0 0.0
    %748 = vmatprep.subr.mxu0 0.0
    %749 = vmatpush1.xpose.msra.mxu0 0.0
    %750 = vmatprep.subr.mxu0 0.0
    %751 = vmatpush1.xpose.msra.mxu0 0.0
    %752 = vmatprep.subr.mxu0 0.0
    %753 = vmatpush1.xpose.msra.mxu0 0.0
    %754 = vmatprep.mubr.f32.mxu0 0.0
    %v755 = vand.u32 %v157, 4294901760
    %756 = vmatmul.mubr.f32.gmra.mrb[0].mxu0 %v755
    %v757 = vpop.f32.mrb[0].mxu0
    %v758 = vadd.f32 %v639, %v757
    %v759 = vpop.f32.mrb[0].mxu0
    %760 = vdwg.mxu0
    %761 = vmatprep.subr.mxu0 0.0
    %v762 = vand.u32 %v160, 4294901760
    %763 = vmatpush1.xpose.msra.mxu0 %v762
    %764 = vmatprep.subr.mxu0 0.0
    %v765 = vand.u32 %v163, 4294901760
    %766 = vmatpush1.xpose.msra.mxu0 %v765
    %767 = vmatprep.subr.mxu0 0.0
    %v768 = vand.u32 %v166, 4294901760
    %769 = vmatpush1.xpose.msra.mxu0 %v768
    %770 = vmatprep.subr.mxu0 0.0
    %v771 = vand.u32 %v169, 4294901760
    %772 = vmatpush1.xpose.msra.mxu0 %v771
    %773 = vmatprep.subr.mxu0 0.0
    %v774 = vand.u32 %v172, 4294901760
    %775 = vmatpush1.xpose.msra.mxu0 %v774
    %776 = vmatprep.subr.mxu0 0.0
    %v777 = vand.u32 %v175, 4294901760
    %778 = vmatpush1.xpose.msra.mxu0 %v777
    %779 = vmatprep.subr.mxu0 0.0
    %v780 = vand.u32 %v178, 4294901760
    %781 = vmatpush1.xpose.msra.mxu0 %v780
    %782 = vmatprep.subr.mxu0 0.0
    %v783 = vand.u32 %v181, 4294901760
    %784 = vmatpush1.xpose.msra.mxu0 %v783
    %785 = vmatprep.subr.mxu0 0.0
    %v786 = vand.u32 %v184, 4294901760
    %787 = vmatpush1.xpose.msra.mxu0 %v786
    %788 = vmatprep.subr.mxu0 0.0
    %v789 = vand.u32 %v187, 4294901760
    %790 = vmatpush1.xpose.msra.mxu0 %v789
    %791 = vmatprep.subr.mxu0 0.0
    %v792 = vand.u32 %v190, 4294901760
    %793 = vmatpush1.xpose.msra.mxu0 %v792
    %794 = vmatprep.subr.mxu0 0.0
    %v795 = vand.u32 %v193, 4294901760
    %796 = vmatpush1.xpose.msra.mxu0 %v795
    %797 = vmatprep.subr.mxu0 0.0
    %v798 = vand.u32 %v196, 4294901760
    %799 = vmatpush1.xpose.msra.mxu0 %v798
    %800 = vmatprep.subr.mxu0 0.0
    %v801 = vand.u32 %v199, 4294901760
    %802 = vmatpush1.xpose.msra.mxu0 %v801
    %803 = vmatprep.subr.mxu0 0.0
    %v804 = vand.u32 %v202, 4294901760
    %805 = vmatpush1.xpose.msra.mxu0 %v804
    %806 = vmatprep.subr.mxu0 0.0
    %v807 = vand.u32 %v205, 4294901760
    %808 = vmatpush1.xpose.msra.mxu0 %v807
    %809 = vmatprep.subr.mxu0 0.0
    %810 = vmatpush1.xpose.msra.mxu0 0.0
    %811 = vmatprep.subr.mxu0 0.0
    %812 = vmatpush1.xpose.msra.mxu0 0.0
    %813 = vmatprep.subr.mxu0 0.0
    %814 = vmatpush1.xpose.msra.mxu0 0.0
    %815 = vmatprep.subr.mxu0 0.0
    %816 = vmatpush1.xpose.msra.mxu0 0.0
    %817 = vmatprep.subr.mxu0 0.0
    %818 = vmatpush1.xpose.msra.mxu0 0.0
    %819 = vmatprep.subr.mxu0 0.0
    %820 = vmatpush1.xpose.msra.mxu0 0.0
    %821 = vmatprep.subr.mxu0 0.0
    %822 = vmatpush1.xpose.msra.mxu0 0.0
    %823 = vmatprep.subr.mxu0 0.0
    %824 = vmatpush1.xpose.msra.mxu0 0.0
    %825 = vmatprep.subr.mxu0 0.0
    %826 = vmatpush1.xpose.msra.mxu0 0.0
    %827 = vmatprep.subr.mxu0 0.0
    %828 = vmatpush1.xpose.msra.mxu0 0.0
    %829 = vmatprep.subr.mxu0 0.0
    %830 = vmatpush1.xpose.msra.mxu0 0.0
    %831 = vmatprep.subr.mxu0 0.0
    %832 = vmatpush1.xpose.msra.mxu0 0.0
    %833 = vmatprep.subr.mxu0 0.0
    %834 = vmatpush1.xpose.msra.mxu0 0.0
    %835 = vmatprep.subr.mxu0 0.0
    %836 = vmatpush1.xpose.msra.mxu0 0.0
    %837 = vmatprep.subr.mxu0 0.0
    %838 = vmatpush1.xpose.msra.mxu0 0.0
    %839 = vmatprep.subr.mxu0 0.0
    %840 = vmatpush1.xpose.msra.mxu0 0.0
    %841 = vmatprep.mubr.f32.mxu0 0.0
    %v842 = vand.u32 %v157, 4294901760
    %843 = vmatmul.mubr.f32.gmra.mrb[0].mxu0 %v842
    %v844 = vpop.f32.mrb[0].mxu0
    %v845 = vadd.f32 %v758, %v844
    %v846 = vpop.f32.mrb[0].mxu0
    %847 = vdwg.mxu0
    %v849 = vsel %vm155, %v148, 0
    %v852 = vsel %vm155, %v35, 0
    %v855 = vsel %vm155, %v36, 0
    %v858 = vsel %vm155, %v37, 0
    %v861 = vsel %vm155, %v38, 0
    %v864 = vsel %vm155, %v39, 0
    %v867 = vsel %vm155, %v40, 0
    %v870 = vsel %vm155, %v41, 0
    %v873 = vsel %vm155, %v42, 0
    %v876 = vsel %vm155, %v43, 0
    %v879 = vsel %vm155, %v44, 0
    %v882 = vsel %vm155, %v45, 0
    %v885 = vsel %vm155, %v46, 0
    %v888 = vsel %vm155, %v47, 0
    %v891 = vsel %vm155, %v48, 0
    %v894 = vsel %vm155, %v49, 0
    %v897 = vsel %vm155, %v50, 0
    %899 = vmatprep.subr.mxu0 0.0
    %v900 = vand.u32 %v852, 4294901760
    %901 = vmatpush1.xpose.msra.mxu0 %v900
    %902 = vmatprep.subr.mxu0 0.0
    %v903 = vand.u32 %v855, 4294901760
    %904 = vmatpush1.xpose.msra.mxu0 %v903
    %905 = vmatprep.subr.mxu0 0.0
    %v906 = vand.u32 %v858, 4294901760
    %907 = vmatpush1.xpose.msra.mxu0 %v906
    %908 = vmatprep.subr.mxu0 0.0
    %v909 = vand.u32 %v861, 4294901760
    %910 = vmatpush1.xpose.msra.mxu0 %v909
    %911 = vmatprep.subr.mxu0 0.0
    %v912 = vand.u32 %v864, 4294901760
    %913 = vmatpush1.xpose.msra.mxu0 %v912
    %914 = vmatprep.subr.mxu0 0.0
    %v915 = vand.u32 %v867, 4294901760
    %916 = vmatpush1.xpose.msra.mxu0 %v915
    %917 = vmatprep.subr.mxu0 0.0
    %v918 = vand.u32 %v870, 4294901760
    %919 = vmatpush1.xpose.msra.mxu0 %v918
    %920 = vmatprep.subr.mxu0 0.0
    %v921 = vand.u32 %v873, 4294901760
    %922 = vmatpush1.xpose.msra.mxu0 %v921
    %923 = vmatprep.subr.mxu0 0.0
    %v924 = vand.u32 %v876, 4294901760
    %925 = vmatpush1.xpose.msra.mxu0 %v924
    %926 = vmatprep.subr.mxu0 0.0
    %v927 = vand.u32 %v879, 4294901760
    %928 = vmatpush1.xpose.msra.mxu0 %v927
    %929 = vmatprep.subr.mxu0 0.0
    %v930 = vand.u32 %v882, 4294901760
    %931 = vmatpush1.xpose.msra.mxu0 %v930
    %932 = vmatprep.subr.mxu0 0.0
    %v933 = vand.u32 %v885, 4294901760
    %934 = vmatpush1.xpose.msra.mxu0 %v933
    %935 = vmatprep.subr.mxu0 0.0
    %v936 = vand.u32 %v888, 4294901760
    %937 = vmatpush1.xpose.msra.mxu0 %v936
    %938 = vmatprep.subr.mxu0 0.0
    %v939 = vand.u32 %v891, 4294901760
    %940 = vmatpush1.xpose.msra.mxu0 %v939
    %941 = vmatprep.subr.mxu0 0.0
    %v942 = vand.u32 %v894, 4294901760
    %943 = vmatpush1.xpose.msra.mxu0 %v942
    %944 = vmatprep.subr.mxu0 0.0
    %v945 = vand.u32 %v897, 4294901760
    %946 = vmatpush1.xpose.msra.mxu0 %v945
    %947 = vmatprep.subr.mxu0 0.0
    %948 = vmatpush1.xpose.msra.mxu0 0.0
    %949 = vmatprep.subr.mxu0 0.0
    %950 = vmatpush1.xpose.msra.mxu0 0.0
    %951 = vmatprep.subr.mxu0 0.0
    %952 = vmatpush1.xpose.msra.mxu0 0.0
    %953 = vmatprep.subr.mxu0 0.0
    %954 = vmatpush1.xpose.msra.mxu0 0.0
    %955 = vmatprep.subr.mxu0 0.0
    %956 = vmatpush1.xpose.msra.mxu0 0.0
    %957 = vmatprep.subr.mxu0 0.0
    %958 = vmatpush1.xpose.msra.mxu0 0.0
    %959 = vmatprep.subr.mxu0 0.0
    %960 = vmatpush1.xpose.msra.mxu0 0.0
    %961 = vmatprep.subr.mxu0 0.0
    %962 = vmatpush1.xpose.msra.mxu0 0.0
    %963 = vmatprep.subr.mxu0 0.0
    %964 = vmatpush1.xpose.msra.mxu0 0.0
    %965 = vmatprep.subr.mxu0 0.0
    %966 = vmatpush1.xpose.msra.mxu0 0.0
    %967 = vmatprep.subr.mxu0 0.0
    %968 = vmatpush1.xpose.msra.mxu0 0.0
    %969 = vmatprep.subr.mxu0 0.0
    %970 = vmatpush1.xpose.msra.mxu0 0.0
    %971 = vmatprep.subr.mxu0 0.0
    %972 = vmatpush1.xpose.msra.mxu0 0.0
    %973 = vmatprep.subr.mxu0 0.0
    %974 = vmatpush1.xpose.msra.mxu0 0.0
    %975 = vmatprep.subr.mxu0 0.0
    %976 = vmatpush1.xpose.msra.mxu0 0.0
    %977 = vmatprep.subr.mxu0 0.0
    %978 = vmatpush1.xpose.msra.mxu0 0.0
    %979 = vmatprep.mubr.f32.mxu0 0.0
    %v980 = vand.u32 %v849, 4294901760
    %v981 = vsub.f32 %v849, %v980
    %v982 = vand.u32 %v981, 4294901760
    %v983 = vsub.f32 %v981, %v982
    %v984 = vand.u32 %v983, 4294901760
    %985 = vmatmul.mubr.f32.gmra.mrb[0].mxu0 %v984
    %v986 = vpop.f32.mrb[0].mxu0
    %v987 = vadd.f32 0.0, %v986
    %v988 = vpop.f32.mrb[0].mxu0
    %989 = vdwg.mxu0
    %990 = vmatprep.subr.mxu0 0.0
    %v991 = vand.u32 %v852, 4294901760
    %v992 = vsub.f32 %v852, %v991
    %v993 = vand.u32 %v992, 4294901760
    %v994 = vsub.f32 %v992, %v993
    %v995 = vand.u32 %v994, 4294901760
    %996 = vmatpush1.xpose.msra.mxu0 %v995
    %997 = vmatprep.subr.mxu0 0.0
    %v998 = vand.u32 %v855, 4294901760
    %v999 = vsub.f32 %v855, %v998
    %v1000 = vand.u32 %v999, 4294901760
    %v1001 = vsub.f32 %v999, %v1000
    %v1002 = vand.u32 %v1001, 4294901760
    %1003 = vmatpush1.xpose.msra.mxu0 %v1002
    %1004 = vmatprep.subr.mxu0 0.0
    %v1005 = vand.u32 %v858, 4294901760
    %v1006 = vsub.f32 %v858, %v1005
    %v1007 = vand.u32 %v1006, 4294901760
    %v1008 = vsub.f32 %v1006, %v1007
    %v1009 = vand.u32 %v1008, 4294901760
    %1010 = vmatpush1.xpose.msra.mxu0 %v1009
    %1011 = vmatprep.subr.mxu0 0.0
    %v1012 = vand.u32 %v861, 4294901760
    %v1013 = vsub.f32 %v861, %v1012
    %v1014 = vand.u32 %v1013, 4294901760
    %v1015 = vsub.f32 %v1013, %v1014
    %v1016 = vand.u32 %v1015, 4294901760
    %1017 = vmatpush1.xpose.msra.mxu0 %v1016
    %1018 = vmatprep.subr.mxu0 0.0
    %v1019 = vand.u32 %v864, 4294901760
    %v1020 = vsub.f32 %v864, %v1019
    %v1021 = vand.u32 %v1020, 4294901760
    %v1022 = vsub.f32 %v1020, %v1021
    %v1023 = vand.u32 %v1022, 4294901760
    %1024 = vmatpush1.xpose.msra.mxu0 %v1023
    %1025 = vmatprep.subr.mxu0 0.0
    %v1026 = vand.u32 %v867, 4294901760
    %v1027 = vsub.f32 %v867, %v1026
    %v1028 = vand.u32 %v1027, 4294901760
    %v1029 = vsub.f32 %v1027, %v1028
    %v1030 = vand.u32 %v1029, 4294901760
    %1031 = vmatpush1.xpose.msra.mxu0 %v1030
    %1032 = vmatprep.subr.mxu0 0.0
    %v1033 = vand.u32 %v870, 4294901760
    %v1034 = vsub.f32 %v870, %v1033
    %v1035 = vand.u32 %v1034, 4294901760
    %v1036 = vsub.f32 %v1034, %v1035
    %v1037 = vand.u32 %v1036, 4294901760
    %1038 = vmatpush1.xpose.msra.mxu0 %v1037
    %1039 = vmatprep.subr.mxu0 0.0
    %v1040 = vand.u32 %v873, 4294901760
    %v1041 = vsub.f32 %v873, %v1040
    %v1042 = vand.u32 %v1041, 4294901760
    %v1043 = vsub.f32 %v1041, %v1042
    %v1044 = vand.u32 %v1043, 4294901760
    %1045 = vmatpush1.xpose.msra.mxu0 %v1044
    %1046 = vmatprep.subr.mxu0 0.0
    %v1047 = vand.u32 %v876, 4294901760
    %v1048 = vsub.f32 %v876, %v1047
    %v1049 = vand.u32 %v1048, 4294901760
    %v1050 = vsub.f32 %v1048, %v1049
    %v1051 = vand.u32 %v1050, 4294901760
    %1052 = vmatpush1.xpose.msra.mxu0 %v1051
    %1053 = vmatprep.subr.mxu0 0.0
    %v1054 = vand.u32 %v879, 4294901760
    %v1055 = vsub.f32 %v879, %v1054
    %v1056 = vand.u32 %v1055, 4294901760
    %v1057 = vsub.f32 %v1055, %v1056
    %v1058 = vand.u32 %v1057, 4294901760
    %1059 = vmatpush1.xpose.msra.mxu0 %v1058
    %1060 = vmatprep.subr.mxu0 0.0
    %v1061 = vand.u32 %v882, 4294901760
    %v1062 = vsub.f32 %v882, %v1061
    %v1063 = vand.u32 %v1062, 4294901760
    %v1064 = vsub.f32 %v1062, %v1063
    %v1065 = vand.u32 %v1064, 4294901760
    %1066 = vmatpush1.xpose.msra.mxu0 %v1065
    %1067 = vmatprep.subr.mxu0 0.0
    %v1068 = vand.u32 %v885, 4294901760
    %v1069 = vsub.f32 %v885, %v1068
    %v1070 = vand.u32 %v1069, 4294901760
    %v1071 = vsub.f32 %v1069, %v1070
    %v1072 = vand.u32 %v1071, 4294901760
    %1073 = vmatpush1.xpose.msra.mxu0 %v1072
    %1074 = vmatprep.subr.mxu0 0.0
    %v1075 = vand.u32 %v888, 4294901760
    %v1076 = vsub.f32 %v888, %v1075
    %v1077 = vand.u32 %v1076, 4294901760
    %v1078 = vsub.f32 %v1076, %v1077
    %v1079 = vand.u32 %v1078, 4294901760
    %1080 = vmatpush1.xpose.msra.mxu0 %v1079
    %1081 = vmatprep.subr.mxu0 0.0
    %v1082 = vand.u32 %v891, 4294901760
    %v1083 = vsub.f32 %v891, %v1082
    %v1084 = vand.u32 %v1083, 4294901760
    %v1085 = vsub.f32 %v1083, %v1084
    %v1086 = vand.u32 %v1085, 4294901760
    %1087 = vmatpush1.xpose.msra.mxu0 %v1086
    %1088 = vmatprep.subr.mxu0 0.0
    %v1089 = vand.u32 %v894, 4294901760
    %v1090 = vsub.f32 %v894, %v1089
    %v1091 = vand.u32 %v1090, 4294901760
    %v1092 = vsub.f32 %v1090, %v1091
    %v1093 = vand.u32 %v1092, 4294901760
    %1094 = vmatpush1.xpose.msra.mxu0 %v1093
    %1095 = vmatprep.subr.mxu0 0.0
    %v1096 = vand.u32 %v897, 4294901760
    %v1097 = vsub.f32 %v897, %v1096
    %v1098 = vand.u32 %v1097, 4294901760
    %v1099 = vsub.f32 %v1097, %v1098
    %v1100 = vand.u32 %v1099, 4294901760
    %1101 = vmatpush1.xpose.msra.mxu0 %v1100
    %1102 = vmatprep.subr.mxu0 0.0
    %1103 = vmatpush1.xpose.msra.mxu0 0.0
    %1104 = vmatprep.subr.mxu0 0.0
    %1105 = vmatpush1.xpose.msra.mxu0 0.0
    %1106 = vmatprep.subr.mxu0 0.0
    %1107 = vmatpush1.xpose.msra.mxu0 0.0
    %1108 = vmatprep.subr.mxu0 0.0
    %1109 = vmatpush1.xpose.msra.mxu0 0.0
    %1110 = vmatprep.subr.mxu0 0.0
    %1111 = vmatpush1.xpose.msra.mxu0 0.0
    %1112 = vmatprep.subr.mxu0 0.0
    %1113 = vmatpush1.xpose.msra.mxu0 0.0
    %1114 = vmatprep.subr.mxu0 0.0
    %1115 = vmatpush1.xpose.msra.mxu0 0.0
    %1116 = vmatprep.subr.mxu0 0.0
    %1117 = vmatpush1.xpose.msra.mxu0 0.0
    %1118 = vmatprep.subr.mxu0 0.0
    %1119 = vmatpush1.xpose.msra.mxu0 0.0
    %1120 = vmatprep.subr.mxu0 0.0
    %1121 = vmatpush1.xpose.msra.mxu0 0.0
    %1122 = vmatprep.subr.mxu0 0.0
    %1123 = vmatpush1.xpose.msra.mxu0 0.0
    %1124 = vmatprep.subr.mxu0 0.0
    %1125 = vmatpush1.xpose.msra.mxu0 0.0
    %1126 = vmatprep.subr.mxu0 0.0
    %1127 = vmatpush1.xpose.msra.mxu0 0.0
    %1128 = vmatprep.subr.mxu0 0.0
    %1129 = vmatpush1.xpose.msra.mxu0 0.0
    %1130 = vmatprep.subr.mxu0 0.0
    %1131 = vmatpush1.xpose.msra.mxu0 0.0
    %1132 = vmatprep.subr.mxu0 0.0
    %1133 = vmatpush1.xpose.msra.mxu0 0.0
    %1134 = vmatprep.mubr.f32.mxu0 0.0
    %v1135 = vand.u32 %v849, 4294901760
    %1136 = vmatmul.mubr.f32.gmra.mrb[0].mxu0 %v1135
    %v1137 = vpop.f32.mrb[0].mxu0
    %v1138 = vadd.f32 %v987, %v1137
    %v1139 = vpop.f32.mrb[0].mxu0
    %1140 = vdwg.mxu0
    %1141 = vmatprep.subr.mxu0 0.0
    %v1142 = vand.u32 %v852, 4294901760
    %v1143 = vsub.f32 %v852, %v1142
    %1144 = vmatpush1.xpose.msra.mxu0 %v1143
    %1145 = vmatprep.subr.mxu0 0.0
    %v1146 = vand.u32 %v855, 4294901760
    %v1147 = vsub.f32 %v855, %v1146
    %1148 = vmatpush1.xpose.msra.mxu0 %v1147
    %1149 = vmatprep.subr.mxu0 0.0
    %v1150 = vand.u32 %v858, 4294901760
    %v1151 = vsub.f32 %v858, %v1150
    %1152 = vmatpush1.xpose.msra.mxu0 %v1151
    %1153 = vmatprep.subr.mxu0 0.0
    %v1154 = vand.u32 %v861, 4294901760
    %v1155 = vsub.f32 %v861, %v1154
    %1156 = vmatpush1.xpose.msra.mxu0 %v1155
    %1157 = vmatprep.subr.mxu0 0.0
    %v1158 = vand.u32 %v864, 4294901760
    %v1159 = vsub.f32 %v864, %v1158
    %1160 = vmatpush1.xpose.msra.mxu0 %v1159
    %1161 = vmatprep.subr.mxu0 0.0
    %v1162 = vand.u32 %v867, 4294901760
    %v1163 = vsub.f32 %v867, %v1162
    %1164 = vmatpush1.xpose.msra.mxu0 %v1163
    %1165 = vmatprep.subr.mxu0 0.0
    %v1166 = vand.u32 %v870, 4294901760
    %v1167 = vsub.f32 %v870, %v1166
    %1168 = vmatpush1.xpose.msra.mxu0 %v1167
    %1169 = vmatprep.subr.mxu0 0.0
    %v1170 = vand.u32 %v873, 4294901760
    %v1171 = vsub.f32 %v873, %v1170
    %1172 = vmatpush1.xpose.msra.mxu0 %v1171
    %1173 = vmatprep.subr.mxu0 0.0
    %v1174 = vand.u32 %v876, 4294901760
    %v1175 = vsub.f32 %v876, %v1174
    %1176 = vmatpush1.xpose.msra.mxu0 %v1175
    %1177 = vmatprep.subr.mxu0 0.0
    %v1178 = vand.u32 %v879, 4294901760
    %v1179 = vsub.f32 %v879, %v1178
    %1180 = vmatpush1.xpose.msra.mxu0 %v1179
    %1181 = vmatprep.subr.mxu0 0.0
    %v1182 = vand.u32 %v882, 4294901760
    %v1183 = vsub.f32 %v882, %v1182
    %1184 = vmatpush1.xpose.msra.mxu0 %v1183
    %1185 = vmatprep.subr.mxu0 0.0
    %v1186 = vand.u32 %v885, 4294901760
    %v1187 = vsub.f32 %v885, %v1186
    %1188 = vmatpush1.xpose.msra.mxu0 %v1187
    %1189 = vmatprep.subr.mxu0 0.0
    %v1190 = vand.u32 %v888, 4294901760
    %v1191 = vsub.f32 %v888, %v1190
    %1192 = vmatpush1.xpose.msra.mxu0 %v1191
    %1193 = vmatprep.subr.mxu0 0.0
    %v1194 = vand.u32 %v891, 4294901760
    %v1195 = vsub.f32 %v891, %v1194
    %1196 = vmatpush1.xpose.msra.mxu0 %v1195
    %1197 = vmatprep.subr.mxu0 0.0
    %v1198 = vand.u32 %v894, 4294901760
    %v1199 = vsub.f32 %v894, %v1198
    %1200 = vmatpush1.xpose.msra.mxu0 %v1199
    %1201 = vmatprep.subr.mxu0 0.0
    %v1202 = vand.u32 %v897, 4294901760
    %v1203 = vsub.f32 %v897, %v1202
    %1204 = vmatpush1.xpose.msra.mxu0 %v1203
    %1205 = vmatprep.subr.mxu0 0.0
    %1206 = vmatpush1.xpose.msra.mxu0 0.0
    %1207 = vmatprep.subr.mxu0 0.0
    %1208 = vmatpush1.xpose.msra.mxu0 0.0
    %1209 = vmatprep.subr.mxu0 0.0
    %1210 = vmatpush1.xpose.msra.mxu0 0.0
    %1211 = vmatprep.subr.mxu0 0.0
    %1212 = vmatpush1.xpose.msra.mxu0 0.0
    %1213 = vmatprep.subr.mxu0 0.0
    %1214 = vmatpush1.xpose.msra.mxu0 0.0
    %1215 = vmatprep.subr.mxu0 0.0
    %1216 = vmatpush1.xpose.msra.mxu0 0.0
    %1217 = vmatprep.subr.mxu0 0.0
    %1218 = vmatpush1.xpose.msra.mxu0 0.0
    %1219 = vmatprep.subr.mxu0 0.0
    %1220 = vmatpush1.xpose.msra.mxu0 0.0
    %1221 = vmatprep.subr.mxu0 0.0
    %1222 = vmatpush1.xpose.msra.mxu0 0.0
    %1223 = vmatprep.subr.mxu0 0.0
    %1224 = vmatpush1.xpose.msra.mxu0 0.0
    %1225 = vmatprep.subr.mxu0 0.0
    %1226 = vmatpush1.xpose.msra.mxu0 0.0
    %1227 = vmatprep.subr.mxu0 0.0
    %1228 = vmatpush1.xpose.msra.mxu0 0.0
    %1229 = vmatprep.subr.mxu0 0.0
    %1230 = vmatpush1.xpose.msra.mxu0 0.0
    %1231 = vmatprep.subr.mxu0 0.0
    %1232 = vmatpush1.xpose.msra.mxu0 0.0
    %1233 = vmatprep.subr.mxu0 0.0
    %1234 = vmatpush1.xpose.msra.mxu0 0.0
    %1235 = vmatprep.subr.mxu0 0.0
    %1236 = vmatpush1.xpose.msra.mxu0 0.0
    %1237 = vmatprep.mubr.f32.mxu0 0.0
    %v1238 = vand.u32 %v849, 4294901760
    %v1239 = vsub.f32 %v849, %v1238
    %1240 = vmatmul.mubr.f32.gmra.mrb[0].mxu0 %v1239
    %v1241 = vpop.f32.mrb[0].mxu0
    %v1242 = vadd.f32 %v1138, %v1241
    %v1243 = vpop.f32.mrb[0].mxu0
    %1244 = vdwg.mxu0
    %1245 = vmatprep.subr.mxu0 0.0
    %v1246 = vand.u32 %v852, 4294901760
    %1247 = vmatpush1.xpose.msra.mxu0 %v1246
    %1248 = vmatprep.subr.mxu0 0.0
    %v1249 = vand.u32 %v855, 4294901760
    %1250 = vmatpush1.xpose.msra.mxu0 %v1249
    %1251 = vmatprep.subr.mxu0 0.0
    %v1252 = vand.u32 %v858, 4294901760
    %1253 = vmatpush1.xpose.msra.mxu0 %v1252
    %1254 = vmatprep.subr.mxu0 0.0
    %v1255 = vand.u32 %v861, 4294901760
    %1256 = vmatpush1.xpose.msra.mxu0 %v1255
    %1257 = vmatprep.subr.mxu0 0.0
    %v1258 = vand.u32 %v864, 4294901760
    %1259 = vmatpush1.xpose.msra.mxu0 %v1258
    %1260 = vmatprep.subr.mxu0 0.0
    %v1261 = vand.u32 %v867, 4294901760
    %1262 = vmatpush1.xpose.msra.mxu0 %v1261
    %1263 = vmatprep.subr.mxu0 0.0
    %v1264 = vand.u32 %v870, 4294901760
    %1265 = vmatpush1.xpose.msra.mxu0 %v1264
    %1266 = vmatprep.subr.mxu0 0.0
    %v1267 = vand.u32 %v873, 4294901760
    %1268 = vmatpush1.xpose.msra.mxu0 %v1267
    %1269 = vmatprep.subr.mxu0 0.0
    %v1270 = vand.u32 %v876, 4294901760
    %1271 = vmatpush1.xpose.msra.mxu0 %v1270
    %1272 = vmatprep.subr.mxu0 0.0
    %v1273 = vand.u32 %v879, 4294901760
    %1274 = vmatpush1.xpose.msra.mxu0 %v1273
    %1275 = vmatprep.subr.mxu0 0.0
    %v1276 = vand.u32 %v882, 4294901760
    %1277 = vmatpush1.xpose.msra.mxu0 %v1276
    %1278 = vmatprep.subr.mxu0 0.0
    %v1279 = vand.u32 %v885, 4294901760
    %1280 = vmatpush1.xpose.msra.mxu0 %v1279
    %1281 = vmatprep.subr.mxu0 0.0
    %v1282 = vand.u32 %v888, 4294901760
    %1283 = vmatpush1.xpose.msra.mxu0 %v1282
    %1284 = vmatprep.subr.mxu0 0.0
    %v1285 = vand.u32 %v891, 4294901760
    %1286 = vmatpush1.xpose.msra.mxu0 %v1285
    %1287 = vmatprep.subr.mxu0 0.0
    %v1288 = vand.u32 %v894, 4294901760
    %1289 = vmatpush1.xpose.msra.mxu0 %v1288
    %1290 = vmatprep.subr.mxu0 0.0
    %v1291 = vand.u32 %v897, 4294901760
    %1292 = vmatpush1.xpose.msra.mxu0 %v1291
    %1293 = vmatprep.subr.mxu0 0.0
    %1294 = vmatpush1.xpose.msra.mxu0 0.0
    %1295 = vmatprep.subr.mxu0 0.0
    %1296 = vmatpush1.xpose.msra.mxu0 0.0
    %1297 = vmatprep.subr.mxu0 0.0
    %1298 = vmatpush1.xpose.msra.mxu0 0.0
    %1299 = vmatprep.subr.mxu0 0.0
    %1300 = vmatpush1.xpose.msra.mxu0 0.0
    %1301 = vmatprep.subr.mxu0 0.0
    %1302 = vmatpush1.xpose.msra.mxu0 0.0
    %1303 = vmatprep.subr.mxu0 0.0
    %1304 = vmatpush1.xpose.msra.mxu0 0.0
    %1305 = vmatprep.subr.mxu0 0.0
    %1306 = vmatpush1.xpose.msra.mxu0 0.0
    %1307 = vmatprep.subr.mxu0 0.0
    %1308 = vmatpush1.xpose.msra.mxu0 0.0
    %1309 = vmatprep.subr.mxu0 0.0
    %1310 = vmatpush1.xpose.msra.mxu0 0.0
    %1311 = vmatprep.subr.mxu0 0.0
    %1312 = vmatpush1.xpose.msra.mxu0 0.0
    %1313 = vmatprep.subr.mxu0 0.0
    %1314 = vmatpush1.xpose.msra.mxu0 0.0
    %1315 = vmatprep.subr.mxu0 0.0
    %1316 = vmatpush1.xpose.msra.mxu0 0.0
    %1317 = vmatprep.subr.mxu0 0.0
    %1318 = vmatpush1.xpose.msra.mxu0 0.0
    %1319 = vmatprep.subr.mxu0 0.0
    %1320 = vmatpush1.xpose.msra.mxu0 0.0
    %1321 = vmatprep.subr.mxu0 0.0
    %1322 = vmatpush1.xpose.msra.mxu0 0.0
    %1323 = vmatprep.subr.mxu0 0.0
    %1324 = vmatpush1.xpose.msra.mxu0 0.0
    %1325 = vmatprep.mubr.f32.mxu0 0.0
    %v1326 = vand.u32 %v849, 4294901760
    %v1327 = vsub.f32 %v849, %v1326
    %v1328 = vand.u32 %v1327, 4294901760
    %1329 = vmatmul.mubr.f32.gmra.mrb[0].mxu0 %v1328
    %v1330 = vpop.f32.mrb[0].mxu0
    %v1331 = vadd.f32 %v1242, %v1330
    %v1332 = vpop.f32.mrb[0].mxu0
    %1333 = vdwg.mxu0
    %1334 = vmatprep.subr.mxu0 0.0
    %v1335 = vand.u32 %v852, 4294901760
    %v1336 = vsub.f32 %v852, %v1335
    %v1337 = vand.u32 %v1336, 4294901760
    %1338 = vmatpush1.xpose.msra.mxu0 %v1337
    %1339 = vmatprep.subr.mxu0 0.0
    %v1340 = vand.u32 %v855, 4294901760
    %v1341 = vsub.f32 %v855, %v1340
    %v1342 = vand.u32 %v1341, 4294901760
    %1343 = vmatpush1.xpose.msra.mxu0 %v1342
    %1344 = vmatprep.subr.mxu0 0.0
    %v1345 = vand.u32 %v858, 4294901760
    %v1346 = vsub.f32 %v858, %v1345
    %v1347 = vand.u32 %v1346, 4294901760
    %1348 = vmatpush1.xpose.msra.mxu0 %v1347
    %1349 = vmatprep.subr.mxu0 0.0
    %v1350 = vand.u32 %v861, 4294901760
    %v1351 = vsub.f32 %v861, %v1350
    %v1352 = vand.u32 %v1351, 4294901760
    %1353 = vmatpush1.xpose.msra.mxu0 %v1352
    %1354 = vmatprep.subr.mxu0 0.0
    %v1355 = vand.u32 %v864, 4294901760
    %v1356 = vsub.f32 %v864, %v1355
    %v1357 = vand.u32 %v1356, 4294901760
    %1358 = vmatpush1.xpose.msra.mxu0 %v1357
    %1359 = vmatprep.subr.mxu0 0.0
    %v1360 = vand.u32 %v867, 4294901760
    %v1361 = vsub.f32 %v867, %v1360
    %v1362 = vand.u32 %v1361, 4294901760
    %1363 = vmatpush1.xpose.msra.mxu0 %v1362
    %1364 = vmatprep.subr.mxu0 0.0
    %v1365 = vand.u32 %v870, 4294901760
    %v1366 = vsub.f32 %v870, %v1365
    %v1367 = vand.u32 %v1366, 4294901760
    %1368 = vmatpush1.xpose.msra.mxu0 %v1367
    %1369 = vmatprep.subr.mxu0 0.0
    %v1370 = vand.u32 %v873, 4294901760
    %v1371 = vsub.f32 %v873, %v1370
    %v1372 = vand.u32 %v1371, 4294901760
    %1373 = vmatpush1.xpose.msra.mxu0 %v1372
    %1374 = vmatprep.subr.mxu0 0.0
    %v1375 = vand.u32 %v876, 4294901760
    %v1376 = vsub.f32 %v876, %v1375
    %v1377 = vand.u32 %v1376, 4294901760
    %1378 = vmatpush1.xpose.msra.mxu0 %v1377
    %1379 = vmatprep.subr.mxu0 0.0
    %v1380 = vand.u32 %v879, 4294901760
    %v1381 = vsub.f32 %v879, %v1380
    %v1382 = vand.u32 %v1381, 4294901760
    %1383 = vmatpush1.xpose.msra.mxu0 %v1382
    %1384 = vmatprep.subr.mxu0 0.0
    %v1385 = vand.u32 %v882, 4294901760
    %v1386 = vsub.f32 %v882, %v1385
    %v1387 = vand.u32 %v1386, 4294901760
    %1388 = vmatpush1.xpose.msra.mxu0 %v1387
    %1389 = vmatprep.subr.mxu0 0.0
    %v1390 = vand.u32 %v885, 4294901760
    %v1391 = vsub.f32 %v885, %v1390
    %v1392 = vand.u32 %v1391, 4294901760
    %1393 = vmatpush1.xpose.msra.mxu0 %v1392
    %1394 = vmatprep.subr.mxu0 0.0
    %v1395 = vand.u32 %v888, 4294901760
    %v1396 = vsub.f32 %v888, %v1395
    %v1397 = vand.u32 %v1396, 4294901760
    %1398 = vmatpush1.xpose.msra.mxu0 %v1397
    %1399 = vmatprep.subr.mxu0 0.0
    %v1400 = vand.u32 %v891, 4294901760
    %v1401 = vsub.f32 %v891, %v1400
    %v1402 = vand.u32 %v1401, 4294901760
    %1403 = vmatpush1.xpose.msra.mxu0 %v1402
    %1404 = vmatprep.subr.mxu0 0.0
    %v1405 = vand.u32 %v894, 4294901760
    %v1406 = vsub.f32 %v894, %v1405
    %v1407 = vand.u32 %v1406, 4294901760
    %1408 = vmatpush1.xpose.msra.mxu0 %v1407
    %1409 = vmatprep.subr.mxu0 0.0
    %v1410 = vand.u32 %v897, 4294901760
    %v1411 = vsub.f32 %v897, %v1410
    %v1412 = vand.u32 %v1411, 4294901760
    %1413 = vmatpush1.xpose.msra.mxu0 %v1412
    %1414 = vmatprep.subr.mxu0 0.0
    %1415 = vmatpush1.xpose.msra.mxu0 0.0
    %1416 = vmatprep.subr.mxu0 0.0
    %1417 = vmatpush1.xpose.msra.mxu0 0.0
    %1418 = vmatprep.subr.mxu0 0.0
    %1419 = vmatpush1.xpose.msra.mxu0 0.0
    %1420 = vmatprep.subr.mxu0 0.0
    %1421 = vmatpush1.xpose.msra.mxu0 0.0
    %1422 = vmatprep.subr.mxu0 0.0
    %1423 = vmatpush1.xpose.msra.mxu0 0.0
    %1424 = vmatprep.subr.mxu0 0.0
    %1425 = vmatpush1.xpose.msra.mxu0 0.0
    %1426 = vmatprep.subr.mxu0 0.0
    %1427 = vmatpush1.xpose.msra.mxu0 0.0
    %1428 = vmatprep.subr.mxu0 0.0
    %1429 = vmatpush1.xpose.msra.mxu0 0.0
    %1430 = vmatprep.subr.mxu0 0.0
    %1431 = vmatpush1.xpose.msra.mxu0 0.0
    %1432 = vmatprep.subr.mxu0 0.0
    %1433 = vmatpush1.xpose.msra.mxu0 0.0
    %1434 = vmatprep.subr.mxu0 0.0
    %1435 = vmatpush1.xpose.msra.mxu0 0.0
    %1436 = vmatprep.subr.mxu0 0.0
    %1437 = vmatpush1.xpose.msra.mxu0 0.0
    %1438 = vmatprep.subr.mxu0 0.0
    %1439 = vmatpush1.xpose.msra.mxu0 0.0
    %1440 = vmatprep.subr.mxu0 0.0
    %1441 = vmatpush1.xpose.msra.mxu0 0.0
    %1442 = vmatprep.subr.mxu0 0.0
    %1443 = vmatpush1.xpose.msra.mxu0 0.0
    %1444 = vmatprep.subr.mxu0 0.0
    %1445 = vmatpush1.xpose.msra.mxu0 0.0
    %1446 = vmatprep.mubr.f32.mxu0 0.0
    %v1447 = vand.u32 %v849, 4294901760
    %1448 = vmatmul.mubr.f32.gmra.mrb[0].mxu0 %v1447
    %v1449 = vpop.f32.mrb[0].mxu0
    %v1450 = vadd.f32 %v1331, %v1449
    %v1451 = vpop.f32.mrb[0].mxu0
    %1452 = vdwg.mxu0
    %1453 = vmatprep.subr.mxu0 0.0
    %v1454 = vand.u32 %v852, 4294901760
    %1455 = vmatpush1.xpose.msra.mxu0 %v1454
    %1456 = vmatprep.subr.mxu0 0.0
    %v1457 = vand.u32 %v855, 4294901760
    %1458 = vmatpush1.xpose.msra.mxu0 %v1457
    %1459 = vmatprep.subr.mxu0 0.0
    %v1460 = vand.u32 %v858, 4294901760
    %1461 = vmatpush1.xpose.msra.mxu0 %v1460
    %1462 = vmatprep.subr.mxu0 0.0
    %v1463 = vand.u32 %v861, 4294901760
    %1464 = vmatpush1.xpose.msra.mxu0 %v1463
    %1465 = vmatprep.subr.mxu0 0.0
    %v1466 = vand.u32 %v864, 4294901760
    %1467 = vmatpush1.xpose.msra.mxu0 %v1466
    %1468 = vmatprep.subr.mxu0 0.0
    %v1469 = vand.u32 %v867, 4294901760
    %1470 = vmatpush1.xpose.msra.mxu0 %v1469
    %1471 = vmatprep.subr.mxu0 0.0
    %v1472 = vand.u32 %v870, 4294901760
    %1473 = vmatpush1.xpose.msra.mxu0 %v1472
    %1474 = vmatprep.subr.mxu0 0.0
    %v1475 = vand.u32 %v873, 4294901760
    %1476 = vmatpush1.xpose.msra.mxu0 %v1475
    %1477 = vmatprep.subr.mxu0 0.0
    %v1478 = vand.u32 %v876, 4294901760
    %1479 = vmatpush1.xpose.msra.mxu0 %v1478
    %1480 = vmatprep.subr.mxu0 0.0
    %v1481 = vand.u32 %v879, 4294901760
    %1482 = vmatpush1.xpose.msra.mxu0 %v1481
    %1483 = vmatprep.subr.mxu0 0.0
    %v1484 = vand.u32 %v882, 4294901760
    %1485 = vmatpush1.xpose.msra.mxu0 %v1484
    %1486 = vmatprep.subr.mxu0 0.0
    %v1487 = vand.u32 %v885, 4294901760
    %1488 = vmatpush1.xpose.msra.mxu0 %v1487
    %1489 = vmatprep.subr.mxu0 0.0
    %v1490 = vand.u32 %v888, 4294901760
    %1491 = vmatpush1.xpose.msra.mxu0 %v1490
    %1492 = vmatprep.subr.mxu0 0.0
    %v1493 = vand.u32 %v891, 4294901760
    %1494 = vmatpush1.xpose.msra.mxu0 %v1493
    %1495 = vmatprep.subr.mxu0 0.0
    %v1496 = vand.u32 %v894, 4294901760
    %1497 = vmatpush1.xpose.msra.mxu0 %v1496
    %1498 = vmatprep.subr.mxu0 0.0
    %v1499 = vand.u32 %v897, 4294901760
    %1500 = vmatpush1.xpose.msra.mxu0 %v1499
    %1501 = vmatprep.subr.mxu0 0.0
    %1502 = vmatpush1.xpose.msra.mxu0 0.0
    %1503 = vmatprep.subr.mxu0 0.0
    %1504 = vmatpush1.xpose.msra.mxu0 0.0
    %1505 = vmatprep.subr.mxu0 0.0
    %1506 = vmatpush1.xpose.msra.mxu0 0.0
    %1507 = vmatprep.subr.mxu0 0.0
    %1508 = vmatpush1.xpose.msra.mxu0 0.0
    %1509 = vmatprep.subr.mxu0 0.0
    %1510 = vmatpush1.xpose.msra.mxu0 0.0
    %1511 = vmatprep.subr.mxu0 0.0
    %1512 = vmatpush1.xpose.msra.mxu0 0.0
    %1513 = vmatprep.subr.mxu0 0.0
    %1514 = vmatpush1.xpose.msra.mxu0 0.0
    %1515 = vmatprep.subr.mxu0 0.0
    %1516 = vmatpush1.xpose.msra.mxu0 0.0
    %1517 = vmatprep.subr.mxu0 0.0
    %1518 = vmatpush1.xpose.msra.mxu0 0.0
    %1519 = vmatprep.subr.mxu0 0.0
    %1520 = vmatpush1.xpose.msra.mxu0 0.0
    %1521 = vmatprep.subr.mxu0 0.0
    %1522 = vmatpush1.xpose.msra.mxu0 0.0
    %1523 = vmatprep.subr.mxu0 0.0
    %1524 = vmatpush1.xpose.msra.mxu0 0.0
    %1525 = vmatprep.subr.mxu0 0.0
    %1526 = vmatpush1.xpose.msra.mxu0 0.0
    %1527 = vmatprep.subr.mxu0 0.0
    %1528 = vmatpush1.xpose.msra.mxu0 0.0
    %1529 = vmatprep.subr.mxu0 0.0
    %1530 = vmatpush1.xpose.msra.mxu0 0.0
    %1531 = vmatprep.subr.mxu0 0.0
    %1532 = vmatpush1.xpose.msra.mxu0 0.0
    %1533 = vmatprep.mubr.f32.mxu0 0.0
    %v1534 = vand.u32 %v849, 4294901760
    %1535 = vmatmul.mubr.f32.gmra.mrb[0].mxu0 %v1534
    %v1536 = vpop.f32.mrb[0].mxu0
    %v1537 = vadd.f32 %v1450, %v1536
    %v1538 = vpop.f32.mrb[0].mxu0
    %1539 = vdwg.mxu0
    %v1541 = vsel %vm155, %v149, 0
    %v1544 = vsel %vm155, %v51, 0
    %v1547 = vsel %vm155, %v52, 0
    %v1550 = vsel %vm155, %v53, 0
    %v1553 = vsel %vm155, %v54, 0
    %v1556 = vsel %vm155, %v55, 0
    %v1559 = vsel %vm155, %v56, 0
    %v1562 = vsel %vm155, %v57, 0
    %v1565 = vsel %vm155, %v58, 0
    %v1568 = vsel %vm155, %v59, 0
    %v1571 = vsel %vm155, %v60, 0
    %v1574 = vsel %vm155, %v61, 0
    %v1577 = vsel %vm155, %v62, 0
    %v1580 = vsel %vm155, %v63, 0
    %v1583 = vsel %vm155, %v64, 0
    %v1586 = vsel %vm155, %v65, 0
    %v1589 = vsel %vm155, %v66, 0
    %1591 = vmatprep.subr.mxu0 0.0
    %v1592 = vand.u32 %v1544, 4294901760
    %1593 = vmatpush1.xpose.msra.mxu0 %v1592
    %1594 = vmatprep.subr.mxu0 0.0
    %v1595 = vand.u32 %v1547, 4294901760
    %1596 = vmatpush1.xpose.msra.mxu0 %v1595
    %1597 = vmatprep.subr.mxu0 0.0
    %v1598 = vand.u32 %v1550, 4294901760
    %1599 = vmatpush1.xpose.msra.mxu0 %v1598
    %1600 = vmatprep.subr.mxu0 0.0
    %v1601 = vand.u32 %v1553, 4294901760
    %1602 = vmatpush1.xpose.msra.mxu0 %v1601
    %1603 = vmatprep.subr.mxu0 0.0
    %v1604 = vand.u32 %v1556, 4294901760
    %1605 = vmatpush1.xpose.msra.mxu0 %v1604
    %1606 = vmatprep.subr.mxu0 0.0
    %v1607 = vand.u32 %v1559, 4294901760
    %1608 = vmatpush1.xpose.msra.mxu0 %v1607
    %1609 = vmatprep.subr.mxu0 0.0
    %v1610 = vand.u32 %v1562, 4294901760
    %1611 = vmatpush1.xpose.msra.mxu0 %v1610
    %1612 = vmatprep.subr.mxu0 0.0
    %v1613 = vand.u32 %v1565, 4294901760
    %1614 = vmatpush1.xpose.msra.mxu0 %v1613
    %1615 = vmatprep.subr.mxu0 0.0
    %v1616 = vand.u32 %v1568, 4294901760
    %1617 = vmatpush1.xpose.msra.mxu0 %v1616
    %1618 = vmatprep.subr.mxu0 0.0
    %v1619 = vand.u32 %v1571, 4294901760
    %1620 = vmatpush1.xpose.msra.mxu0 %v1619
    %1621 = vmatprep.subr.mxu0 0.0
    %v1622 = vand.u32 %v1574, 4294901760
    %1623 = vmatpush1.xpose.msra.mxu0 %v1622
    %1624 = vmatprep.subr.mxu0 0.0
    %v1625 = vand.u32 %v1577, 4294901760
    %1626 = vmatpush1.xpose.msra.mxu0 %v1625
    %1627 = vmatprep.subr.mxu0 0.0
    %v1628 = vand.u32 %v1580, 4294901760
    %1629 = vmatpush1.xpose.msra.mxu0 %v1628
    %1630 = vmatprep.subr.mxu0 0.0
    %v1631 = vand.u32 %v1583, 4294901760
    %1632 = vmatpush1.xpose.msra.mxu0 %v1631
    %1633 = vmatprep.subr.mxu0 0.0
    %v1634 = vand.u32 %v1586, 4294901760
    %1635 = vmatpush1.xpose.msra.mxu0 %v1634
    %1636 = vmatprep.subr.mxu0 0.0
    %v1637 = vand.u32 %v1589, 4294901760
    %1638 = vmatpush1.xpose.msra.mxu0 %v1637
    %1639 = vmatprep.subr.mxu0 0.0
    %1640 = vmatpush1.xpose.msra.mxu0 0.0
    %1641 = vmatprep.subr.mxu0 0.0
    %1642 = vmatpush1.xpose.msra.mxu0 0.0
    %1643 = vmatprep.subr.mxu0 0.0
    %1644 = vmatpush1.xpose.msra.mxu0 0.0
    %1645 = vmatprep.subr.mxu0 0.0
    %1646 = vmatpush1.xpose.msra.mxu0 0.0
    %1647 = vmatprep.subr.mxu0 0.0
    %1648 = vmatpush1.xpose.msra.mxu0 0.0
    %1649 = vmatprep.subr.mxu0 0.0
    %1650 = vmatpush1.xpose.msra.mxu0 0.0
    %1651 = vmatprep.subr.mxu0 0.0
    %1652 = vmatpush1.xpose.msra.mxu0 0.0
    %1653 = vmatprep.subr.mxu0 0.0
    %1654 = vmatpush1.xpose.msra.mxu0 0.0
    %1655 = vmatprep.subr.mxu0 0.0
    %1656 = vmatpush1.xpose.msra.mxu0 0.0
    %1657 = vmatprep.subr.mxu0 0.0
    %1658 = vmatpush1.xpose.msra.mxu0 0.0
    %1659 = vmatprep.subr.mxu0 0.0
    %1660 = vmatpush1.xpose.msra.mxu0 0.0
    %1661 = vmatprep.subr.mxu0 0.0
    %1662 = vmatpush1.xpose.msra.mxu0 0.0
    %1663 = vmatprep.subr.mxu0 0.0
    %1664 = vmatpush1.xpose.msra.mxu0 0.0
    %1665 = vmatprep.subr.mxu0 0.0
    %1666 = vmatpush1.xpose.msra.mxu0 0.0
    %1667 = vmatprep.subr.mxu0 0.0
    %1668 = vmatpush1.xpose.msra.mxu0 0.0
    %1669 = vmatprep.subr.mxu0 0.0
    %1670 = vmatpush1.xpose.msra.mxu0 0.0
    %1671 = vmatprep.mubr.f32.mxu0 0.0
    %v1672 = vand.u32 %v1541, 4294901760
    %v1673 = vsub.f32 %v1541, %v1672
    %v1674 = vand.u32 %v1673, 4294901760
    %v1675 = vsub.f32 %v1673, %v1674
    %v1676 = vand.u32 %v1675, 4294901760
    %1677 = vmatmul.mubr.f32.gmra.mrb[0].mxu0 %v1676
    %v1678 = vpop.f32.mrb[0].mxu0
    %v1679 = vadd.f32 0.0, %v1678
    %v1680 = vpop.f32.mrb[0].mxu0
    %1681 = vdwg.mxu0
    %1682 = vmatprep.subr.mxu0 0.0
    %v1683 = vand.u32 %v1544, 4294901760
    %v1684 = vsub.f32 %v1544, %v1683
    %v1685 = vand.u32 %v1684, 4294901760
    %v1686 = vsub.f32 %v1684, %v1685
    %v1687 = vand.u32 %v1686, 4294901760
    %1688 = vmatpush1.xpose.msra.mxu0 %v1687
    %1689 = vmatprep.subr.mxu0 0.0
    %v1690 = vand.u32 %v1547, 4294901760
    %v1691 = vsub.f32 %v1547, %v1690
    %v1692 = vand.u32 %v1691, 4294901760
    %v1693 = vsub.f32 %v1691, %v1692
    %v1694 = vand.u32 %v1693, 4294901760
    %1695 = vmatpush1.xpose.msra.mxu0 %v1694
    %1696 = vmatprep.subr.mxu0 0.0
    %v1697 = vand.u32 %v1550, 4294901760
    %v1698 = vsub.f32 %v1550, %v1697
    %v1699 = vand.u32 %v1698, 4294901760
    %v1700 = vsub.f32 %v1698, %v1699
    %v1701 = vand.u32 %v1700, 4294901760
    %1702 = vmatpush1.xpose.msra.mxu0 %v1701
    %1703 = vmatprep.subr.mxu0 0.0
    %v1704 = vand.u32 %v1553, 4294901760
    %v1705 = vsub.f32 %v1553, %v1704
    %v1706 = vand.u32 %v1705, 4294901760
    %v1707 = vsub.f32 %v1705, %v1706
    %v1708 = vand.u32 %v1707, 4294901760
    %1709 = vmatpush1.xpose.msra.mxu0 %v1708
    %1710 = vmatprep.subr.mxu0 0.0
    %v1711 = vand.u32 %v1556, 4294901760
    %v1712 = vsub.f32 %v1556, %v1711
    %v1713 = vand.u32 %v1712, 4294901760
    %v1714 = vsub.f32 %v1712, %v1713
    %v1715 = vand.u32 %v1714, 4294901760
    %1716 = vmatpush1.xpose.msra.mxu0 %v1715
    %1717 = vmatprep.subr.mxu0 0.0
    %v1718 = vand.u32 %v1559, 4294901760
    %v1719 = vsub.f32 %v1559, %v1718
    %v1720 = vand.u32 %v1719, 4294901760
    %v1721 = vsub.f32 %v1719, %v1720
    %v1722 = vand.u32 %v1721, 4294901760
    %1723 = vmatpush1.xpose.msra.mxu0 %v1722
    %1724 = vmatprep.subr.mxu0 0.0
    %v1725 = vand.u32 %v1562, 4294901760
    %v1726 = vsub.f32 %v1562, %v1725
    %v1727 = vand.u32 %v1726, 4294901760
    %v1728 = vsub.f32 %v1726, %v1727
    %v1729 = vand.u32 %v1728, 4294901760
    %1730 = vmatpush1.xpose.msra.mxu0 %v1729
    %1731 = vmatprep.subr.mxu0 0.0
    %v1732 = vand.u32 %v1565, 4294901760
    %v1733 = vsub.f32 %v1565, %v1732
    %v1734 = vand.u32 %v1733, 4294901760
    %v1735 = vsub.f32 %v1733, %v1734
    %v1736 = vand.u32 %v1735, 4294901760
    %1737 = vmatpush1.xpose.msra.mxu0 %v1736
    %1738 = vmatprep.subr.mxu0 0.0
    %v1739 = vand.u32 %v1568, 4294901760
    %v1740 = vsub.f32 %v1568, %v1739
    %v1741 = vand.u32 %v1740, 4294901760
    %v1742 = vsub.f32 %v1740, %v1741
    %v1743 = vand.u32 %v1742, 4294901760
    %1744 = vmatpush1.xpose.msra.mxu0 %v1743
    %1745 = vmatprep.subr.mxu0 0.0
    %v1746 = vand.u32 %v1571, 4294901760
    %v1747 = vsub.f32 %v1571, %v1746
    %v1748 = vand.u32 %v1747, 4294901760
    %v1749 = vsub.f32 %v1747, %v1748
    %v1750 = vand.u32 %v1749, 4294901760
    %1751 = vmatpush1.xpose.msra.mxu0 %v1750
    %1752 = vmatprep.subr.mxu0 0.0
    %v1753 = vand.u32 %v1574, 4294901760
    %v1754 = vsub.f32 %v1574, %v1753
    %v1755 = vand.u32 %v1754, 4294901760
    %v1756 = vsub.f32 %v1754, %v1755
    %v1757 = vand.u32 %v1756, 4294901760
    %1758 = vmatpush1.xpose.msra.mxu0 %v1757
    %1759 = vmatprep.subr.mxu0 0.0
    %v1760 = vand.u32 %v1577, 4294901760
    %v1761 = vsub.f32 %v1577, %v1760
    %v1762 = vand.u32 %v1761, 4294901760
    %v1763 = vsub.f32 %v1761, %v1762
    %v1764 = vand.u32 %v1763, 4294901760
    %1765 = vmatpush1.xpose.msra.mxu0 %v1764
    %1766 = vmatprep.subr.mxu0 0.0
    %v1767 = vand.u32 %v1580, 4294901760
    %v1768 = vsub.f32 %v1580, %v1767
    %v1769 = vand.u32 %v1768, 4294901760
    %v1770 = vsub.f32 %v1768, %v1769
    %v1771 = vand.u32 %v1770, 4294901760
    %1772 = vmatpush1.xpose.msra.mxu0 %v1771
    %1773 = vmatprep.subr.mxu0 0.0
    %v1774 = vand.u32 %v1583, 4294901760
    %v1775 = vsub.f32 %v1583, %v1774
    %v1776 = vand.u32 %v1775, 4294901760
    %v1777 = vsub.f32 %v1775, %v1776
    %v1778 = vand.u32 %v1777, 4294901760
    %1779 = vmatpush1.xpose.msra.mxu0 %v1778
    %1780 = vmatprep.subr.mxu0 0.0
    %v1781 = vand.u32 %v1586, 4294901760
    %v1782 = vsub.f32 %v1586, %v1781
    %v1783 = vand.u32 %v1782, 4294901760
    %v1784 = vsub.f32 %v1782, %v1783
    %v1785 = vand.u32 %v1784, 4294901760
    %1786 = vmatpush1.xpose.msra.mxu0 %v1785
    %1787 = vmatprep.subr.mxu0 0.0
    %v1788 = vand.u32 %v1589, 4294901760
    %v1789 = vsub.f32 %v1589, %v1788
    %v1790 = vand.u32 %v1789, 4294901760
    %v1791 = vsub.f32 %v1789, %v1790
    %v1792 = vand.u32 %v1791, 4294901760
    %1793 = vmatpush1.xpose.msra.mxu0 %v1792
    %1794 = vmatprep.subr.mxu0 0.0
    %1795 = vmatpush1.xpose.msra.mxu0 0.0
    %1796 = vmatprep.subr.mxu0 0.0
    %1797 = vmatpush1.xpose.msra.mxu0 0.0
    %1798 = vmatprep.subr.mxu0 0.0
    %1799 = vmatpush1.xpose.msra.mxu0 0.0
    %1800 = vmatprep.subr.mxu0 0.0
    %1801 = vmatpush1.xpose.msra.mxu0 0.0
    %1802 = vmatprep.subr.mxu0 0.0
    %1803 = vmatpush1.xpose.msra.mxu0 0.0
    %1804 = vmatprep.subr.mxu0 0.0
    %1805 = vmatpush1.xpose.msra.mxu0 0.0
    %1806 = vmatprep.subr.mxu0 0.0
    %1807 = vmatpush1.xpose.msra.mxu0 0.0
    %1808 = vmatprep.subr.mxu0 0.0
    %1809 = vmatpush1.xpose.msra.mxu0 0.0
    %1810 = vmatprep.subr.mxu0 0.0
    %1811 = vmatpush1.xpose.msra.mxu0 0.0
    %1812 = vmatprep.subr.mxu0 0.0
    %1813 = vmatpush1.xpose.msra.mxu0 0.0
    %1814 = vmatprep.subr.mxu0 0.0
    %1815 = vmatpush1.xpose.msra.mxu0 0.0
    %1816 = vmatprep.subr.mxu0 0.0
    %1817 = vmatpush1.xpose.msra.mxu0 0.0
    %1818 = vmatprep.subr.mxu0 0.0
    %1819 = vmatpush1.xpose.msra.mxu0 0.0
    %1820 = vmatprep.subr.mxu0 0.0
    %1821 = vmatpush1.xpose.msra.mxu0 0.0
    %1822 = vmatprep.subr.mxu0 0.0
    %1823 = vmatpush1.xpose.msra.mxu0 0.0
    %1824 = vmatprep.subr.mxu0 0.0
    %1825 = vmatpush1.xpose.msra.mxu0 0.0
    %1826 = vmatprep.mubr.f32.mxu0 0.0
    %v1827 = vand.u32 %v1541, 4294901760
    %1828 = vmatmul.mubr.f32.gmra.mrb[0].mxu0 %v1827
    %v1829 = vpop.f32.mrb[0].mxu0
    %v1830 = vadd.f32 %v1679, %v1829
    %v1831 = vpop.f32.mrb[0].mxu0
    %1832 = vdwg.mxu0
    %1833 = vmatprep.subr.mxu0 0.0
    %v1834 = vand.u32 %v1544, 4294901760
    %v1835 = vsub.f32 %v1544, %v1834
    %1836 = vmatpush1.xpose.msra.mxu0 %v1835
    %1837 = vmatprep.subr.mxu0 0.0
    %v1838 = vand.u32 %v1547, 4294901760
    %v1839 = vsub.f32 %v1547, %v1838
    %1840 = vmatpush1.xpose.msra.mxu0 %v1839
    %1841 = vmatprep.subr.mxu0 0.0
    %v1842 = vand.u32 %v1550, 4294901760
    %v1843 = vsub.f32 %v1550, %v1842
    %1844 = vmatpush1.xpose.msra.mxu0 %v1843
    %1845 = vmatprep.subr.mxu0 0.0
    %v1846 = vand.u32 %v1553, 4294901760
    %v1847 = vsub.f32 %v1553, %v1846
    %1848 = vmatpush1.xpose.msra.mxu0 %v1847
    %1849 = vmatprep.subr.mxu0 0.0
    %v1850 = vand.u32 %v1556, 4294901760
    %v1851 = vsub.f32 %v1556, %v1850
    %1852 = vmatpush1.xpose.msra.mxu0 %v1851
    %1853 = vmatprep.subr.mxu0 0.0
    %v1854 = vand.u32 %v1559, 4294901760
    %v1855 = vsub.f32 %v1559, %v1854
    %1856 = vmatpush1.xpose.msra.mxu0 %v1855
    %1857 = vmatprep.subr.mxu0 0.0
    %v1858 = vand.u32 %v1562, 4294901760
    %v1859 = vsub.f32 %v1562, %v1858
    %1860 = vmatpush1.xpose.msra.mxu0 %v1859
    %1861 = vmatprep.subr.mxu0 0.0
    %v1862 = vand.u32 %v1565, 4294901760
    %v1863 = vsub.f32 %v1565, %v1862
    %1864 = vmatpush1.xpose.msra.mxu0 %v1863
    %1865 = vmatprep.subr.mxu0 0.0
    %v1866 = vand.u32 %v1568, 4294901760
    %v1867 = vsub.f32 %v1568, %v1866
    %1868 = vmatpush1.xpose.msra.mxu0 %v1867
    %1869 = vmatprep.subr.mxu0 0.0
    %v1870 = vand.u32 %v1571, 4294901760
    %v1871 = vsub.f32 %v1571, %v1870
    %1872 = vmatpush1.xpose.msra.mxu0 %v1871
    %1873 = vmatprep.subr.mxu0 0.0
    %v1874 = vand.u32 %v1574, 4294901760
    %v1875 = vsub.f32 %v1574, %v1874
    %1876 = vmatpush1.xpose.msra.mxu0 %v1875
    %1877 = vmatprep.subr.mxu0 0.0
    %v1878 = vand.u32 %v1577, 4294901760
    %v1879 = vsub.f32 %v1577, %v1878
    %1880 = vmatpush1.xpose.msra.mxu0 %v1879
    %1881 = vmatprep.subr.mxu0 0.0
    %v1882 = vand.u32 %v1580, 4294901760
    %v1883 = vsub.f32 %v1580, %v1882
    %1884 = vmatpush1.xpose.msra.mxu0 %v1883
    %1885 = vmatprep.subr.mxu0 0.0
    %v1886 = vand.u32 %v1583, 4294901760
    %v1887 = vsub.f32 %v1583, %v1886
    %1888 = vmatpush1.xpose.msra.mxu0 %v1887
    %1889 = vmatprep.subr.mxu0 0.0
    %v1890 = vand.u32 %v1586, 4294901760
    %v1891 = vsub.f32 %v1586, %v1890
    %1892 = vmatpush1.xpose.msra.mxu0 %v1891
    %1893 = vmatprep.subr.mxu0 0.0
    %v1894 = vand.u32 %v1589, 4294901760
    %v1895 = vsub.f32 %v1589, %v1894
    %1896 = vmatpush1.xpose.msra.mxu0 %v1895
    %1897 = vmatprep.subr.mxu0 0.0
    %1898 = vmatpush1.xpose.msra.mxu0 0.0
    %1899 = vmatprep.subr.mxu0 0.0
    %1900 = vmatpush1.xpose.msra.mxu0 0.0
    %1901 = vmatprep.subr.mxu0 0.0
    %1902 = vmatpush1.xpose.msra.mxu0 0.0
    %1903 = vmatprep.subr.mxu0 0.0
    %1904 = vmatpush1.xpose.msra.mxu0 0.0
    %1905 = vmatprep.subr.mxu0 0.0
    %1906 = vmatpush1.xpose.msra.mxu0 0.0
    %1907 = vmatprep.subr.mxu0 0.0
    %1908 = vmatpush1.xpose.msra.mxu0 0.0
    %1909 = vmatprep.subr.mxu0 0.0
    %1910 = vmatpush1.xpose.msra.mxu0 0.0
    %1911 = vmatprep.subr.mxu0 0.0
    %1912 = vmatpush1.xpose.msra.mxu0 0.0
    %1913 = vmatprep.subr.mxu0 0.0
    %1914 = vmatpush1.xpose.msra.mxu0 0.0
    %1915 = vmatprep.subr.mxu0 0.0
    %1916 = vmatpush1.xpose.msra.mxu0 0.0
    %1917 = vmatprep.subr.mxu0 0.0
    %1918 = vmatpush1.xpose.msra.mxu0 0.0
    %1919 = vmatprep.subr.mxu0 0.0
    %1920 = vmatpush1.xpose.msra.mxu0 0.0
    %1921 = vmatprep.subr.mxu0 0.0
    %1922 = vmatpush1.xpose.msra.mxu0 0.0
    %1923 = vmatprep.subr.mxu0 0.0
    %1924 = vmatpush1.xpose.msra.mxu0 0.0
    %1925 = vmatprep.subr.mxu0 0.0
    %1926 = vmatpush1.xpose.msra.mxu0 0.0
    %1927 = vmatprep.subr.mxu0 0.0
    %1928 = vmatpush1.xpose.msra.mxu0 0.0
    %1929 = vmatprep.mubr.f32.mxu0 0.0
    %v1930 = vand.u32 %v1541, 4294901760
    %v1931 = vsub.f32 %v1541, %v1930
    %1932 = vmatmul.mubr.f32.gmra.mrb[0].mxu0 %v1931
    %v1933 = vpop.f32.mrb[0].mxu0
    %v1934 = vadd.f32 %v1830, %v1933
    %v1935 = vpop.f32.mrb[0].mxu0
    %1936 = vdwg.mxu0
    %1937 = vmatprep.subr.mxu0 0.0
    %v1938 = vand.u32 %v1544, 4294901760
    %1939 = vmatpush1.xpose.msra.mxu0 %v1938
    %1940 = vmatprep.subr.mxu0 0.0
    %v1941 = vand.u32 %v1547, 4294901760
    %1942 = vmatpush1.xpose.msra.mxu0 %v1941
    %1943 = vmatprep.subr.mxu0 0.0
    %v1944 = vand.u32 %v1550, 4294901760
    %1945 = vmatpush1.xpose.msra.mxu0 %v1944
    %1946 = vmatprep.subr.mxu0 0.0
    %v1947 = vand.u32 %v1553, 4294901760
    %1948 = vmatpush1.xpose.msra.mxu0 %v1947
    %1949 = vmatprep.subr.mxu0 0.0
    %v1950 = vand.u32 %v1556, 4294901760
    %1951 = vmatpush1.xpose.msra.mxu0 %v1950
    %1952 = vmatprep.subr.mxu0 0.0
    %v1953 = vand.u32 %v1559, 4294901760
    %1954 = vmatpush1.xpose.msra.mxu0 %v1953
    %1955 = vmatprep.subr.mxu0 0.0
    %v1956 = vand.u32 %v1562, 4294901760
    %1957 = vmatpush1.xpose.msra.mxu0 %v1956
    %1958 = vmatprep.subr.mxu0 0.0
    %v1959 = vand.u32 %v1565, 4294901760
    %1960 = vmatpush1.xpose.msra.mxu0 %v1959
    %1961 = vmatprep.subr.mxu0 0.0
    %v1962 = vand.u32 %v1568, 4294901760
    %1963 = vmatpush1.xpose.msra.mxu0 %v1962
    %1964 = vmatprep.subr.mxu0 0.0
    %v1965 = vand.u32 %v1571, 4294901760
    %1966 = vmatpush1.xpose.msra.mxu0 %v1965
    %1967 = vmatprep.subr.mxu0 0.0
    %v1968 = vand.u32 %v1574, 4294901760
    %1969 = vmatpush1.xpose.msra.mxu0 %v1968
    %1970 = vmatprep.subr.mxu0 0.0
    %v1971 = vand.u32 %v1577, 4294901760
    %1972 = vmatpush1.xpose.msra.mxu0 %v1971
    %1973 = vmatprep.subr.mxu0 0.0
    %v1974 = vand.u32 %v1580, 4294901760
    %1975 = vmatpush1.xpose.msra.mxu0 %v1974
    %1976 = vmatprep.subr.mxu0 0.0
    %v1977 = vand.u32 %v1583, 4294901760
    %1978 = vmatpush1.xpose.msra.mxu0 %v1977
    %1979 = vmatprep.subr.mxu0 0.0
    %v1980 = vand.u32 %v1586, 4294901760
    %1981 = vmatpush1.xpose.msra.mxu0 %v1980
    %1982 = vmatprep.subr.mxu0 0.0
    %v1983 = vand.u32 %v1589, 4294901760
    %1984 = vmatpush1.xpose.msra.mxu0 %v1983
    %1985 = vmatprep.subr.mxu0 0.0
    %1986 = vmatpush1.xpose.msra.mxu0 0.0
    %1987 = vmatprep.subr.mxu0 0.0
    %1988 = vmatpush1.xpose.msra.mxu0 0.0
    %1989 = vmatprep.subr.mxu0 0.0
    %1990 = vmatpush1.xpose.msra.mxu0 0.0
    %1991 = vmatprep.subr.mxu0 0.0
    %1992 = vmatpush1.xpose.msra.mxu0 0.0
    %1993 = vmatprep.subr.mxu0 0.0
    %1994 = vmatpush1.xpose.msra.mxu0 0.0
    %1995 = vmatprep.subr.mxu0 0.0
    %1996 = vmatpush1.xpose.msra.mxu0 0.0
    %1997 = vmatprep.subr.mxu0 0.0
    %1998 = vmatpush1.xpose.msra.mxu0 0.0
    %1999 = vmatprep.subr.mxu0 0.0
    %2000 = vmatpush1.xpose.msra.mxu0 0.0
    %2001 = vmatprep.subr.mxu0 0.0
    %2002 = vmatpush1.xpose.msra.mxu0 0.0
    %2003 = vmatprep.subr.mxu0 0.0
    %2004 = vmatpush1.xpose.msra.mxu0 0.0
    %2005 = vmatprep.subr.mxu0 0.0
    %2006 = vmatpush1.xpose.msra.mxu0 0.0
    %2007 = vmatprep.subr.mxu0 0.0
    %2008 = vmatpush1.xpose.msra.mxu0 0.0
    %2009 = vmatprep.subr.mxu0 0.0
    %2010 = vmatpush1.xpose.msra.mxu0 0.0
    %2011 = vmatprep.subr.mxu0 0.0
    %2012 = vmatpush1.xpose.msra.mxu0 0.0
    %2013 = vmatprep.subr.mxu0 0.0
    %2014 = vmatpush1.xpose.msra.mxu0 0.0
    %2015 = vmatprep.subr.mxu0 0.0
    %2016 = vmatpush1.xpose.msra.mxu0 0.0
    %2017 = vmatprep.mubr.f32.mxu0 0.0
    %v2018 = vand.u32 %v1541, 4294901760
    %v2019 = vsub.f32 %v1541, %v2018
    %v2020 = vand.u32 %v2019, 4294901760
    %2021 = vmatmul.mubr.f32.gmra.mrb[0].mxu0 %v2020
    %v2022 = vpop.f32.mrb[0].mxu0
    %v2023 = vadd.f32 %v1934, %v2022
    %v2024 = vpop.f32.mrb[0].mxu0
    %2025 = vdwg.mxu0
    %2026 = vmatprep.subr.mxu0 0.0
    %v2027 = vand.u32 %v1544, 4294901760
    %v2028 = vsub.f32 %v1544, %v2027
    %v2029 = vand.u32 %v2028, 4294901760
    %2030 = vmatpush1.xpose.msra.mxu0 %v2029
    %2031 = vmatprep.subr.mxu0 0.0
    %v2032 = vand.u32 %v1547, 4294901760
    %v2033 = vsub.f32 %v1547, %v2032
    %v2034 = vand.u32 %v2033, 4294901760
    %2035 = vmatpush1.xpose.msra.mxu0 %v2034
    %2036 = vmatprep.subr.mxu0 0.0
    %v2037 = vand.u32 %v1550, 4294901760
    %v2038 = vsub.f32 %v1550, %v2037
    %v2039 = vand.u32 %v2038, 4294901760
    %2040 = vmatpush1.xpose.msra.mxu0 %v2039
    %2041 = vmatprep.subr.mxu0 0.0
    %v2042 = vand.u32 %v1553, 4294901760
    %v2043 = vsub.f32 %v1553, %v2042
    %v2044 = vand.u32 %v2043, 4294901760
    %2045 = vmatpush1.xpose.msra.mxu0 %v2044
    %2046 = vmatprep.subr.mxu0 0.0
    %v2047 = vand.u32 %v1556, 4294901760
    %v2048 = vsub.f32 %v1556, %v2047
    %v2049 = vand.u32 %v2048, 4294901760
    %2050 = vmatpush1.xpose.msra.mxu0 %v2049
    %2051 = vmatprep.subr.mxu0 0.0
    %v2052 = vand.u32 %v1559, 4294901760
    %v2053 = vsub.f32 %v1559, %v2052
    %v2054 = vand.u32 %v2053, 4294901760
    %2055 = vmatpush1.xpose.msra.mxu0 %v2054
    %2056 = vmatprep.subr.mxu0 0.0
    %v2057 = vand.u32 %v1562, 4294901760
    %v2058 = vsub.f32 %v1562, %v2057
    %v2059 = vand.u32 %v2058, 4294901760
    %2060 = vmatpush1.xpose.msra.mxu0 %v2059
    %2061 = vmatprep.subr.mxu0 0.0
    %v2062 = vand.u32 %v1565, 4294901760
    %v2063 = vsub.f32 %v1565, %v2062
    %v2064 = vand.u32 %v2063, 4294901760
    %2065 = vmatpush1.xpose.msra.mxu0 %v2064
    %2066 = vmatprep.subr.mxu0 0.0
    %v2067 = vand.u32 %v1568, 4294901760
    %v2068 = vsub.f32 %v1568, %v2067
    %v2069 = vand.u32 %v2068, 4294901760
    %2070 = vmatpush1.xpose.msra.mxu0 %v2069
    %2071 = vmatprep.subr.mxu0 0.0
    %v2072 = vand.u32 %v1571, 4294901760
    %v2073 = vsub.f32 %v1571, %v2072
    %v2074 = vand.u32 %v2073, 4294901760
    %2075 = vmatpush1.xpose.msra.mxu0 %v2074
    %2076 = vmatprep.subr.mxu0 0.0
    %v2077 = vand.u32 %v1574, 4294901760
    %v2078 = vsub.f32 %v1574, %v2077
    %v2079 = vand.u32 %v2078, 4294901760
    %2080 = vmatpush1.xpose.msra.mxu0 %v2079
    %2081 = vmatprep.subr.mxu0 0.0
    %v2082 = vand.u32 %v1577, 4294901760
    %v2083 = vsub.f32 %v1577, %v2082
    %v2084 = vand.u32 %v2083, 4294901760
    %2085 = vmatpush1.xpose.msra.mxu0 %v2084
    %2086 = vmatprep.subr.mxu0 0.0
    %v2087 = vand.u32 %v1580, 4294901760
    %v2088 = vsub.f32 %v1580, %v2087
    %v2089 = vand.u32 %v2088, 4294901760
    %2090 = vmatpush1.xpose.msra.mxu0 %v2089
    %2091 = vmatprep.subr.mxu0 0.0
    %v2092 = vand.u32 %v1583, 4294901760
    %v2093 = vsub.f32 %v1583, %v2092
    %v2094 = vand.u32 %v2093, 4294901760
    %2095 = vmatpush1.xpose.msra.mxu0 %v2094
    %2096 = vmatprep.subr.mxu0 0.0
    %v2097 = vand.u32 %v1586, 4294901760
    %v2098 = vsub.f32 %v1586, %v2097
    %v2099 = vand.u32 %v2098, 4294901760
    %2100 = vmatpush1.xpose.msra.mxu0 %v2099
    %2101 = vmatprep.subr.mxu0 0.0
    %v2102 = vand.u32 %v1589, 4294901760
    %v2103 = vsub.f32 %v1589, %v2102
    %v2104 = vand.u32 %v2103, 4294901760
    %2105 = vmatpush1.xpose.msra.mxu0 %v2104
    %2106 = vmatprep.subr.mxu0 0.0
    %2107 = vmatpush1.xpose.msra.mxu0 0.0
    %2108 = vmatprep.subr.mxu0 0.0
    %2109 = vmatpush1.xpose.msra.mxu0 0.0
    %2110 = vmatprep.subr.mxu0 0.0
    %2111 = vmatpush1.xpose.msra.mxu0 0.0
    %2112 = vmatprep.subr.mxu0 0.0
    %2113 = vmatpush1.xpose.msra.mxu0 0.0
    %2114 = vmatprep.subr.mxu0 0.0
    %2115 = vmatpush1.xpose.msra.mxu0 0.0
    %2116 = vmatprep.subr.mxu0 0.0
    %2117 = vmatpush1.xpose.msra.mxu0 0.0
    %2118 = vmatprep.subr.mxu0 0.0
    %2119 = vmatpush1.xpose.msra.mxu0 0.0
    %2120 = vmatprep.subr.mxu0 0.0
    %2121 = vmatpush1.xpose.msra.mxu0 0.0
    %2122 = vmatprep.subr.mxu0 0.0
    %2123 = vmatpush1.xpose.msra.mxu0 0.0
    %2124 = vmatprep.subr.mxu0 0.0
    %2125 = vmatpush1.xpose.msra.mxu0 0.0
    %2126 = vmatprep.subr.mxu0 0.0
    %2127 = vmatpush1.xpose.msra.mxu0 0.0
    %2128 = vmatprep.subr.mxu0 0.0
    %2129 = vmatpush1.xpose.msra.mxu0 0.0
    %2130 = vmatprep.subr.mxu0 0.0
    %2131 = vmatpush1.xpose.msra.mxu0 0.0
    %2132 = vmatprep.subr.mxu0 0.0
    %2133 = vmatpush1.xpose.msra.mxu0 0.0
    %2134 = vmatprep.subr.mxu0 0.0
    %2135 = vmatpush1.xpose.msra.mxu0 0.0
    %2136 = vmatprep.subr.mxu0 0.0
    %2137 = vmatpush1.xpose.msra.mxu0 0.0
    %2138 = vmatprep.mubr.f32.mxu0 0.0
    %v2139 = vand.u32 %v1541, 4294901760
    %2140 = vmatmul.mubr.f32.gmra.mrb[0].mxu0 %v2139
    %v2141 = vpop.f32.mrb[0].mxu0
    %v2142 = vadd.f32 %v2023, %v2141
    %v2143 = vpop.f32.mrb[0].mxu0
    %2144 = vdwg.mxu0
    %2145 = vmatprep.subr.mxu0 0.0
    %v2146 = vand.u32 %v1544, 4294901760
    %2147 = vmatpush1.xpose.msra.mxu0 %v2146
    %2148 = vmatprep.subr.mxu0 0.0
    %v2149 = vand.u32 %v1547, 4294901760
    %2150 = vmatpush1.xpose.msra.mxu0 %v2149
    %2151 = vmatprep.subr.mxu0 0.0
    %v2152 = vand.u32 %v1550, 4294901760
    %2153 = vmatpush1.xpose.msra.mxu0 %v2152
    %2154 = vmatprep.subr.mxu0 0.0
    %v2155 = vand.u32 %v1553, 4294901760
    %2156 = vmatpush1.xpose.msra.mxu0 %v2155
    %2157 = vmatprep.subr.mxu0 0.0
    %v2158 = vand.u32 %v1556, 4294901760
    %2159 = vmatpush1.xpose.msra.mxu0 %v2158
    %2160 = vmatprep.subr.mxu0 0.0
    %v2161 = vand.u32 %v1559, 4294901760
    %2162 = vmatpush1.xpose.msra.mxu0 %v2161
    %2163 = vmatprep.subr.mxu0 0.0
    %v2164 = vand.u32 %v1562, 4294901760
    %2165 = vmatpush1.xpose.msra.mxu0 %v2164
    %2166 = vmatprep.subr.mxu0 0.0
    %v2167 = vand.u32 %v1565, 4294901760
    %2168 = vmatpush1.xpose.msra.mxu0 %v2167
    %2169 = vmatprep.subr.mxu0 0.0
    %v2170 = vand.u32 %v1568, 4294901760
    %2171 = vmatpush1.xpose.msra.mxu0 %v2170
    %2172 = vmatprep.subr.mxu0 0.0
    %v2173 = vand.u32 %v1571, 4294901760
    %2174 = vmatpush1.xpose.msra.mxu0 %v2173
    %2175 = vmatprep.subr.mxu0 0.0
    %v2176 = vand.u32 %v1574, 4294901760
    %2177 = vmatpush1.xpose.msra.mxu0 %v2176
    %2178 = vmatprep.subr.mxu0 0.0
    %v2179 = vand.u32 %v1577, 4294901760
    %2180 = vmatpush1.xpose.msra.mxu0 %v2179
    %2181 = vmatprep.subr.mxu0 0.0
    %v2182 = vand.u32 %v1580, 4294901760
    %2183 = vmatpush1.xpose.msra.mxu0 %v2182
    %2184 = vmatprep.subr.mxu0 0.0
    %v2185 = vand.u32 %v1583, 4294901760
    %2186 = vmatpush1.xpose.msra.mxu0 %v2185
    %2187 = vmatprep.subr.mxu0 0.0
    %v2188 = vand.u32 %v1586, 4294901760
    %2189 = vmatpush1.xpose.msra.mxu0 %v2188
    %2190 = vmatprep.subr.mxu0 0.0
    %v2191 = vand.u32 %v1589, 4294901760
    %2192 = vmatpush1.xpose.msra.mxu0 %v2191
    %2193 = vmatprep.subr.mxu0 0.0
    %2194 = vmatpush1.xpose.msra.mxu0 0.0
    %2195 = vmatprep.subr.mxu0 0.0
    %2196 = vmatpush1.xpose.msra.mxu0 0.0
    %2197 = vmatprep.subr.mxu0 0.0
    %2198 = vmatpush1.xpose.msra.mxu0 0.0
    %2199 = vmatprep.subr.mxu0 0.0
    %2200 = vmatpush1.xpose.msra.mxu0 0.0
    %2201 = vmatprep.subr.mxu0 0.0
    %2202 = vmatpush1.xpose.msra.mxu0 0.0
    %2203 = vmatprep.subr.mxu0 0.0
    %2204 = vmatpush1.xpose.msra.mxu0 0.0
    %2205 = vmatprep.subr.mxu0 0.0
    %2206 = vmatpush1.xpose.msra.mxu0 0.0
    %2207 = vmatprep.subr.mxu0 0.0
    %2208 = vmatpush1.xpose.msra.mxu0 0.0
    %2209 = vmatprep.subr.mxu0 0.0
    %2210 = vmatpush1.xpose.msra.mxu0 0.0
    %2211 = vmatprep.subr.mxu0 0.0
    %2212 = vmatpush1.xpose.msra.mxu0 0.0
    %2213 = vmatprep.subr.mxu0 0.0
    %2214 = vmatpush1.xpose.msra.mxu0 0.0
    %2215 = vmatprep.subr.mxu0 0.0
    %2216 = vmatpush1.xpose.msra.mxu0 0.0
    %2217 = vmatprep.subr.mxu0 0.0
    %2218 = vmatpush1.xpose.msra.mxu0 0.0
    %2219 = vmatprep.subr.mxu0 0.0
    %2220 = vmatpush1.xpose.msra.mxu0 0.0
    %2221 = vmatprep.subr.mxu0 0.0
    %2222 = vmatpush1.xpose.msra.mxu0 0.0
    %2223 = vmatprep.subr.mxu0 0.0
    %2224 = vmatpush1.xpose.msra.mxu0 0.0
    %2225 = vmatprep.mubr.f32.mxu0 0.0
    %v2226 = vand.u32 %v1541, 4294901760
    %2227 = vmatmul.mubr.f32.gmra.mrb[0].mxu0 %v2226
    %v2228 = vpop.f32.mrb[0].mxu0
    %v2229 = vadd.f32 %v2142, %v2228
    %v2230 = vpop.f32.mrb[0].mxu0
    %2231 = vdwg.mxu0
    %v2233 = vsel %vm155, %v150, 0
    %v2236 = vsel %vm155, %v67, 0
    %v2239 = vsel %vm155, %v68, 0
    %v2242 = vsel %vm155, %v69, 0
    %v2245 = vsel %vm155, %v70, 0
    %v2248 = vsel %vm155, %v71, 0
    %v2251 = vsel %vm155, %v72, 0
    %v2254 = vsel %vm155, %v73, 0
    %v2257 = vsel %vm155, %v74, 0
    %v2260 = vsel %vm155, %v75, 0
    %v2263 = vsel %vm155, %v76, 0
    %v2266 = vsel %vm155, %v77, 0
    %v2269 = vsel %vm155, %v78, 0
    %v2272 = vsel %vm155, %v79, 0
    %v2275 = vsel %vm155, %v80, 0
    %v2278 = vsel %vm155, %v81, 0
    %v2281 = vsel %vm155, %v82, 0
    %2283 = vmatprep.subr.mxu0 0.0
    %v2284 = vand.u32 %v2236, 4294901760
    %2285 = vmatpush1.xpose.msra.mxu0 %v2284
    %2286 = vmatprep.subr.mxu0 0.0
    %v2287 = vand.u32 %v2239, 4294901760
    %2288 = vmatpush1.xpose.msra.mxu0 %v2287
    %2289 = vmatprep.subr.mxu0 0.0
    %v2290 = vand.u32 %v2242, 4294901760
    %2291 = vmatpush1.xpose.msra.mxu0 %v2290
    %2292 = vmatprep.subr.mxu0 0.0
    %v2293 = vand.u32 %v2245, 4294901760
    %2294 = vmatpush1.xpose.msra.mxu0 %v2293
    %2295 = vmatprep.subr.mxu0 0.0
    %v2296 = vand.u32 %v2248, 4294901760
    %2297 = vmatpush1.xpose.msra.mxu0 %v2296
    %2298 = vmatprep.subr.mxu0 0.0
    %v2299 = vand.u32 %v2251, 4294901760
    %2300 = vmatpush1.xpose.msra.mxu0 %v2299
    %2301 = vmatprep.subr.mxu0 0.0
    %v2302 = vand.u32 %v2254, 4294901760
    %2303 = vmatpush1.xpose.msra.mxu0 %v2302
    %2304 = vmatprep.subr.mxu0 0.0
    %v2305 = vand.u32 %v2257, 4294901760
    %2306 = vmatpush1.xpose.msra.mxu0 %v2305
    %2307 = vmatprep.subr.mxu0 0.0
    %v2308 = vand.u32 %v2260, 4294901760
    %2309 = vmatpush1.xpose.msra.mxu0 %v2308
    %2310 = vmatprep.subr.mxu0 0.0
    %v2311 = vand.u32 %v2263, 4294901760
    %2312 = vmatpush1.xpose.msra.mxu0 %v2311
    %2313 = vmatprep.subr.mxu0 0.0
    %v2314 = vand.u32 %v2266, 4294901760
    %2315 = vmatpush1.xpose.msra.mxu0 %v2314
    %2316 = vmatprep.subr.mxu0 0.0
    %v2317 = vand.u32 %v2269, 4294901760
    %2318 = vmatpush1.xpose.msra.mxu0 %v2317
    %2319 = vmatprep.subr.mxu0 0.0
    %v2320 = vand.u32 %v2272, 4294901760
    %2321 = vmatpush1.xpose.msra.mxu0 %v2320
    %2322 = vmatprep.subr.mxu0 0.0
    %v2323 = vand.u32 %v2275, 4294901760
    %2324 = vmatpush1.xpose.msra.mxu0 %v2323
    %2325 = vmatprep.subr.mxu0 0.0
    %v2326 = vand.u32 %v2278, 4294901760
    %2327 = vmatpush1.xpose.msra.mxu0 %v2326
    %2328 = vmatprep.subr.mxu0 0.0
    %v2329 = vand.u32 %v2281, 4294901760
    %2330 = vmatpush1.xpose.msra.mxu0 %v2329
    %2331 = vmatprep.subr.mxu0 0.0
    %2332 = vmatpush1.xpose.msra.mxu0 0.0
    %2333 = vmatprep.subr.mxu0 0.0
    %2334 = vmatpush1.xpose.msra.mxu0 0.0
    %2335 = vmatprep.subr.mxu0 0.0
    %2336 = vmatpush1.xpose.msra.mxu0 0.0
    %2337 = vmatprep.subr.mxu0 0.0
    %2338 = vmatpush1.xpose.msra.mxu0 0.0
    %2339 = vmatprep.subr.mxu0 0.0
    %2340 = vmatpush1.xpose.msra.mxu0 0.0
    %2341 = vmatprep.subr.mxu0 0.0
    %2342 = vmatpush1.xpose.msra.mxu0 0.0
    %2343 = vmatprep.subr.mxu0 0.0
    %2344 = vmatpush1.xpose.msra.mxu0 0.0
    %2345 = vmatprep.subr.mxu0 0.0
    %2346 = vmatpush1.xpose.msra.mxu0 0.0
    %2347 = vmatprep.subr.mxu0 0.0
    %2348 = vmatpush1.xpose.msra.mxu0 0.0
    %2349 = vmatprep.subr.mxu0 0.0
    %2350 = vmatpush1.xpose.msra.mxu0 0.0
    %2351 = vmatprep.subr.mxu0 0.0
    %2352 = vmatpush1.xpose.msra.mxu0 0.0
    %2353 = vmatprep.subr.mxu0 0.0
    %2354 = vmatpush1.xpose.msra.mxu0 0.0
    %2355 = vmatprep.subr.mxu0 0.0
    %2356 = vmatpush1.xpose.msra.mxu0 0.0
    %2357 = vmatprep.subr.mxu0 0.0
    %2358 = vmatpush1.xpose.msra.mxu0 0.0
    %2359 = vmatprep.subr.mxu0 0.0
    %2360 = vmatpush1.xpose.msra.mxu0 0.0
    %2361 = vmatprep.subr.mxu0 0.0
    %2362 = vmatpush1.xpose.msra.mxu0 0.0
    %2363 = vmatprep.mubr.f32.mxu0 0.0
    %v2364 = vand.u32 %v2233, 4294901760
    %v2365 = vsub.f32 %v2233, %v2364
    %v2366 = vand.u32 %v2365, 4294901760
    %v2367 = vsub.f32 %v2365, %v2366
    %v2368 = vand.u32 %v2367, 4294901760
    %2369 = vmatmul.mubr.f32.gmra.mrb[0].mxu0 %v2368
    %v2370 = vpop.f32.mrb[0].mxu0
    %v2371 = vadd.f32 0.0, %v2370
    %v2372 = vpop.f32.mrb[0].mxu0
    %2373 = vdwg.mxu0
    %2374 = vmatprep.subr.mxu0 0.0
    %v2375 = vand.u32 %v2236, 4294901760
    %v2376 = vsub.f32 %v2236, %v2375
    %v2377 = vand.u32 %v2376, 4294901760
    %v2378 = vsub.f32 %v2376, %v2377
    %v2379 = vand.u32 %v2378, 4294901760
    %2380 = vmatpush1.xpose.msra.mxu0 %v2379
    %2381 = vmatprep.subr.mxu0 0.0
    %v2382 = vand.u32 %v2239, 4294901760
    %v2383 = vsub.f32 %v2239, %v2382
    %v2384 = vand.u32 %v2383, 4294901760
    %v2385 = vsub.f32 %v2383, %v2384
    %v2386 = vand.u32 %v2385, 4294901760
    %2387 = vmatpush1.xpose.msra.mxu0 %v2386
    %2388 = vmatprep.subr.mxu0 0.0
    %v2389 = vand.u32 %v2242, 4294901760
    %v2390 = vsub.f32 %v2242, %v2389
    %v2391 = vand.u32 %v2390, 4294901760
    %v2392 = vsub.f32 %v2390, %v2391
    %v2393 = vand.u32 %v2392, 4294901760
    %2394 = vmatpush1.xpose.msra.mxu0 %v2393
    %2395 = vmatprep.subr.mxu0 0.0
    %v2396 = vand.u32 %v2245, 4294901760
    %v2397 = vsub.f32 %v2245, %v2396
    %v2398 = vand.u32 %v2397, 4294901760
    %v2399 = vsub.f32 %v2397, %v2398
    %v2400 = vand.u32 %v2399, 4294901760
    %2401 = vmatpush1.xpose.msra.mxu0 %v2400
    %2402 = vmatprep.subr.mxu0 0.0
    %v2403 = vand.u32 %v2248, 4294901760
    %v2404 = vsub.f32 %v2248, %v2403
    %v2405 = vand.u32 %v2404, 4294901760
    %v2406 = vsub.f32 %v2404, %v2405
    %v2407 = vand.u32 %v2406, 4294901760
    %2408 = vmatpush1.xpose.msra.mxu0 %v2407
    %2409 = vmatprep.subr.mxu0 0.0
    %v2410 = vand.u32 %v2251, 4294901760
    %v2411 = vsub.f32 %v2251, %v2410
    %v2412 = vand.u32 %v2411, 4294901760
    %v2413 = vsub.f32 %v2411, %v2412
    %v2414 = vand.u32 %v2413, 4294901760
    %2415 = vmatpush1.xpose.msra.mxu0 %v2414
    %2416 = vmatprep.subr.mxu0 0.0
    %v2417 = vand.u32 %v2254, 4294901760
    %v2418 = vsub.f32 %v2254, %v2417
    %v2419 = vand.u32 %v2418, 4294901760
    %v2420 = vsub.f32 %v2418, %v2419
    %v2421 = vand.u32 %v2420, 4294901760
    %2422 = vmatpush1.xpose.msra.mxu0 %v2421
    %2423 = vmatprep.subr.mxu0 0.0
    %v2424 = vand.u32 %v2257, 4294901760
    %v2425 = vsub.f32 %v2257, %v2424
    %v2426 = vand.u32 %v2425, 4294901760
    %v2427 = vsub.f32 %v2425, %v2426
    %v2428 = vand.u32 %v2427, 4294901760
    %2429 = vmatpush1.xpose.msra.mxu0 %v2428
    %2430 = vmatprep.subr.mxu0 0.0
    %v2431 = vand.u32 %v2260, 4294901760
    %v2432 = vsub.f32 %v2260, %v2431
    %v2433 = vand.u32 %v2432, 4294901760
    %v2434 = vsub.f32 %v2432, %v2433
    %v2435 = vand.u32 %v2434, 4294901760
    %2436 = vmatpush1.xpose.msra.mxu0 %v2435
    %2437 = vmatprep.subr.mxu0 0.0
    %v2438 = vand.u32 %v2263, 4294901760
    %v2439 = vsub.f32 %v2263, %v2438
    %v2440 = vand.u32 %v2439, 4294901760
    %v2441 = vsub.f32 %v2439, %v2440
    %v2442 = vand.u32 %v2441, 4294901760
    %2443 = vmatpush1.xpose.msra.mxu0 %v2442
    %2444 = vmatprep.subr.mxu0 0.0
    %v2445 = vand.u32 %v2266, 4294901760
    %v2446 = vsub.f32 %v2266, %v2445
    %v2447 = vand.u32 %v2446, 4294901760
    %v2448 = vsub.f32 %v2446, %v2447
    %v2449 = vand.u32 %v2448, 4294901760
    %2450 = vmatpush1.xpose.msra.mxu0 %v2449
    %2451 = vmatprep.subr.mxu0 0.0
    %v2452 = vand.u32 %v2269, 4294901760
    %v2453 = vsub.f32 %v2269, %v2452
    %v2454 = vand.u32 %v2453, 4294901760
    %v2455 = vsub.f32 %v2453, %v2454
    %v2456 = vand.u32 %v2455, 4294901760
    %2457 = vmatpush1.xpose.msra.mxu0 %v2456
    %2458 = vmatprep.subr.mxu0 0.0
    %v2459 = vand.u32 %v2272, 4294901760
    %v2460 = vsub.f32 %v2272, %v2459
    %v2461 = vand.u32 %v2460, 4294901760
    %v2462 = vsub.f32 %v2460, %v2461
    %v2463 = vand.u32 %v2462, 4294901760
    %2464 = vmatpush1.xpose.msra.mxu0 %v2463
    %2465 = vmatprep.subr.mxu0 0.0
    %v2466 = vand.u32 %v2275, 4294901760
    %v2467 = vsub.f32 %v2275, %v2466
    %v2468 = vand.u32 %v2467, 4294901760
    %v2469 = vsub.f32 %v2467, %v2468
    %v2470 = vand.u32 %v2469, 4294901760
    %2471 = vmatpush1.xpose.msra.mxu0 %v2470
    %2472 = vmatprep.subr.mxu0 0.0
    %v2473 = vand.u32 %v2278, 4294901760
    %v2474 = vsub.f32 %v2278, %v2473
    %v2475 = vand.u32 %v2474, 4294901760
    %v2476 = vsub.f32 %v2474, %v2475
    %v2477 = vand.u32 %v2476, 4294901760
    %2478 = vmatpush1.xpose.msra.mxu0 %v2477
    %2479 = vmatprep.subr.mxu0 0.0
    %v2480 = vand.u32 %v2281, 4294901760
    %v2481 = vsub.f32 %v2281, %v2480
    %v2482 = vand.u32 %v2481, 4294901760
    %v2483 = vsub.f32 %v2481, %v2482
    %v2484 = vand.u32 %v2483, 4294901760
    %2485 = vmatpush1.xpose.msra.mxu0 %v2484
    %2486 = vmatprep.subr.mxu0 0.0
    %2487 = vmatpush1.xpose.msra.mxu0 0.0
    %2488 = vmatprep.subr.mxu0 0.0
    %2489 = vmatpush1.xpose.msra.mxu0 0.0
    %2490 = vmatprep.subr.mxu0 0.0
    %2491 = vmatpush1.xpose.msra.mxu0 0.0
    %2492 = vmatprep.subr.mxu0 0.0
    %2493 = vmatpush1.xpose.msra.mxu0 0.0
    %2494 = vmatprep.subr.mxu0 0.0
    %2495 = vmatpush1.xpose.msra.mxu0 0.0
    %2496 = vmatprep.subr.mxu0 0.0
    %2497 = vmatpush1.xpose.msra.mxu0 0.0
    %2498 = vmatprep.subr.mxu0 0.0
    %2499 = vmatpush1.xpose.msra.mxu0 0.0
    %2500 = vmatprep.subr.mxu0 0.0
    %2501 = vmatpush1.xpose.msra.mxu0 0.0
    %2502 = vmatprep.subr.mxu0 0.0
    %2503 = vmatpush1.xpose.msra.mxu0 0.0
    %2504 = vmatprep.subr.mxu0 0.0
    %2505 = vmatpush1.xpose.msra.mxu0 0.0
    %2506 = vmatprep.subr.mxu0 0.0
    %2507 = vmatpush1.xpose.msra.mxu0 0.0
    %2508 = vmatprep.subr.mxu0 0.0
    %2509 = vmatpush1.xpose.msra.mxu0 0.0
    %2510 = vmatprep.subr.mxu0 0.0
    %2511 = vmatpush1.xpose.msra.mxu0 0.0
    %2512 = vmatprep.subr.mxu0 0.0
    %2513 = vmatpush1.xpose.msra.mxu0 0.0
    %2514 = vmatprep.subr.mxu0 0.0
    %2515 = vmatpush1.xpose.msra.mxu0 0.0
    %2516 = vmatprep.subr.mxu0 0.0
    %2517 = vmatpush1.xpose.msra.mxu0 0.0
    %2518 = vmatprep.mubr.f32.mxu0 0.0
    %v2519 = vand.u32 %v2233, 4294901760
    %2520 = vmatmul.mubr.f32.gmra.mrb[0].mxu0 %v2519
    %v2521 = vpop.f32.mrb[0].mxu0
    %v2522 = vadd.f32 %v2371, %v2521
    %v2523 = vpop.f32.mrb[0].mxu0
    %2524 = vdwg.mxu0
    %2525 = vmatprep.subr.mxu0 0.0
    %v2526 = vand.u32 %v2236, 4294901760
    %v2527 = vsub.f32 %v2236, %v2526
    %2528 = vmatpush1.xpose.msra.mxu0 %v2527
    %2529 = vmatprep.subr.mxu0 0.0
    %v2530 = vand.u32 %v2239, 4294901760
    %v2531 = vsub.f32 %v2239, %v2530
    %2532 = vmatpush1.xpose.msra.mxu0 %v2531
    %2533 = vmatprep.subr.mxu0 0.0
    %v2534 = vand.u32 %v2242, 4294901760
    %v2535 = vsub.f32 %v2242, %v2534
    %2536 = vmatpush1.xpose.msra.mxu0 %v2535
    %2537 = vmatprep.subr.mxu0 0.0
    %v2538 = vand.u32 %v2245, 4294901760
    %v2539 = vsub.f32 %v2245, %v2538
    %2540 = vmatpush1.xpose.msra.mxu0 %v2539
    %2541 = vmatprep.subr.mxu0 0.0
    %v2542 = vand.u32 %v2248, 4294901760
    %v2543 = vsub.f32 %v2248, %v2542
    %2544 = vmatpush1.xpose.msra.mxu0 %v2543
    %2545 = vmatprep.subr.mxu0 0.0
    %v2546 = vand.u32 %v2251, 4294901760
    %v2547 = vsub.f32 %v2251, %v2546
    %2548 = vmatpush1.xpose.msra.mxu0 %v2547
    %2549 = vmatprep.subr.mxu0 0.0
    %v2550 = vand.u32 %v2254, 4294901760
    %v2551 = vsub.f32 %v2254, %v2550
    %2552 = vmatpush1.xpose.msra.mxu0 %v2551
    %2553 = vmatprep.subr.mxu0 0.0
    %v2554 = vand.u32 %v2257, 4294901760
    %v2555 = vsub.f32 %v2257, %v2554
    %2556 = vmatpush1.xpose.msra.mxu0 %v2555
    %2557 = vmatprep.subr.mxu0 0.0
    %v2558 = vand.u32 %v2260, 4294901760
    %v2559 = vsub.f32 %v2260, %v2558
    %2560 = vmatpush1.xpose.msra.mxu0 %v2559
    %2561 = vmatprep.subr.mxu0 0.0
    %v2562 = vand.u32 %v2263, 4294901760
    %v2563 = vsub.f32 %v2263, %v2562
    %2564 = vmatpush1.xpose.msra.mxu0 %v2563
    %2565 = vmatprep.subr.mxu0 0.0
    %v2566 = vand.u32 %v2266, 4294901760
    %v2567 = vsub.f32 %v2266, %v2566
    %2568 = vmatpush1.xpose.msra.mxu0 %v2567
    %2569 = vmatprep.subr.mxu0 0.0
    %v2570 = vand.u32 %v2269, 4294901760
    %v2571 = vsub.f32 %v2269, %v2570
    %2572 = vmatpush1.xpose.msra.mxu0 %v2571
    %2573 = vmatprep.subr.mxu0 0.0
    %v2574 = vand.u32 %v2272, 4294901760
    %v2575 = vsub.f32 %v2272, %v2574
    %2576 = vmatpush1.xpose.msra.mxu0 %v2575
    %2577 = vmatprep.subr.mxu0 0.0
    %v2578 = vand.u32 %v2275, 4294901760
    %v2579 = vsub.f32 %v2275, %v2578
    %2580 = vmatpush1.xpose.msra.mxu0 %v2579
    %2581 = vmatprep.subr.mxu0 0.0
    %v2582 = vand.u32 %v2278, 4294901760
    %v2583 = vsub.f32 %v2278, %v2582
    %2584 = vmatpush1.xpose.msra.mxu0 %v2583
    %2585 = vmatprep.subr.mxu0 0.0
    %v2586 = vand.u32 %v2281, 4294901760
    %v2587 = vsub.f32 %v2281, %v2586
    %2588 = vmatpush1.xpose.msra.mxu0 %v2587
    %2589 = vmatprep.subr.mxu0 0.0
    %2590 = vmatpush1.xpose.msra.mxu0 0.0
    %2591 = vmatprep.subr.mxu0 0.0
    %2592 = vmatpush1.xpose.msra.mxu0 0.0
    %2593 = vmatprep.subr.mxu0 0.0
    %2594 = vmatpush1.xpose.msra.mxu0 0.0
    %2595 = vmatprep.subr.mxu0 0.0
    %2596 = vmatpush1.xpose.msra.mxu0 0.0
    %2597 = vmatprep.subr.mxu0 0.0
    %2598 = vmatpush1.xpose.msra.mxu0 0.0
    %2599 = vmatprep.subr.mxu0 0.0
    %2600 = vmatpush1.xpose.msra.mxu0 0.0
    %2601 = vmatprep.subr.mxu0 0.0
    %2602 = vmatpush1.xpose.msra.mxu0 0.0
    %2603 = vmatprep.subr.mxu0 0.0
    %2604 = vmatpush1.xpose.msra.mxu0 0.0
    %2605 = vmatprep.subr.mxu0 0.0
    %2606 = vmatpush1.xpose.msra.mxu0 0.0
    %2607 = vmatprep.subr.mxu0 0.0
    %2608 = vmatpush1.xpose.msra.mxu0 0.0
    %2609 = vmatprep.subr.mxu0 0.0
    %2610 = vmatpush1.xpose.msra.mxu0 0.0
    %2611 = vmatprep.subr.mxu0 0.0
    %2612 = vmatpush1.xpose.msra.mxu0 0.0
    %2613 = vmatprep.subr.mxu0 0.0
    %2614 = vmatpush1.xpose.msra.mxu0 0.0
    %2615 = vmatprep.subr.mxu0 0.0
    %2616 = vmatpush1.xpose.msra.mxu0 0.0
    %2617 = vmatprep.subr.mxu0 0.0
    %2618 = vmatpush1.xpose.msra.mxu0 0.0
    %2619 = vmatprep.subr.mxu0 0.0
    %2620 = vmatpush1.xpose.msra.mxu0 0.0
    %2621 = vmatprep.mubr.f32.mxu0 0.0
    %v2622 = vand.u32 %v2233, 4294901760
    %v2623 = vsub.f32 %v2233, %v2622
    %2624 = vmatmul.mubr.f32.gmra.mrb[0].mxu0 %v2623
    %v2625 = vpop.f32.mrb[0].mxu0
    %v2626 = vadd.f32 %v2522, %v2625
    %v2627 = vpop.f32.mrb[0].mxu0
    %2628 = vdwg.mxu0
    %2629 = vmatprep.subr.mxu0 0.0
    %v2630 = vand.u32 %v2236, 4294901760
    %2631 = vmatpush1.xpose.msra.mxu0 %v2630
    %2632 = vmatprep.subr.mxu0 0.0
    %v2633 = vand.u32 %v2239, 4294901760
    %2634 = vmatpush1.xpose.msra.mxu0 %v2633
    %2635 = vmatprep.subr.mxu0 0.0
    %v2636 = vand.u32 %v2242, 4294901760
    %2637 = vmatpush1.xpose.msra.mxu0 %v2636
    %2638 = vmatprep.subr.mxu0 0.0
    %v2639 = vand.u32 %v2245, 4294901760
    %2640 = vmatpush1.xpose.msra.mxu0 %v2639
    %2641 = vmatprep.subr.mxu0 0.0
    %v2642 = vand.u32 %v2248, 4294901760
    %2643 = vmatpush1.xpose.msra.mxu0 %v2642
    %2644 = vmatprep.subr.mxu0 0.0
    %v2645 = vand.u32 %v2251, 4294901760
    %2646 = vmatpush1.xpose.msra.mxu0 %v2645
    %2647 = vmatprep.subr.mxu0 0.0
    %v2648 = vand.u32 %v2254, 4294901760
    %2649 = vmatpush1.xpose.msra.mxu0 %v2648
    %2650 = vmatprep.subr.mxu0 0.0
    %v2651 = vand.u32 %v2257, 4294901760
    %2652 = vmatpush1.xpose.msra.mxu0 %v2651
    %2653 = vmatprep.subr.mxu0 0.0
    %v2654 = vand.u32 %v2260, 4294901760
    %2655 = vmatpush1.xpose.msra.mxu0 %v2654
    %2656 = vmatprep.subr.mxu0 0.0
    %v2657 = vand.u32 %v2263, 4294901760
    %2658 = vmatpush1.xpose.msra.mxu0 %v2657
    %2659 = vmatprep.subr.mxu0 0.0
    %v2660 = vand.u32 %v2266, 4294901760
    %2661 = vmatpush1.xpose.msra.mxu0 %v2660
    %2662 = vmatprep.subr.mxu0 0.0
    %v2663 = vand.u32 %v2269, 4294901760
    %2664 = vmatpush1.xpose.msra.mxu0 %v2663
    %2665 = vmatprep.subr.mxu0 0.0
    %v2666 = vand.u32 %v2272, 4294901760
    %2667 = vmatpush1.xpose.msra.mxu0 %v2666
    %2668 = vmatprep.subr.mxu0 0.0
    %v2669 = vand.u32 %v2275, 4294901760
    %2670 = vmatpush1.xpose.msra.mxu0 %v2669
    %2671 = vmatprep.subr.mxu0 0.0
    %v2672 = vand.u32 %v2278, 4294901760
    %2673 = vmatpush1.xpose.msra.mxu0 %v2672
    %2674 = vmatprep.subr.mxu0 0.0
    %v2675 = vand.u32 %v2281, 4294901760
    %2676 = vmatpush1.xpose.msra.mxu0 %v2675
    %2677 = vmatprep.subr.mxu0 0.0
    %2678 = vmatpush1.xpose.msra.mxu0 0.0
    %2679 = vmatprep.subr.mxu0 0.0
    %2680 = vmatpush1.xpose.msra.mxu0 0.0
    %2681 = vmatprep.subr.mxu0 0.0
    %2682 = vmatpush1.xpose.msra.mxu0 0.0
    %2683 = vmatprep.subr.mxu0 0.0
    %2684 = vmatpush1.xpose.msra.mxu0 0.0
    %2685 = vmatprep.subr.mxu0 0.0
    %2686 = vmatpush1.xpose.msra.mxu0 0.0
    %2687 = vmatprep.subr.mxu0 0.0
    %2688 = vmatpush1.xpose.msra.mxu0 0.0
    %2689 = vmatprep.subr.mxu0 0.0
    %2690 = vmatpush1.xpose.msra.mxu0 0.0
    %2691 = vmatprep.subr.mxu0 0.0
    %2692 = vmatpush1.xpose.msra.mxu0 0.0
    %2693 = vmatprep.subr.mxu0 0.0
    %2694 = vmatpush1.xpose.msra.mxu0 0.0
    %2695 = vmatprep.subr.mxu0 0.0
    %2696 = vmatpush1.xpose.msra.mxu0 0.0
    %2697 = vmatprep.subr.mxu0 0.0
    %2698 = vmatpush1.xpose.msra.mxu0 0.0
    %2699 = vmatprep.subr.mxu0 0.0
    %2700 = vmatpush1.xpose.msra.mxu0 0.0
    %2701 = vmatprep.subr.mxu0 0.0
    %2702 = vmatpush1.xpose.msra.mxu0 0.0
    %2703 = vmatprep.subr.mxu0 0.0
    %2704 = vmatpush1.xpose.msra.mxu0 0.0
    %2705 = vmatprep.subr.mxu0 0.0
    %2706 = vmatpush1.xpose.msra.mxu0 0.0
    %2707 = vmatprep.subr.mxu0 0.0
    %2708 = vmatpush1.xpose.msra.mxu0 0.0
    %2709 = vmatprep.mubr.f32.mxu0 0.0
    %v2710 = vand.u32 %v2233, 4294901760
    %v2711 = vsub.f32 %v2233, %v2710
    %v2712 = vand.u32 %v2711, 4294901760
    %2713 = vmatmul.mubr.f32.gmra.mrb[0].mxu0 %v2712
    %v2714 = vpop.f32.mrb[0].mxu0
    %v2715 = vadd.f32 %v2626, %v2714
    %v2716 = vpop.f32.mrb[0].mxu0
    %2717 = vdwg.mxu0
    %2718 = vmatprep.subr.mxu0 0.0
    %v2719 = vand.u32 %v2236, 4294901760
    %v2720 = vsub.f32 %v2236, %v2719
    %v2721 = vand.u32 %v2720, 4294901760
    %2722 = vmatpush1.xpose.msra.mxu0 %v2721
    %2723 = vmatprep.subr.mxu0 0.0
    %v2724 = vand.u32 %v2239, 4294901760
    %v2725 = vsub.f32 %v2239, %v2724
    %v2726 = vand.u32 %v2725, 4294901760
    %2727 = vmatpush1.xpose.msra.mxu0 %v2726
    %2728 = vmatprep.subr.mxu0 0.0
    %v2729 = vand.u32 %v2242, 4294901760
    %v2730 = vsub.f32 %v2242, %v2729
    %v2731 = vand.u32 %v2730, 4294901760
    %2732 = vmatpush1.xpose.msra.mxu0 %v2731
    %2733 = vmatprep.subr.mxu0 0.0
    %v2734 = vand.u32 %v2245, 4294901760
    %v2735 = vsub.f32 %v2245, %v2734
    %v2736 = vand.u32 %v2735, 4294901760
    %2737 = vmatpush1.xpose.msra.mxu0 %v2736
    %2738 = vmatprep.subr.mxu0 0.0
    %v2739 = vand.u32 %v2248, 4294901760
    %v2740 = vsub.f32 %v2248, %v2739
    %v2741 = vand.u32 %v2740, 4294901760
    %2742 = vmatpush1.xpose.msra.mxu0 %v2741
    %2743 = vmatprep.subr.mxu0 0.0
    %v2744 = vand.u32 %v2251, 4294901760
    %v2745 = vsub.f32 %v2251, %v2744
    %v2746 = vand.u32 %v2745, 4294901760
    %2747 = vmatpush1.xpose.msra.mxu0 %v2746
    %2748 = vmatprep.subr.mxu0 0.0
    %v2749 = vand.u32 %v2254, 4294901760
    %v2750 = vsub.f32 %v2254, %v2749
    %v2751 = vand.u32 %v2750, 4294901760
    %2752 = vmatpush1.xpose.msra.mxu0 %v2751
    %2753 = vmatprep.subr.mxu0 0.0
    %v2754 = vand.u32 %v2257, 4294901760
    %v2755 = vsub.f32 %v2257, %v2754
    %v2756 = vand.u32 %v2755, 4294901760
    %2757 = vmatpush1.xpose.msra.mxu0 %v2756
    %2758 = vmatprep.subr.mxu0 0.0
    %v2759 = vand.u32 %v2260, 4294901760
    %v2760 = vsub.f32 %v2260, %v2759
    %v2761 = vand.u32 %v2760, 4294901760
    %2762 = vmatpush1.xpose.msra.mxu0 %v2761
    %2763 = vmatprep.subr.mxu0 0.0
    %v2764 = vand.u32 %v2263, 4294901760
    %v2765 = vsub.f32 %v2263, %v2764
    %v2766 = vand.u32 %v2765, 4294901760
    %2767 = vmatpush1.xpose.msra.mxu0 %v2766
    %2768 = vmatprep.subr.mxu0 0.0
    %v2769 = vand.u32 %v2266, 4294901760
    %v2770 = vsub.f32 %v2266, %v2769
    %v2771 = vand.u32 %v2770, 4294901760
    %2772 = vmatpush1.xpose.msra.mxu0 %v2771
    %2773 = vmatprep.subr.mxu0 0.0
    %v2774 = vand.u32 %v2269, 4294901760
    %v2775 = vsub.f32 %v2269, %v2774
    %v2776 = vand.u32 %v2775, 4294901760
    %2777 = vmatpush1.xpose.msra.mxu0 %v2776
    %2778 = vmatprep.subr.mxu0 0.0
    %v2779 = vand.u32 %v2272, 4294901760
    %v2780 = vsub.f32 %v2272, %v2779
    %v2781 = vand.u32 %v2780, 4294901760
    %2782 = vmatpush1.xpose.msra.mxu0 %v2781
    %2783 = vmatprep.subr.mxu0 0.0
    %v2784 = vand.u32 %v2275, 4294901760
    %v2785 = vsub.f32 %v2275, %v2784
    %v2786 = vand.u32 %v2785, 4294901760
    %2787 = vmatpush1.xpose.msra.mxu0 %v2786
    %2788 = vmatprep.subr.mxu0 0.0
    %v2789 = vand.u32 %v2278, 4294901760
    %v2790 = vsub.f32 %v2278, %v2789
    %v2791 = vand.u32 %v2790, 4294901760
    %2792 = vmatpush1.xpose.msra.mxu0 %v2791
    %2793 = vmatprep.subr.mxu0 0.0
    %v2794 = vand.u32 %v2281, 4294901760
    %v2795 = vsub.f32 %v2281, %v2794
    %v2796 = vand.u32 %v2795, 4294901760
    %2797 = vmatpush1.xpose.msra.mxu0 %v2796
    %2798 = vmatprep.subr.mxu0 0.0
    %2799 = vmatpush1.xpose.msra.mxu0 0.0
    %2800 = vmatprep.subr.mxu0 0.0
    %2801 = vmatpush1.xpose.msra.mxu0 0.0
    %2802 = vmatprep.subr.mxu0 0.0
    %2803 = vmatpush1.xpose.msra.mxu0 0.0
    %2804 = vmatprep.subr.mxu0 0.0
    %2805 = vmatpush1.xpose.msra.mxu0 0.0
    %2806 = vmatprep.subr.mxu0 0.0
    %2807 = vmatpush1.xpose.msra.mxu0 0.0
    %2808 = vmatprep.subr.mxu0 0.0
    %2809 = vmatpush1.xpose.msra.mxu0 0.0
    %2810 = vmatprep.subr.mxu0 0.0
    %2811 = vmatpush1.xpose.msra.mxu0 0.0
    %2812 = vmatprep.subr.mxu0 0.0
    %2813 = vmatpush1.xpose.msra.mxu0 0.0
    %2814 = vmatprep.subr.mxu0 0.0
    %2815 = vmatpush1.xpose.msra.mxu0 0.0
    %2816 = vmatprep.subr.mxu0 0.0
    %2817 = vmatpush1.xpose.msra.mxu0 0.0
    %2818 = vmatprep.subr.mxu0 0.0
    %2819 = vmatpush1.xpose.msra.mxu0 0.0
    %2820 = vmatprep.subr.mxu0 0.0
    %2821 = vmatpush1.xpose.msra.mxu0 0.0
    %2822 = vmatprep.subr.mxu0 0.0
    %2823 = vmatpush1.xpose.msra.mxu0 0.0
    %2824 = vmatprep.subr.mxu0 0.0
    %2825 = vmatpush1.xpose.msra.mxu0 0.0
    %2826 = vmatprep.subr.mxu0 0.0
    %2827 = vmatpush1.xpose.msra.mxu0 0.0
    %2828 = vmatprep.subr.mxu0 0.0
    %2829 = vmatpush1.xpose.msra.mxu0 0.0
    %2830 = vmatprep.mubr.f32.mxu0 0.0
    %v2831 = vand.u32 %v2233, 4294901760
    %2832 = vmatmul.mubr.f32.gmra.mrb[0].mxu0 %v2831
    %v2833 = vpop.f32.mrb[0].mxu0
    %v2834 = vadd.f32 %v2715, %v2833
    %v2835 = vpop.f32.mrb[0].mxu0
    %2836 = vdwg.mxu0
    %2837 = vmatprep.subr.mxu0 0.0
    %v2838 = vand.u32 %v2236, 4294901760
    %2839 = vmatpush1.xpose.msra.mxu0 %v2838
    %2840 = vmatprep.subr.mxu0 0.0
    %v2841 = vand.u32 %v2239, 4294901760
    %2842 = vmatpush1.xpose.msra.mxu0 %v2841
    %2843 = vmatprep.subr.mxu0 0.0
    %v2844 = vand.u32 %v2242, 4294901760
    %2845 = vmatpush1.xpose.msra.mxu0 %v2844
    %2846 = vmatprep.subr.mxu0 0.0
    %v2847 = vand.u32 %v2245, 4294901760
    %2848 = vmatpush1.xpose.msra.mxu0 %v2847
    %2849 = vmatprep.subr.mxu0 0.0
    %v2850 = vand.u32 %v2248, 4294901760
    %2851 = vmatpush1.xpose.msra.mxu0 %v2850
    %2852 = vmatprep.subr.mxu0 0.0
    %v2853 = vand.u32 %v2251, 4294901760
    %2854 = vmatpush1.xpose.msra.mxu0 %v2853
    %2855 = vmatprep.subr.mxu0 0.0
    %v2856 = vand.u32 %v2254, 4294901760
    %2857 = vmatpush1.xpose.msra.mxu0 %v2856
    %2858 = vmatprep.subr.mxu0 0.0
    %v2859 = vand.u32 %v2257, 4294901760
    %2860 = vmatpush1.xpose.msra.mxu0 %v2859
    %2861 = vmatprep.subr.mxu0 0.0
    %v2862 = vand.u32 %v2260, 4294901760
    %2863 = vmatpush1.xpose.msra.mxu0 %v2862
    %2864 = vmatprep.subr.mxu0 0.0
    %v2865 = vand.u32 %v2263, 4294901760
    %2866 = vmatpush1.xpose.msra.mxu0 %v2865
    %2867 = vmatprep.subr.mxu0 0.0
    %v2868 = vand.u32 %v2266, 4294901760
    %2869 = vmatpush1.xpose.msra.mxu0 %v2868
    %2870 = vmatprep.subr.mxu0 0.0
    %v2871 = vand.u32 %v2269, 4294901760
    %2872 = vmatpush1.xpose.msra.mxu0 %v2871
    %2873 = vmatprep.subr.mxu0 0.0
    %v2874 = vand.u32 %v2272, 4294901760
    %2875 = vmatpush1.xpose.msra.mxu0 %v2874
    %2876 = vmatprep.subr.mxu0 0.0
    %v2877 = vand.u32 %v2275, 4294901760
    %2878 = vmatpush1.xpose.msra.mxu0 %v2877
    %2879 = vmatprep.subr.mxu0 0.0
    %v2880 = vand.u32 %v2278, 4294901760
    %2881 = vmatpush1.xpose.msra.mxu0 %v2880
    %2882 = vmatprep.subr.mxu0 0.0
    %v2883 = vand.u32 %v2281, 4294901760
    %2884 = vmatpush1.xpose.msra.mxu0 %v2883
    %2885 = vmatprep.subr.mxu0 0.0
    %2886 = vmatpush1.xpose.msra.mxu0 0.0
    %2887 = vmatprep.subr.mxu0 0.0
    %2888 = vmatpush1.xpose.msra.mxu0 0.0
    %2889 = vmatprep.subr.mxu0 0.0
    %2890 = vmatpush1.xpose.msra.mxu0 0.0
    %2891 = vmatprep.subr.mxu0 0.0
    %2892 = vmatpush1.xpose.msra.mxu0 0.0
    %2893 = vmatprep.subr.mxu0 0.0
    %2894 = vmatpush1.xpose.msra.mxu0 0.0
    %2895 = vmatprep.subr.mxu0 0.0
    %2896 = vmatpush1.xpose.msra.mxu0 0.0
    %2897 = vmatprep.subr.mxu0 0.0
    %2898 = vmatpush1.xpose.msra.mxu0 0.0
    %2899 = vmatprep.subr.mxu0 0.0
    %2900 = vmatpush1.xpose.msra.mxu0 0.0
    %2901 = vmatprep.subr.mxu0 0.0
    %2902 = vmatpush1.xpose.msra.mxu0 0.0
    %2903 = vmatprep.subr.mxu0 0.0
    %2904 = vmatpush1.xpose.msra.mxu0 0.0
    %2905 = vmatprep.subr.mxu0 0.0
    %2906 = vmatpush1.xpose.msra.mxu0 0.0
    %2907 = vmatprep.subr.mxu0 0.0
    %2908 = vmatpush1.xpose.msra.mxu0 0.0
    %2909 = vmatprep.subr.mxu0 0.0
    %2910 = vmatpush1.xpose.msra.mxu0 0.0
    %2911 = vmatprep.subr.mxu0 0.0
    %2912 = vmatpush1.xpose.msra.mxu0 0.0
    %2913 = vmatprep.subr.mxu0 0.0
    %2914 = vmatpush1.xpose.msra.mxu0 0.0
    %2915 = vmatprep.subr.mxu0 0.0
    %2916 = vmatpush1.xpose.msra.mxu0 0.0
    %2917 = vmatprep.mubr.f32.mxu0 0.0
    %v2918 = vand.u32 %v2233, 4294901760
    %2919 = vmatmul.mubr.f32.gmra.mrb[0].mxu0 %v2918
    %v2920 = vpop.f32.mrb[0].mxu0
    %v2921 = vadd.f32 %v2834, %v2920
    %v2922 = vpop.f32.mrb[0].mxu0
    %2923 = vdwg.mxu0
    %v2925 = vsel %vm155, %v151, 0
    %v2928 = vsel %vm155, %v83, 0
    %v2931 = vsel %vm155, %v84, 0
    %v2934 = vsel %vm155, %v85, 0
    %v2937 = vsel %vm155, %v86, 0
    %v2940 = vsel %vm155, %v87, 0
    %v2943 = vsel %vm155, %v88, 0
    %v2946 = vsel %vm155, %v89, 0
    %v2949 = vsel %vm155, %v90, 0
    %v2952 = vsel %vm155, %v91, 0
    %v2955 = vsel %vm155, %v92, 0
    %v2958 = vsel %vm155, %v93, 0
    %v2961 = vsel %vm155, %v94, 0
    %v2964 = vsel %vm155, %v95, 0
    %v2967 = vsel %vm155, %v96, 0
    %v2970 = vsel %vm155, %v97, 0
    %v2973 = vsel %vm155, %v98, 0
    %2975 = vmatprep.subr.mxu0 0.0
    %v2976 = vand.u32 %v2928, 4294901760
    %2977 = vmatpush1.xpose.msra.mxu0 %v2976
    %2978 = vmatprep.subr.mxu0 0.0
    %v2979 = vand.u32 %v2931, 4294901760
    %2980 = vmatpush1.xpose.msra.mxu0 %v2979
    %2981 = vmatprep.subr.mxu0 0.0
    %v2982 = vand.u32 %v2934, 4294901760
    %2983 = vmatpush1.xpose.msra.mxu0 %v2982
    %2984 = vmatprep.subr.mxu0 0.0
    %v2985 = vand.u32 %v2937, 4294901760
    %2986 = vmatpush1.xpose.msra.mxu0 %v2985
    %2987 = vmatprep.subr.mxu0 0.0
    %v2988 = vand.u32 %v2940, 4294901760
    %2989 = vmatpush1.xpose.msra.mxu0 %v2988
    %2990 = vmatprep.subr.mxu0 0.0
    %v2991 = vand.u32 %v2943, 4294901760
    %2992 = vmatpush1.xpose.msra.mxu0 %v2991
    %2993 = vmatprep.subr.mxu0 0.0
    %v2994 = vand.u32 %v2946, 4294901760
    %2995 = vmatpush1.xpose.msra.mxu0 %v2994
    %2996 = vmatprep.subr.mxu0 0.0
    %v2997 = vand.u32 %v2949, 4294901760
    %2998 = vmatpush1.xpose.msra.mxu0 %v2997
    %2999 = vmatprep.subr.mxu0 0.0
    %v3000 = vand.u32 %v2952, 4294901760
    %3001 = vmatpush1.xpose.msra.mxu0 %v3000
    %3002 = vmatprep.subr.mxu0 0.0
    %v3003 = vand.u32 %v2955, 4294901760
    %3004 = vmatpush1.xpose.msra.mxu0 %v3003
    %3005 = vmatprep.subr.mxu0 0.0
    %v3006 = vand.u32 %v2958, 4294901760
    %3007 = vmatpush1.xpose.msra.mxu0 %v3006
    %3008 = vmatprep.subr.mxu0 0.0
    %v3009 = vand.u32 %v2961, 4294901760
    %3010 = vmatpush1.xpose.msra.mxu0 %v3009
    %3011 = vmatprep.subr.mxu0 0.0
    %v3012 = vand.u32 %v2964, 4294901760
    %3013 = vmatpush1.xpose.msra.mxu0 %v3012
    %3014 = vmatprep.subr.mxu0 0.0
    %v3015 = vand.u32 %v2967, 4294901760
    %3016 = vmatpush1.xpose.msra.mxu0 %v3015
    %3017 = vmatprep.subr.mxu0 0.0
    %v3018 = vand.u32 %v2970, 4294901760
    %3019 = vmatpush1.xpose.msra.mxu0 %v3018
    %3020 = vmatprep.subr.mxu0 0.0
    %v3021 = vand.u32 %v2973, 4294901760
    %3022 = vmatpush1.xpose.msra.mxu0 %v3021
    %3023 = vmatprep.subr.mxu0 0.0
    %3024 = vmatpush1.xpose.msra.mxu0 0.0
    %3025 = vmatprep.subr.mxu0 0.0
    %3026 = vmatpush1.xpose.msra.mxu0 0.0
    %3027 = vmatprep.subr.mxu0 0.0
    %3028 = vmatpush1.xpose.msra.mxu0 0.0
    %3029 = vmatprep.subr.mxu0 0.0
    %3030 = vmatpush1.xpose.msra.mxu0 0.0
    %3031 = vmatprep.subr.mxu0 0.0
    %3032 = vmatpush1.xpose.msra.mxu0 0.0
    %3033 = vmatprep.subr.mxu0 0.0
    %3034 = vmatpush1.xpose.msra.mxu0 0.0
    %3035 = vmatprep.subr.mxu0 0.0
    %3036 = vmatpush1.xpose.msra.mxu0 0.0
    %3037 = vmatprep.subr.mxu0 0.0
    %3038 = vmatpush1.xpose.msra.mxu0 0.0
    %3039 = vmatprep.subr.mxu0 0.0
    %3040 = vmatpush1.xpose.msra.mxu0 0.0
    %3041 = vmatprep.subr.mxu0 0.0
    %3042 = vmatpush1.xpose.msra.mxu0 0.0
    %3043 = vmatprep.subr.mxu0 0.0
    %3044 = vmatpush1.xpose.msra.mxu0 0.0
    %3045 = vmatprep.subr.mxu0 0.0
    %3046 = vmatpush1.xpose.msra.mxu0 0.0
    %3047 = vmatprep.subr.mxu0 0.0
    %3048 = vmatpush1.xpose.msra.mxu0 0.0
    %3049 = vmatprep.subr.mxu0 0.0
    %3050 = vmatpush1.xpose.msra.mxu0 0.0
    %3051 = vmatprep.subr.mxu0 0.0
    %3052 = vmatpush1.xpose.msra.mxu0 0.0
    %3053 = vmatprep.subr.mxu0 0.0
    %3054 = vmatpush1.xpose.msra.mxu0 0.0
    %3055 = vmatprep.mubr.f32.mxu0 0.0
    %v3056 = vand.u32 %v2925, 4294901760
    %v3057 = vsub.f32 %v2925, %v3056
    %v3058 = vand.u32 %v3057, 4294901760
    %v3059 = vsub.f32 %v3057, %v3058
    %v3060 = vand.u32 %v3059, 4294901760
    %3061 = vmatmul.mubr.f32.gmra.mrb[0].mxu0 %v3060
    %v3062 = vpop.f32.mrb[0].mxu0
    %v3063 = vadd.f32 0.0, %v3062
    %v3064 = vpop.f32.mrb[0].mxu0
    %3065 = vdwg.mxu0
    %3066 = vmatprep.subr.mxu0 0.0
    %v3067 = vand.u32 %v2928, 4294901760
    %v3068 = vsub.f32 %v2928, %v3067
    %v3069 = vand.u32 %v3068, 4294901760
    %v3070 = vsub.f32 %v3068, %v3069
    %v3071 = vand.u32 %v3070, 4294901760
    %3072 = vmatpush1.xpose.msra.mxu0 %v3071
    %3073 = vmatprep.subr.mxu0 0.0
    %v3074 = vand.u32 %v2931, 4294901760
    %v3075 = vsub.f32 %v2931, %v3074
    %v3076 = vand.u32 %v3075, 4294901760
    %v3077 = vsub.f32 %v3075, %v3076
    %v3078 = vand.u32 %v3077, 4294901760
    %3079 = vmatpush1.xpose.msra.mxu0 %v3078
    %3080 = vmatprep.subr.mxu0 0.0
    %v3081 = vand.u32 %v2934, 4294901760
    %v3082 = vsub.f32 %v2934, %v3081
    %v3083 = vand.u32 %v3082, 4294901760
    %v3084 = vsub.f32 %v3082, %v3083
    %v3085 = vand.u32 %v3084, 4294901760
    %3086 = vmatpush1.xpose.msra.mxu0 %v3085
    %3087 = vmatprep.subr.mxu0 0.0
    %v3088 = vand.u32 %v2937, 4294901760
    %v3089 = vsub.f32 %v2937, %v3088
    %v3090 = vand.u32 %v3089, 4294901760
    %v3091 = vsub.f32 %v3089, %v3090
    %v3092 = vand.u32 %v3091, 4294901760
    %3093 = vmatpush1.xpose.msra.mxu0 %v3092
    %3094 = vmatprep.subr.mxu0 0.0
    %v3095 = vand.u32 %v2940, 4294901760
    %v3096 = vsub.f32 %v2940, %v3095
    %v3097 = vand.u32 %v3096, 4294901760
    %v3098 = vsub.f32 %v3096, %v3097
    %v3099 = vand.u32 %v3098, 4294901760
    %3100 = vmatpush1.xpose.msra.mxu0 %v3099
    %3101 = vmatprep.subr.mxu0 0.0
    %v3102 = vand.u32 %v2943, 4294901760
    %v3103 = vsub.f32 %v2943, %v3102
    %v3104 = vand.u32 %v3103, 4294901760
    %v3105 = vsub.f32 %v3103, %v3104
    %v3106 = vand.u32 %v3105, 4294901760
    %3107 = vmatpush1.xpose.msra.mxu0 %v3106
    %3108 = vmatprep.subr.mxu0 0.0
    %v3109 = vand.u32 %v2946, 4294901760
    %v3110 = vsub.f32 %v2946, %v3109
    %v3111 = vand.u32 %v3110, 4294901760
    %v3112 = vsub.f32 %v3110, %v3111
    %v3113 = vand.u32 %v3112, 4294901760
    %3114 = vmatpush1.xpose.msra.mxu0 %v3113
    %3115 = vmatprep.subr.mxu0 0.0
    %v3116 = vand.u32 %v2949, 4294901760
    %v3117 = vsub.f32 %v2949, %v3116
    %v3118 = vand.u32 %v3117, 4294901760
    %v3119 = vsub.f32 %v3117, %v3118
    %v3120 = vand.u32 %v3119, 4294901760
    %3121 = vmatpush1.xpose.msra.mxu0 %v3120
    %3122 = vmatprep.subr.mxu0 0.0
    %v3123 = vand.u32 %v2952, 4294901760
    %v3124 = vsub.f32 %v2952, %v3123
    %v3125 = vand.u32 %v3124, 4294901760
    %v3126 = vsub.f32 %v3124, %v3125
    %v3127 = vand.u32 %v3126, 4294901760
    %3128 = vmatpush1.xpose.msra.mxu0 %v3127
    %3129 = vmatprep.subr.mxu0 0.0
    %v3130 = vand.u32 %v2955, 4294901760
    %v3131 = vsub.f32 %v2955, %v3130
    %v3132 = vand.u32 %v3131, 4294901760
    %v3133 = vsub.f32 %v3131, %v3132
    %v3134 = vand.u32 %v3133, 4294901760
    %3135 = vmatpush1.xpose.msra.mxu0 %v3134
    %3136 = vmatprep.subr.mxu0 0.0
    %v3137 = vand.u32 %v2958, 4294901760
    %v3138 = vsub.f32 %v2958, %v3137
    %v3139 = vand.u32 %v3138, 4294901760
    %v3140 = vsub.f32 %v3138, %v3139
    %v3141 = vand.u32 %v3140, 4294901760
    %3142 = vmatpush1.xpose.msra.mxu0 %v3141
    %3143 = vmatprep.subr.mxu0 0.0
    %v3144 = vand.u32 %v2961, 4294901760
    %v3145 = vsub.f32 %v2961, %v3144
    %v3146 = vand.u32 %v3145, 4294901760
    %v3147 = vsub.f32 %v3145, %v3146
    %v3148 = vand.u32 %v3147, 4294901760
    %3149 = vmatpush1.xpose.msra.mxu0 %v3148
    %3150 = vmatprep.subr.mxu0 0.0
    %v3151 = vand.u32 %v2964, 4294901760
    %v3152 = vsub.f32 %v2964, %v3151
    %v3153 = vand.u32 %v3152, 4294901760
    %v3154 = vsub.f32 %v3152, %v3153
    %v3155 = vand.u32 %v3154, 4294901760
    %3156 = vmatpush1.xpose.msra.mxu0 %v3155
    %3157 = vmatprep.subr.mxu0 0.0
    %v3158 = vand.u32 %v2967, 4294901760
    %v3159 = vsub.f32 %v2967, %v3158
    %v3160 = vand.u32 %v3159, 4294901760
    %v3161 = vsub.f32 %v3159, %v3160
    %v3162 = vand.u32 %v3161, 4294901760
    %3163 = vmatpush1.xpose.msra.mxu0 %v3162
    %3164 = vmatprep.subr.mxu0 0.0
    %v3165 = vand.u32 %v2970, 4294901760
    %v3166 = vsub.f32 %v2970, %v3165
    %v3167 = vand.u32 %v3166, 4294901760
    %v3168 = vsub.f32 %v3166, %v3167
    %v3169 = vand.u32 %v3168, 4294901760
    %3170 = vmatpush1.xpose.msra.mxu0 %v3169
    %3171 = vmatprep.subr.mxu0 0.0
    %v3172 = vand.u32 %v2973, 4294901760
    %v3173 = vsub.f32 %v2973, %v3172
    %v3174 = vand.u32 %v3173, 4294901760
    %v3175 = vsub.f32 %v3173, %v3174
    %v3176 = vand.u32 %v3175, 4294901760
    %3177 = vmatpush1.xpose.msra.mxu0 %v3176
    %3178 = vmatprep.subr.mxu0 0.0
    %3179 = vmatpush1.xpose.msra.mxu0 0.0
    %3180 = vmatprep.subr.mxu0 0.0
    %3181 = vmatpush1.xpose.msra.mxu0 0.0
    %3182 = vmatprep.subr.mxu0 0.0
    %3183 = vmatpush1.xpose.msra.mxu0 0.0
    %3184 = vmatprep.subr.mxu0 0.0
    %3185 = vmatpush1.xpose.msra.mxu0 0.0
    %3186 = vmatprep.subr.mxu0 0.0
    %3187 = vmatpush1.xpose.msra.mxu0 0.0
    %3188 = vmatprep.subr.mxu0 0.0
    %3189 = vmatpush1.xpose.msra.mxu0 0.0
    %3190 = vmatprep.subr.mxu0 0.0
    %3191 = vmatpush1.xpose.msra.mxu0 0.0
    %3192 = vmatprep.subr.mxu0 0.0
    %3193 = vmatpush1.xpose.msra.mxu0 0.0
    %3194 = vmatprep.subr.mxu0 0.0
    %3195 = vmatpush1.xpose.msra.mxu0 0.0
    %3196 = vmatprep.subr.mxu0 0.0
    %3197 = vmatpush1.xpose.msra.mxu0 0.0
    %3198 = vmatprep.subr.mxu0 0.0
    %3199 = vmatpush1.xpose.msra.mxu0 0.0
    %3200 = vmatprep.subr.mxu0 0.0
    %3201 = vmatpush1.xpose.msra.mxu0 0.0
    %3202 = vmatprep.subr.mxu0 0.0
    %3203 = vmatpush1.xpose.msra.mxu0 0.0
    %3204 = vmatprep.subr.mxu0 0.0
    %3205 = vmatpush1.xpose.msra.mxu0 0.0
    %3206 = vmatprep.subr.mxu0 0.0
    %3207 = vmatpush1.xpose.msra.mxu0 0.0
    %3208 = vmatprep.subr.mxu0 0.0
    %3209 = vmatpush1.xpose.msra.mxu0 0.0
    %3210 = vmatprep.mubr.f32.mxu0 0.0
    %v3211 = vand.u32 %v2925, 4294901760
    %3212 = vmatmul.mubr.f32.gmra.mrb[0].mxu0 %v3211
    %v3213 = vpop.f32.mrb[0].mxu0
    %v3214 = vadd.f32 %v3063, %v3213
    %v3215 = vpop.f32.mrb[0].mxu0
    %3216 = vdwg.mxu0
    %3217 = vmatprep.subr.mxu0 0.0
    %v3218 = vand.u32 %v2928, 4294901760
    %v3219 = vsub.f32 %v2928, %v3218
    %3220 = vmatpush1.xpose.msra.mxu0 %v3219
    %3221 = vmatprep.subr.mxu0 0.0
    %v3222 = vand.u32 %v2931, 4294901760
    %v3223 = vsub.f32 %v2931, %v3222
    %3224 = vmatpush1.xpose.msra.mxu0 %v3223
    %3225 = vmatprep.subr.mxu0 0.0
    %v3226 = vand.u32 %v2934, 4294901760
    %v3227 = vsub.f32 %v2934, %v3226
    %3228 = vmatpush1.xpose.msra.mxu0 %v3227
    %3229 = vmatprep.subr.mxu0 0.0
    %v3230 = vand.u32 %v2937, 4294901760
    %v3231 = vsub.f32 %v2937, %v3230
    %3232 = vmatpush1.xpose.msra.mxu0 %v3231
    %3233 = vmatprep.subr.mxu0 0.0
    %v3234 = vand.u32 %v2940, 4294901760
    %v3235 = vsub.f32 %v2940, %v3234
    %3236 = vmatpush1.xpose.msra.mxu0 %v3235
    %3237 = vmatprep.subr.mxu0 0.0
    %v3238 = vand.u32 %v2943, 4294901760
    %v3239 = vsub.f32 %v2943, %v3238
    %3240 = vmatpush1.xpose.msra.mxu0 %v3239
    %3241 = vmatprep.subr.mxu0 0.0
    %v3242 = vand.u32 %v2946, 4294901760
    %v3243 = vsub.f32 %v2946, %v3242
    %3244 = vmatpush1.xpose.msra.mxu0 %v3243
    %3245 = vmatprep.subr.mxu0 0.0
    %v3246 = vand.u32 %v2949, 4294901760
    %v3247 = vsub.f32 %v2949, %v3246
    %3248 = vmatpush1.xpose.msra.mxu0 %v3247
    %3249 = vmatprep.subr.mxu0 0.0
    %v3250 = vand.u32 %v2952, 4294901760
    %v3251 = vsub.f32 %v2952, %v3250
    %3252 = vmatpush1.xpose.msra.mxu0 %v3251
    %3253 = vmatprep.subr.mxu0 0.0
    %v3254 = vand.u32 %v2955, 4294901760
    %v3255 = vsub.f32 %v2955, %v3254
    %3256 = vmatpush1.xpose.msra.mxu0 %v3255
    %3257 = vmatprep.subr.mxu0 0.0
    %v3258 = vand.u32 %v2958, 4294901760
    %v3259 = vsub.f32 %v2958, %v3258
    %3260 = vmatpush1.xpose.msra.mxu0 %v3259
    %3261 = vmatprep.subr.mxu0 0.0
    %v3262 = vand.u32 %v2961, 4294901760
    %v3263 = vsub.f32 %v2961, %v3262
    %3264 = vmatpush1.xpose.msra.mxu0 %v3263
    %3265 = vmatprep.subr.mxu0 0.0
    %v3266 = vand.u32 %v2964, 4294901760
    %v3267 = vsub.f32 %v2964, %v3266
    %3268 = vmatpush1.xpose.msra.mxu0 %v3267
    %3269 = vmatprep.subr.mxu0 0.0
    %v3270 = vand.u32 %v2967, 4294901760
    %v3271 = vsub.f32 %v2967, %v3270
    %3272 = vmatpush1.xpose.msra.mxu0 %v3271
    %3273 = vmatprep.subr.mxu0 0.0
    %v3274 = vand.u32 %v2970, 4294901760
    %v3275 = vsub.f32 %v2970, %v3274
    %3276 = vmatpush1.xpose.msra.mxu0 %v3275
    %3277 = vmatprep.subr.mxu0 0.0
    %v3278 = vand.u32 %v2973, 4294901760
    %v3279 = vsub.f32 %v2973, %v3278
    %3280 = vmatpush1.xpose.msra.mxu0 %v3279
    %3281 = vmatprep.subr.mxu0 0.0
    %3282 = vmatpush1.xpose.msra.mxu0 0.0
    %3283 = vmatprep.subr.mxu0 0.0
    %3284 = vmatpush1.xpose.msra.mxu0 0.0
    %3285 = vmatprep.subr.mxu0 0.0
    %3286 = vmatpush1.xpose.msra.mxu0 0.0
    %3287 = vmatprep.subr.mxu0 0.0
    %3288 = vmatpush1.xpose.msra.mxu0 0.0
    %3289 = vmatprep.subr.mxu0 0.0
    %3290 = vmatpush1.xpose.msra.mxu0 0.0
    %3291 = vmatprep.subr.mxu0 0.0
    %3292 = vmatpush1.xpose.msra.mxu0 0.0
    %3293 = vmatprep.subr.mxu0 0.0
    %3294 = vmatpush1.xpose.msra.mxu0 0.0
    %3295 = vmatprep.subr.mxu0 0.0
    %3296 = vmatpush1.xpose.msra.mxu0 0.0
    %3297 = vmatprep.subr.mxu0 0.0
    %3298 = vmatpush1.xpose.msra.mxu0 0.0
    %3299 = vmatprep.subr.mxu0 0.0
    %3300 = vmatpush1.xpose.msra.mxu0 0.0
    %3301 = vmatprep.subr.mxu0 0.0
    %3302 = vmatpush1.xpose.msra.mxu0 0.0
    %3303 = vmatprep.subr.mxu0 0.0
    %3304 = vmatpush1.xpose.msra.mxu0 0.0
    %3305 = vmatprep.subr.mxu0 0.0
    %3306 = vmatpush1.xpose.msra.mxu0 0.0
    %3307 = vmatprep.subr.mxu0 0.0
    %3308 = vmatpush1.xpose.msra.mxu0 0.0
    %3309 = vmatprep.subr.mxu0 0.0
    %3310 = vmatpush1.xpose.msra.mxu0 0.0
    %3311 = vmatprep.subr.mxu0 0.0
    %3312 = vmatpush1.xpose.msra.mxu0 0.0
    %3313 = vmatprep.mubr.f32.mxu0 0.0
    %v3314 = vand.u32 %v2925, 4294901760
    %v3315 = vsub.f32 %v2925, %v3314
    %3316 = vmatmul.mubr.f32.gmra.mrb[0].mxu0 %v3315
    %v3317 = vpop.f32.mrb[0].mxu0
    %v3318 = vadd.f32 %v3214, %v3317
    %v3319 = vpop.f32.mrb[0].mxu0
    %3320 = vdwg.mxu0
    %3321 = vmatprep.subr.mxu0 0.0
    %v3322 = vand.u32 %v2928, 4294901760
    %3323 = vmatpush1.xpose.msra.mxu0 %v3322
    %3324 = vmatprep.subr.mxu0 0.0
    %v3325 = vand.u32 %v2931, 4294901760
    %3326 = vmatpush1.xpose.msra.mxu0 %v3325
    %3327 = vmatprep.subr.mxu0 0.0
    %v3328 = vand.u32 %v2934, 4294901760
    %3329 = vmatpush1.xpose.msra.mxu0 %v3328
    %3330 = vmatprep.subr.mxu0 0.0
    %v3331 = vand.u32 %v2937, 4294901760
    %3332 = vmatpush1.xpose.msra.mxu0 %v3331
    %3333 = vmatprep.subr.mxu0 0.0
    %v3334 = vand.u32 %v2940, 4294901760
    %3335 = vmatpush1.xpose.msra.mxu0 %v3334
    %3336 = vmatprep.subr.mxu0 0.0
    %v3337 = vand.u32 %v2943, 4294901760
    %3338 = vmatpush1.xpose.msra.mxu0 %v3337
    %3339 = vmatprep.subr.mxu0 0.0
    %v3340 = vand.u32 %v2946, 4294901760
    %3341 = vmatpush1.xpose.msra.mxu0 %v3340
    %3342 = vmatprep.subr.mxu0 0.0
    %v3343 = vand.u32 %v2949, 4294901760
    %3344 = vmatpush1.xpose.msra.mxu0 %v3343
    %3345 = vmatprep.subr.mxu0 0.0
    %v3346 = vand.u32 %v2952, 4294901760
    %3347 = vmatpush1.xpose.msra.mxu0 %v3346
    %3348 = vmatprep.subr.mxu0 0.0
    %v3349 = vand.u32 %v2955, 4294901760
    %3350 = vmatpush1.xpose.msra.mxu0 %v3349
    %3351 = vmatprep.subr.mxu0 0.0
    %v3352 = vand.u32 %v2958, 4294901760
    %3353 = vmatpush1.xpose.msra.mxu0 %v3352
    %3354 = vmatprep.subr.mxu0 0.0
    %v3355 = vand.u32 %v2961, 4294901760
    %3356 = vmatpush1.xpose.msra.mxu0 %v3355
    %3357 = vmatprep.subr.mxu0 0.0
    %v3358 = vand.u32 %v2964, 4294901760
    %3359 = vmatpush1.xpose.msra.mxu0 %v3358
    %3360 = vmatprep.subr.mxu0 0.0
    %v3361 = vand.u32 %v2967, 4294901760
    %3362 = vmatpush1.xpose.msra.mxu0 %v3361
    %3363 = vmatprep.subr.mxu0 0.0
    %v3364 = vand.u32 %v2970, 4294901760
    %3365 = vmatpush1.xpose.msra.mxu0 %v3364
    %3366 = vmatprep.subr.mxu0 0.0
    %v3367 = vand.u32 %v2973, 4294901760
    %3368 = vmatpush1.xpose.msra.mxu0 %v3367
    %3369 = vmatprep.subr.mxu0 0.0
    %3370 = vmatpush1.xpose.msra.mxu0 0.0
    %3371 = vmatprep.subr.mxu0 0.0
    %3372 = vmatpush1.xpose.msra.mxu0 0.0
    %3373 = vmatprep.subr.mxu0 0.0
    %3374 = vmatpush1.xpose.msra.mxu0 0.0
    %3375 = vmatprep.subr.mxu0 0.0
    %3376 = vmatpush1.xpose.msra.mxu0 0.0
    %3377 = vmatprep.subr.mxu0 0.0
    %3378 = vmatpush1.xpose.msra.mxu0 0.0
    %3379 = vmatprep.subr.mxu0 0.0
    %3380 = vmatpush1.xpose.msra.mxu0 0.0
    %3381 = vmatprep.subr.mxu0 0.0
    %3382 = vmatpush1.xpose.msra.mxu0 0.0
    %3383 = vmatprep.subr.mxu0 0.0
    %3384 = vmatpush1.xpose.msra.mxu0 0.0
    %3385 = vmatprep.subr.mxu0 0.0
    %3386 = vmatpush1.xpose.msra.mxu0 0.0
    %3387 = vmatprep.subr.mxu0 0.0
    %3388 = vmatpush1.xpose.msra.mxu0 0.0
    %3389 = vmatprep.subr.mxu0 0.0
    %3390 = vmatpush1.xpose.msra.mxu0 0.0
    %3391 = vmatprep.subr.mxu0 0.0
    %3392 = vmatpush1.xpose.msra.mxu0 0.0
    %3393 = vmatprep.subr.mxu0 0.0
    %3394 = vmatpush1.xpose.msra.mxu0 0.0
    %3395 = vmatprep.subr.mxu0 0.0
    %3396 = vmatpush1.xpose.msra.mxu0 0.0
    %3397 = vmatprep.subr.mxu0 0.0
    %3398 = vmatpush1.xpose.msra.mxu0 0.0
    %3399 = vmatprep.subr.mxu0 0.0
    %3400 = vmatpush1.xpose.msra.mxu0 0.0
    %3401 = vmatprep.mubr.f32.mxu0 0.0
    %v3402 = vand.u32 %v2925, 4294901760
    %v3403 = vsub.f32 %v2925, %v3402
    %v3404 = vand.u32 %v3403, 4294901760
    %3405 = vmatmul.mubr.f32.gmra.mrb[0].mxu0 %v3404
    %v3406 = vpop.f32.mrb[0].mxu0
    %v3407 = vadd.f32 %v3318, %v3406
    %v3408 = vpop.f32.mrb[0].mxu0
    %3409 = vdwg.mxu0
    %3410 = vmatprep.subr.mxu0 0.0
    %v3411 = vand.u32 %v2928, 4294901760
    %v3412 = vsub.f32 %v2928, %v3411
    %v3413 = vand.u32 %v3412, 4294901760
    %3414 = vmatpush1.xpose.msra.mxu0 %v3413
    %3415 = vmatprep.subr.mxu0 0.0
    %v3416 = vand.u32 %v2931, 4294901760
    %v3417 = vsub.f32 %v2931, %v3416
    %v3418 = vand.u32 %v3417, 4294901760
    %3419 = vmatpush1.xpose.msra.mxu0 %v3418
    %3420 = vmatprep.subr.mxu0 0.0
    %v3421 = vand.u32 %v2934, 4294901760
    %v3422 = vsub.f32 %v2934, %v3421
    %v3423 = vand.u32 %v3422, 4294901760
    %3424 = vmatpush1.xpose.msra.mxu0 %v3423
    %3425 = vmatprep.subr.mxu0 0.0
    %v3426 = vand.u32 %v2937, 4294901760
    %v3427 = vsub.f32 %v2937, %v3426
    %v3428 = vand.u32 %v3427, 4294901760
    %3429 = vmatpush1.xpose.msra.mxu0 %v3428
    %3430 = vmatprep.subr.mxu0 0.0
    %v3431 = vand.u32 %v2940, 4294901760
    %v3432 = vsub.f32 %v2940, %v3431
    %v3433 = vand.u32 %v3432, 4294901760
    %3434 = vmatpush1.xpose.msra.mxu0 %v3433
    %3435 = vmatprep.subr.mxu0 0.0
    %v3436 = vand.u32 %v2943, 4294901760
    %v3437 = vsub.f32 %v2943, %v3436
    %v3438 = vand.u32 %v3437, 4294901760
    %3439 = vmatpush1.xpose.msra.mxu0 %v3438
    %3440 = vmatprep.subr.mxu0 0.0
    %v3441 = vand.u32 %v2946, 4294901760
    %v3442 = vsub.f32 %v2946, %v3441
    %v3443 = vand.u32 %v3442, 4294901760
    %3444 = vmatpush1.xpose.msra.mxu0 %v3443
    %3445 = vmatprep.subr.mxu0 0.0
    %v3446 = vand.u32 %v2949, 4294901760
    %v3447 = vsub.f32 %v2949, %v3446
    %v3448 = vand.u32 %v3447, 4294901760
    %3449 = vmatpush1.xpose.msra.mxu0 %v3448
    %3450 = vmatprep.subr.mxu0 0.0
    %v3451 = vand.u32 %v2952, 4294901760
    %v3452 = vsub.f32 %v2952, %v3451
    %v3453 = vand.u32 %v3452, 4294901760
    %3454 = vmatpush1.xpose.msra.mxu0 %v3453
    %3455 = vmatprep.subr.mxu0 0.0
    %v3456 = vand.u32 %v2955, 4294901760
    %v3457 = vsub.f32 %v2955, %v3456
    %v3458 = vand.u32 %v3457, 4294901760
    %3459 = vmatpush1.xpose.msra.mxu0 %v3458
    %3460 = vmatprep.subr.mxu0 0.0
    %v3461 = vand.u32 %v2958, 4294901760
    %v3462 = vsub.f32 %v2958, %v3461
    %v3463 = vand.u32 %v3462, 4294901760
    %3464 = vmatpush1.xpose.msra.mxu0 %v3463
    %3465 = vmatprep.subr.mxu0 0.0
    %v3466 = vand.u32 %v2961, 4294901760
    %v3467 = vsub.f32 %v2961, %v3466
    %v3468 = vand.u32 %v3467, 4294901760
    %3469 = vmatpush1.xpose.msra.mxu0 %v3468
    %3470 = vmatprep.subr.mxu0 0.0
    %v3471 = vand.u32 %v2964, 4294901760
    %v3472 = vsub.f32 %v2964, %v3471
    %v3473 = vand.u32 %v3472, 4294901760
    %3474 = vmatpush1.xpose.msra.mxu0 %v3473
    %3475 = vmatprep.subr.mxu0 0.0
    %v3476 = vand.u32 %v2967, 4294901760
    %v3477 = vsub.f32 %v2967, %v3476
    %v3478 = vand.u32 %v3477, 4294901760
    %3479 = vmatpush1.xpose.msra.mxu0 %v3478
    %3480 = vmatprep.subr.mxu0 0.0
    %v3481 = vand.u32 %v2970, 4294901760
    %v3482 = vsub.f32 %v2970, %v3481
    %v3483 = vand.u32 %v3482, 4294901760
    %3484 = vmatpush1.xpose.msra.mxu0 %v3483
    %3485 = vmatprep.subr.mxu0 0.0
    %v3486 = vand.u32 %v2973, 4294901760
    %v3487 = vsub.f32 %v2973, %v3486
    %v3488 = vand.u32 %v3487, 4294901760
    %3489 = vmatpush1.xpose.msra.mxu0 %v3488
    %3490 = vmatprep.subr.mxu0 0.0
    %3491 = vmatpush1.xpose.msra.mxu0 0.0
    %3492 = vmatprep.subr.mxu0 0.0
    %3493 = vmatpush1.xpose.msra.mxu0 0.0
    %3494 = vmatprep.subr.mxu0 0.0
    %3495 = vmatpush1.xpose.msra.mxu0 0.0
    %3496 = vmatprep.subr.mxu0 0.0
    %3497 = vmatpush1.xpose.msra.mxu0 0.0
    %3498 = vmatprep.subr.mxu0 0.0
    %3499 = vmatpush1.xpose.msra.mxu0 0.0
    %3500 = vmatprep.subr.mxu0 0.0
    %3501 = vmatpush1.xpose.msra.mxu0 0.0
    %3502 = vmatprep.subr.mxu0 0.0
    %3503 = vmatpush1.xpose.msra.mxu0 0.0
    %3504 = vmatprep.subr.mxu0 0.0
    %3505 = vmatpush1.xpose.msra.mxu0 0.0
    %3506 = vmatprep.subr.mxu0 0.0
    %3507 = vmatpush1.xpose.msra.mxu0 0.0
    %3508 = vmatprep.subr.mxu0 0.0
    %3509 = vmatpush1.xpose.msra.mxu0 0.0
    %3510 = vmatprep.subr.mxu0 0.0
    %3511 = vmatpush1.xpose.msra.mxu0 0.0
    %3512 = vmatprep.subr.mxu0 0.0
    %3513 = vmatpush1.xpose.msra.mxu0 0.0
    %3514 = vmatprep.subr.mxu0 0.0
    %3515 = vmatpush1.xpose.msra.mxu0 0.0
    %3516 = vmatprep.subr.mxu0 0.0
    %3517 = vmatpush1.xpose.msra.mxu0 0.0
    %3518 = vmatprep.subr.mxu0 0.0
    %3519 = vmatpush1.xpose.msra.mxu0 0.0
    %3520 = vmatprep.subr.mxu0 0.0
    %3521 = vmatpush1.xpose.msra.mxu0 0.0
    %3522 = vmatprep.mubr.f32.mxu0 0.0
    %v3523 = vand.u32 %v2925, 4294901760
    %3524 = vmatmul.mubr.f32.gmra.mrb[0].mxu0 %v3523
    %v3525 = vpop.f32.mrb[0].mxu0
    %v3526 = vadd.f32 %v3407, %v3525
    %v3527 = vpop.f32.mrb[0].mxu0
    %3528 = vdwg.mxu0
    %3529 = vmatprep.subr.mxu0 0.0
    %v3530 = vand.u32 %v2928, 4294901760
    %3531 = vmatpush1.xpose.msra.mxu0 %v3530
    %3532 = vmatprep.subr.mxu0 0.0
    %v3533 = vand.u32 %v2931, 4294901760
    %3534 = vmatpush1.xpose.msra.mxu0 %v3533
    %3535 = vmatprep.subr.mxu0 0.0
    %v3536 = vand.u32 %v2934, 4294901760
    %3537 = vmatpush1.xpose.msra.mxu0 %v3536
    %3538 = vmatprep.subr.mxu0 0.0
    %v3539 = vand.u32 %v2937, 4294901760
    %3540 = vmatpush1.xpose.msra.mxu0 %v3539
    %3541 = vmatprep.subr.mxu0 0.0
    %v3542 = vand.u32 %v2940, 4294901760
    %3543 = vmatpush1.xpose.msra.mxu0 %v3542
    %3544 = vmatprep.subr.mxu0 0.0
    %v3545 = vand.u32 %v2943, 4294901760
    %3546 = vmatpush1.xpose.msra.mxu0 %v3545
    %3547 = vmatprep.subr.mxu0 0.0
    %v3548 = vand.u32 %v2946, 4294901760
    %3549 = vmatpush1.xpose.msra.mxu0 %v3548
    %3550 = vmatprep.subr.mxu0 0.0
    %v3551 = vand.u32 %v2949, 4294901760
    %3552 = vmatpush1.xpose.msra.mxu0 %v3551
    %3553 = vmatprep.subr.mxu0 0.0
    %v3554 = vand.u32 %v2952, 4294901760
    %3555 = vmatpush1.xpose.msra.mxu0 %v3554
    %3556 = vmatprep.subr.mxu0 0.0
    %v3557 = vand.u32 %v2955, 4294901760
    %3558 = vmatpush1.xpose.msra.mxu0 %v3557
    %3559 = vmatprep.subr.mxu0 0.0
    %v3560 = vand.u32 %v2958, 4294901760
    %3561 = vmatpush1.xpose.msra.mxu0 %v3560
    %3562 = vmatprep.subr.mxu0 0.0
    %v3563 = vand.u32 %v2961, 4294901760
    %3564 = vmatpush1.xpose.msra.mxu0 %v3563
    %3565 = vmatprep.subr.mxu0 0.0
    %v3566 = vand.u32 %v2964, 4294901760
    %3567 = vmatpush1.xpose.msra.mxu0 %v3566
    %3568 = vmatprep.subr.mxu0 0.0
    %v3569 = vand.u32 %v2967, 4294901760
    %3570 = vmatpush1.xpose.msra.mxu0 %v3569
    %3571 = vmatprep.subr.mxu0 0.0
    %v3572 = vand.u32 %v2970, 4294901760
    %3573 = vmatpush1.xpose.msra.mxu0 %v3572
    %3574 = vmatprep.subr.mxu0 0.0
    %v3575 = vand.u32 %v2973, 4294901760
    %3576 = vmatpush1.xpose.msra.mxu0 %v3575
    %3577 = vmatprep.subr.mxu0 0.0
    %3578 = vmatpush1.xpose.msra.mxu0 0.0
    %3579 = vmatprep.subr.mxu0 0.0
    %3580 = vmatpush1.xpose.msra.mxu0 0.0
    %3581 = vmatprep.subr.mxu0 0.0
    %3582 = vmatpush1.xpose.msra.mxu0 0.0
    %3583 = vmatprep.subr.mxu0 0.0
    %3584 = vmatpush1.xpose.msra.mxu0 0.0
    %3585 = vmatprep.subr.mxu0 0.0
    %3586 = vmatpush1.xpose.msra.mxu0 0.0
    %3587 = vmatprep.subr.mxu0 0.0
    %3588 = vmatpush1.xpose.msra.mxu0 0.0
    %3589 = vmatprep.subr.mxu0 0.0
    %3590 = vmatpush1.xpose.msra.mxu0 0.0
    %3591 = vmatprep.subr.mxu0 0.0
    %3592 = vmatpush1.xpose.msra.mxu0 0.0
    %3593 = vmatprep.subr.mxu0 0.0
    %3594 = vmatpush1.xpose.msra.mxu0 0.0
    %3595 = vmatprep.subr.mxu0 0.0
    %3596 = vmatpush1.xpose.msra.mxu0 0.0
    %3597 = vmatprep.subr.mxu0 0.0
    %3598 = vmatpush1.xpose.msra.mxu0 0.0
    %3599 = vmatprep.subr.mxu0 0.0
    %3600 = vmatpush1.xpose.msra.mxu0 0.0
    %3601 = vmatprep.subr.mxu0 0.0
    %3602 = vmatpush1.xpose.msra.mxu0 0.0
    %3603 = vmatprep.subr.mxu0 0.0
    %3604 = vmatpush1.xpose.msra.mxu0 0.0
    %3605 = vmatprep.subr.mxu0 0.0
    %3606 = vmatpush1.xpose.msra.mxu0 0.0
    %3607 = vmatprep.subr.mxu0 0.0
    %3608 = vmatpush1.xpose.msra.mxu0 0.0
    %3609 = vmatprep.mubr.f32.mxu0 0.0
    %v3610 = vand.u32 %v2925, 4294901760
    %3611 = vmatmul.mubr.f32.gmra.mrb[0].mxu0 %v3610
    %v3612 = vpop.f32.mrb[0].mxu0
    %v3613 = vadd.f32 %v3526, %v3612
    %v3614 = vpop.f32.mrb[0].mxu0
    %3615 = vdwg.mxu0
    %v3617 = vsel %vm155, %v152, 0
    %v3620 = vsel %vm155, %v99, 0
    %v3623 = vsel %vm155, %v100, 0
    %v3626 = vsel %vm155, %v101, 0
    %v3629 = vsel %vm155, %v102, 0
    %v3632 = vsel %vm155, %v103, 0
    %v3635 = vsel %vm155, %v104, 0
    %v3638 = vsel %vm155, %v105, 0
    %v3641 = vsel %vm155, %v106, 0
    %v3644 = vsel %vm155, %v107, 0
    %v3647 = vsel %vm155, %v108, 0
    %v3650 = vsel %vm155, %v109, 0
    %v3653 = vsel %vm155, %v110, 0
    %v3656 = vsel %vm155, %v111, 0
    %v3659 = vsel %vm155, %v112, 0
    %v3662 = vsel %vm155, %v113, 0
    %v3665 = vsel %vm155, %v114, 0
    %3667 = vmatprep.subr.mxu0 0.0
    %v3668 = vand.u32 %v3620, 4294901760
    %3669 = vmatpush1.xpose.msra.mxu0 %v3668
    %3670 = vmatprep.subr.mxu0 0.0
    %v3671 = vand.u32 %v3623, 4294901760
    %3672 = vmatpush1.xpose.msra.mxu0 %v3671
    %3673 = vmatprep.subr.mxu0 0.0
    %v3674 = vand.u32 %v3626, 4294901760
    %3675 = vmatpush1.xpose.msra.mxu0 %v3674
    %3676 = vmatprep.subr.mxu0 0.0
    %v3677 = vand.u32 %v3629, 4294901760
    %3678 = vmatpush1.xpose.msra.mxu0 %v3677
    %3679 = vmatprep.subr.mxu0 0.0
    %v3680 = vand.u32 %v3632, 4294901760
    %3681 = vmatpush1.xpose.msra.mxu0 %v3680
    %3682 = vmatprep.subr.mxu0 0.0
    %v3683 = vand.u32 %v3635, 4294901760
    %3684 = vmatpush1.xpose.msra.mxu0 %v3683
    %3685 = vmatprep.subr.mxu0 0.0
    %v3686 = vand.u32 %v3638, 4294901760
    %3687 = vmatpush1.xpose.msra.mxu0 %v3686
    %3688 = vmatprep.subr.mxu0 0.0
    %v3689 = vand.u32 %v3641, 4294901760
    %3690 = vmatpush1.xpose.msra.mxu0 %v3689
    %3691 = vmatprep.subr.mxu0 0.0
    %v3692 = vand.u32 %v3644, 4294901760
    %3693 = vmatpush1.xpose.msra.mxu0 %v3692
    %3694 = vmatprep.subr.mxu0 0.0
    %v3695 = vand.u32 %v3647, 4294901760
    %3696 = vmatpush1.xpose.msra.mxu0 %v3695
    %3697 = vmatprep.subr.mxu0 0.0
    %v3698 = vand.u32 %v3650, 4294901760
    %3699 = vmatpush1.xpose.msra.mxu0 %v3698
    %3700 = vmatprep.subr.mxu0 0.0
    %v3701 = vand.u32 %v3653, 4294901760
    %3702 = vmatpush1.xpose.msra.mxu0 %v3701
    %3703 = vmatprep.subr.mxu0 0.0
    %v3704 = vand.u32 %v3656, 4294901760
    %3705 = vmatpush1.xpose.msra.mxu0 %v3704
    %3706 = vmatprep.subr.mxu0 0.0
    %v3707 = vand.u32 %v3659, 4294901760
    %3708 = vmatpush1.xpose.msra.mxu0 %v3707
    %3709 = vmatprep.subr.mxu0 0.0
    %v3710 = vand.u32 %v3662, 4294901760
    %3711 = vmatpush1.xpose.msra.mxu0 %v3710
    %3712 = vmatprep.subr.mxu0 0.0
    %v3713 = vand.u32 %v3665, 4294901760
    %3714 = vmatpush1.xpose.msra.mxu0 %v3713
    %3715 = vmatprep.subr.mxu0 0.0
    %3716 = vmatpush1.xpose.msra.mxu0 0.0
    %3717 = vmatprep.subr.mxu0 0.0
    %3718 = vmatpush1.xpose.msra.mxu0 0.0
    %3719 = vmatprep.subr.mxu0 0.0
    %3720 = vmatpush1.xpose.msra.mxu0 0.0
    %3721 = vmatprep.subr.mxu0 0.0
    %3722 = vmatpush1.xpose.msra.mxu0 0.0
    %3723 = vmatprep.subr.mxu0 0.0
    %3724 = vmatpush1.xpose.msra.mxu0 0.0
    %3725 = vmatprep.subr.mxu0 0.0
    %3726 = vmatpush1.xpose.msra.mxu0 0.0
    %3727 = vmatprep.subr.mxu0 0.0
    %3728 = vmatpush1.xpose.msra.mxu0 0.0
    %3729 = vmatprep.subr.mxu0 0.0
    %3730 = vmatpush1.xpose.msra.mxu0 0.0
    %3731 = vmatprep.subr.mxu0 0.0
    %3732 = vmatpush1.xpose.msra.mxu0 0.0
    %3733 = vmatprep.subr.mxu0 0.0
    %3734 = vmatpush1.xpose.msra.mxu0 0.0
    %3735 = vmatprep.subr.mxu0 0.0
    %3736 = vmatpush1.xpose.msra.mxu0 0.0
    %3737 = vmatprep.subr.mxu0 0.0
    %3738 = vmatpush1.xpose.msra.mxu0 0.0
    %3739 = vmatprep.subr.mxu0 0.0
    %3740 = vmatpush1.xpose.msra.mxu0 0.0
    %3741 = vmatprep.subr.mxu0 0.0
    %3742 = vmatpush1.xpose.msra.mxu0 0.0
    %3743 = vmatprep.subr.mxu0 0.0
    %3744 = vmatpush1.xpose.msra.mxu0 0.0
    %3745 = vmatprep.subr.mxu0 0.0
    %3746 = vmatpush1.xpose.msra.mxu0 0.0
    %3747 = vmatprep.mubr.f32.mxu0 0.0
    %v3748 = vand.u32 %v3617, 4294901760
    %v3749 = vsub.f32 %v3617, %v3748
    %v3750 = vand.u32 %v3749, 4294901760
    %v3751 = vsub.f32 %v3749, %v3750
    %v3752 = vand.u32 %v3751, 4294901760
    %3753 = vmatmul.mubr.f32.gmra.mrb[0].mxu0 %v3752
    %v3754 = vpop.f32.mrb[0].mxu0
    %v3755 = vadd.f32 0.0, %v3754
    %v3756 = vpop.f32.mrb[0].mxu0
    %3757 = vdwg.mxu0
    %3758 = vmatprep.subr.mxu0 0.0
    %v3759 = vand.u32 %v3620, 4294901760
    %v3760 = vsub.f32 %v3620, %v3759
    %v3761 = vand.u32 %v3760, 4294901760
    %v3762 = vsub.f32 %v3760, %v3761
    %v3763 = vand.u32 %v3762, 4294901760
    %3764 = vmatpush1.xpose.msra.mxu0 %v3763
    %3765 = vmatprep.subr.mxu0 0.0
    %v3766 = vand.u32 %v3623, 4294901760
    %v3767 = vsub.f32 %v3623, %v3766
    %v3768 = vand.u32 %v3767, 4294901760
    %v3769 = vsub.f32 %v3767, %v3768
    %v3770 = vand.u32 %v3769, 4294901760
    %3771 = vmatpush1.xpose.msra.mxu0 %v3770
    %3772 = vmatprep.subr.mxu0 0.0
    %v3773 = vand.u32 %v3626, 4294901760
    %v3774 = vsub.f32 %v3626, %v3773
    %v3775 = vand.u32 %v3774, 4294901760
    %v3776 = vsub.f32 %v3774, %v3775
    %v3777 = vand.u32 %v3776, 4294901760
    %3778 = vmatpush1.xpose.msra.mxu0 %v3777
    %3779 = vmatprep.subr.mxu0 0.0
    %v3780 = vand.u32 %v3629, 4294901760
    %v3781 = vsub.f32 %v3629, %v3780
    %v3782 = vand.u32 %v3781, 4294901760
    %v3783 = vsub.f32 %v3781, %v3782
    %v3784 = vand.u32 %v3783, 4294901760
    %3785 = vmatpush1.xpose.msra.mxu0 %v3784
    %3786 = vmatprep.subr.mxu0 0.0
    %v3787 = vand.u32 %v3632, 4294901760
    %v3788 = vsub.f32 %v3632, %v3787
    %v3789 = vand.u32 %v3788, 4294901760
    %v3790 = vsub.f32 %v3788, %v3789
    %v3791 = vand.u32 %v3790, 4294901760
    %3792 = vmatpush1.xpose.msra.mxu0 %v3791
    %3793 = vmatprep.subr.mxu0 0.0
    %v3794 = vand.u32 %v3635, 4294901760
    %v3795 = vsub.f32 %v3635, %v3794
    %v3796 = vand.u32 %v3795, 4294901760
    %v3797 = vsub.f32 %v3795, %v3796
    %v3798 = vand.u32 %v3797, 4294901760
    %3799 = vmatpush1.xpose.msra.mxu0 %v3798
    %3800 = vmatprep.subr.mxu0 0.0
    %v3801 = vand.u32 %v3638, 4294901760
    %v3802 = vsub.f32 %v3638, %v3801
    %v3803 = vand.u32 %v3802, 4294901760
    %v3804 = vsub.f32 %v3802, %v3803
    %v3805 = vand.u32 %v3804, 4294901760
    %3806 = vmatpush1.xpose.msra.mxu0 %v3805
    %3807 = vmatprep.subr.mxu0 0.0
    %v3808 = vand.u32 %v3641, 4294901760
    %v3809 = vsub.f32 %v3641, %v3808
    %v3810 = vand.u32 %v3809, 4294901760
    %v3811 = vsub.f32 %v3809, %v3810
    %v3812 = vand.u32 %v3811, 4294901760
    %3813 = vmatpush1.xpose.msra.mxu0 %v3812
    %3814 = vmatprep.subr.mxu0 0.0
    %v3815 = vand.u32 %v3644, 4294901760
    %v3816 = vsub.f32 %v3644, %v3815
    %v3817 = vand.u32 %v3816, 4294901760
    %v3818 = vsub.f32 %v3816, %v3817
    %v3819 = vand.u32 %v3818, 4294901760
    %3820 = vmatpush1.xpose.msra.mxu0 %v3819
    %3821 = vmatprep.subr.mxu0 0.0
    %v3822 = vand.u32 %v3647, 4294901760
    %v3823 = vsub.f32 %v3647, %v3822
    %v3824 = vand.u32 %v3823, 4294901760
    %v3825 = vsub.f32 %v3823, %v3824
    %v3826 = vand.u32 %v3825, 4294901760
    %3827 = vmatpush1.xpose.msra.mxu0 %v3826
    %3828 = vmatprep.subr.mxu0 0.0
    %v3829 = vand.u32 %v3650, 4294901760
    %v3830 = vsub.f32 %v3650, %v3829
    %v3831 = vand.u32 %v3830, 4294901760
    %v3832 = vsub.f32 %v3830, %v3831
    %v3833 = vand.u32 %v3832, 4294901760
    %3834 = vmatpush1.xpose.msra.mxu0 %v3833
    %3835 = vmatprep.subr.mxu0 0.0
    %v3836 = vand.u32 %v3653, 4294901760
    %v3837 = vsub.f32 %v3653, %v3836
    %v3838 = vand.u32 %v3837, 4294901760
    %v3839 = vsub.f32 %v3837, %v3838
    %v3840 = vand.u32 %v3839, 4294901760
    %3841 = vmatpush1.xpose.msra.mxu0 %v3840
    %3842 = vmatprep.subr.mxu0 0.0
    %v3843 = vand.u32 %v3656, 4294901760
    %v3844 = vsub.f32 %v3656, %v3843
    %v3845 = vand.u32 %v3844, 4294901760
    %v3846 = vsub.f32 %v3844, %v3845
    %v3847 = vand.u32 %v3846, 4294901760
    %3848 = vmatpush1.xpose.msra.mxu0 %v3847
    %3849 = vmatprep.subr.mxu0 0.0
    %v3850 = vand.u32 %v3659, 4294901760
    %v3851 = vsub.f32 %v3659, %v3850
    %v3852 = vand.u32 %v3851, 4294901760
    %v3853 = vsub.f32 %v3851, %v3852
    %v3854 = vand.u32 %v3853, 4294901760
    %3855 = vmatpush1.xpose.msra.mxu0 %v3854
    %3856 = vmatprep.subr.mxu0 0.0
    %v3857 = vand.u32 %v3662, 4294901760
    %v3858 = vsub.f32 %v3662, %v3857
    %v3859 = vand.u32 %v3858, 4294901760
    %v3860 = vsub.f32 %v3858, %v3859
    %v3861 = vand.u32 %v3860, 4294901760
    %3862 = vmatpush1.xpose.msra.mxu0 %v3861
    %3863 = vmatprep.subr.mxu0 0.0
    %v3864 = vand.u32 %v3665, 4294901760
    %v3865 = vsub.f32 %v3665, %v3864
    %v3866 = vand.u32 %v3865, 4294901760
    %v3867 = vsub.f32 %v3865, %v3866
    %v3868 = vand.u32 %v3867, 4294901760
    %3869 = vmatpush1.xpose.msra.mxu0 %v3868
    %3870 = vmatprep.subr.mxu0 0.0
    %3871 = vmatpush1.xpose.msra.mxu0 0.0
    %3872 = vmatprep.subr.mxu0 0.0
    %3873 = vmatpush1.xpose.msra.mxu0 0.0
    %3874 = vmatprep.subr.mxu0 0.0
    %3875 = vmatpush1.xpose.msra.mxu0 0.0
    %3876 = vmatprep.subr.mxu0 0.0
    %3877 = vmatpush1.xpose.msra.mxu0 0.0
    %3878 = vmatprep.subr.mxu0 0.0
    %3879 = vmatpush1.xpose.msra.mxu0 0.0
    %3880 = vmatprep.subr.mxu0 0.0
    %3881 = vmatpush1.xpose.msra.mxu0 0.0
    %3882 = vmatprep.subr.mxu0 0.0
    %3883 = vmatpush1.xpose.msra.mxu0 0.0
    %3884 = vmatprep.subr.mxu0 0.0
    %3885 = vmatpush1.xpose.msra.mxu0 0.0
    %3886 = vmatprep.subr.mxu0 0.0
    %3887 = vmatpush1.xpose.msra.mxu0 0.0
    %3888 = vmatprep.subr.mxu0 0.0
    %3889 = vmatpush1.xpose.msra.mxu0 0.0
    %3890 = vmatprep.subr.mxu0 0.0
    %3891 = vmatpush1.xpose.msra.mxu0 0.0
    %3892 = vmatprep.subr.mxu0 0.0
    %3893 = vmatpush1.xpose.msra.mxu0 0.0
    %3894 = vmatprep.subr.mxu0 0.0
    %3895 = vmatpush1.xpose.msra.mxu0 0.0
    %3896 = vmatprep.subr.mxu0 0.0
    %3897 = vmatpush1.xpose.msra.mxu0 0.0
    %3898 = vmatprep.subr.mxu0 0.0
    %3899 = vmatpush1.xpose.msra.mxu0 0.0
    %3900 = vmatprep.subr.mxu0 0.0
    %3901 = vmatpush1.xpose.msra.mxu0 0.0
    %3902 = vmatprep.mubr.f32.mxu0 0.0
    %v3903 = vand.u32 %v3617, 4294901760
    %3904 = vmatmul.mubr.f32.gmra.mrb[0].mxu0 %v3903
    %v3905 = vpop.f32.mrb[0].mxu0
    %v3906 = vadd.f32 %v3755, %v3905
    %v3907 = vpop.f32.mrb[0].mxu0
    %3908 = vdwg.mxu0
    %3909 = vmatprep.subr.mxu0 0.0
    %v3910 = vand.u32 %v3620, 4294901760
    %v3911 = vsub.f32 %v3620, %v3910
    %3912 = vmatpush1.xpose.msra.mxu0 %v3911
    %3913 = vmatprep.subr.mxu0 0.0
    %v3914 = vand.u32 %v3623, 4294901760
    %v3915 = vsub.f32 %v3623, %v3914
    %3916 = vmatpush1.xpose.msra.mxu0 %v3915
    %3917 = vmatprep.subr.mxu0 0.0
    %v3918 = vand.u32 %v3626, 4294901760
    %v3919 = vsub.f32 %v3626, %v3918
    %3920 = vmatpush1.xpose.msra.mxu0 %v3919
    %3921 = vmatprep.subr.mxu0 0.0
    %v3922 = vand.u32 %v3629, 4294901760
    %v3923 = vsub.f32 %v3629, %v3922
    %3924 = vmatpush1.xpose.msra.mxu0 %v3923
    %3925 = vmatprep.subr.mxu0 0.0
    %v3926 = vand.u32 %v3632, 4294901760
    %v3927 = vsub.f32 %v3632, %v3926
    %3928 = vmatpush1.xpose.msra.mxu0 %v3927
    %3929 = vmatprep.subr.mxu0 0.0
    %v3930 = vand.u32 %v3635, 4294901760
    %v3931 = vsub.f32 %v3635, %v3930
    %3932 = vmatpush1.xpose.msra.mxu0 %v3931
    %3933 = vmatprep.subr.mxu0 0.0
    %v3934 = vand.u32 %v3638, 4294901760
    %v3935 = vsub.f32 %v3638, %v3934
    %3936 = vmatpush1.xpose.msra.mxu0 %v3935
    %3937 = vmatprep.subr.mxu0 0.0
    %v3938 = vand.u32 %v3641, 4294901760
    %v3939 = vsub.f32 %v3641, %v3938
    %3940 = vmatpush1.xpose.msra.mxu0 %v3939
    %3941 = vmatprep.subr.mxu0 0.0
    %v3942 = vand.u32 %v3644, 4294901760
    %v3943 = vsub.f32 %v3644, %v3942
    %3944 = vmatpush1.xpose.msra.mxu0 %v3943
    %3945 = vmatprep.subr.mxu0 0.0
    %v3946 = vand.u32 %v3647, 4294901760
    %v3947 = vsub.f32 %v3647, %v3946
    %3948 = vmatpush1.xpose.msra.mxu0 %v3947
    %3949 = vmatprep.subr.mxu0 0.0
    %v3950 = vand.u32 %v3650, 4294901760
    %v3951 = vsub.f32 %v3650, %v3950
    %3952 = vmatpush1.xpose.msra.mxu0 %v3951
    %3953 = vmatprep.subr.mxu0 0.0
    %v3954 = vand.u32 %v3653, 4294901760
    %v3955 = vsub.f32 %v3653, %v3954
    %3956 = vmatpush1.xpose.msra.mxu0 %v3955
    %3957 = vmatprep.subr.mxu0 0.0
    %v3958 = vand.u32 %v3656, 4294901760
    %v3959 = vsub.f32 %v3656, %v3958
    %3960 = vmatpush1.xpose.msra.mxu0 %v3959
    %3961 = vmatprep.subr.mxu0 0.0
    %v3962 = vand.u32 %v3659, 4294901760
    %v3963 = vsub.f32 %v3659, %v3962
    %3964 = vmatpush1.xpose.msra.mxu0 %v3963
    %3965 = vmatprep.subr.mxu0 0.0
    %v3966 = vand.u32 %v3662, 4294901760
    %v3967 = vsub.f32 %v3662, %v3966
    %3968 = vmatpush1.xpose.msra.mxu0 %v3967
    %3969 = vmatprep.subr.mxu0 0.0
    %v3970 = vand.u32 %v3665, 4294901760
    %v3971 = vsub.f32 %v3665, %v3970
    %3972 = vmatpush1.xpose.msra.mxu0 %v3971
    %3973 = vmatprep.subr.mxu0 0.0
    %3974 = vmatpush1.xpose.msra.mxu0 0.0
    %3975 = vmatprep.subr.mxu0 0.0
    %3976 = vmatpush1.xpose.msra.mxu0 0.0
    %3977 = vmatprep.subr.mxu0 0.0
    %3978 = vmatpush1.xpose.msra.mxu0 0.0
    %3979 = vmatprep.subr.mxu0 0.0
    %3980 = vmatpush1.xpose.msra.mxu0 0.0
    %3981 = vmatprep.subr.mxu0 0.0
    %3982 = vmatpush1.xpose.msra.mxu0 0.0
    %3983 = vmatprep.subr.mxu0 0.0
    %3984 = vmatpush1.xpose.msra.mxu0 0.0
    %3985 = vmatprep.subr.mxu0 0.0
    %3986 = vmatpush1.xpose.msra.mxu0 0.0
    %3987 = vmatprep.subr.mxu0 0.0
    %3988 = vmatpush1.xpose.msra.mxu0 0.0
    %3989 = vmatprep.subr.mxu0 0.0
    %3990 = vmatpush1.xpose.msra.mxu0 0.0
    %3991 = vmatprep.subr.mxu0 0.0
    %3992 = vmatpush1.xpose.msra.mxu0 0.0
    %3993 = vmatprep.subr.mxu0 0.0
    %3994 = vmatpush1.xpose.msra.mxu0 0.0
    %3995 = vmatprep.subr.mxu0 0.0
    %3996 = vmatpush1.xpose.msra.mxu0 0.0
    %3997 = vmatprep.subr.mxu0 0.0
    %3998 = vmatpush1.xpose.msra.mxu0 0.0
    %3999 = vmatprep.subr.mxu0 0.0
    %4000 = vmatpush1.xpose.msra.mxu0 0.0
    %4001 = vmatprep.subr.mxu0 0.0
    %4002 = vmatpush1.xpose.msra.mxu0 0.0
    %4003 = vmatprep.subr.mxu0 0.0
    %4004 = vmatpush1.xpose.msra.mxu0 0.0
    %4005 = vmatprep.mubr.f32.mxu0 0.0
    %v4006 = vand.u32 %v3617, 4294901760
    %v4007 = vsub.f32 %v3617, %v4006
    %4008 = vmatmul.mubr.f32.gmra.mrb[0].mxu0 %v4007
    %v4009 = vpop.f32.mrb[0].mxu0
    %v4010 = vadd.f32 %v3906, %v4009
    %v4011 = vpop.f32.mrb[0].mxu0
    %4012 = vdwg.mxu0
    %4013 = vmatprep.subr.mxu0 0.0
    %v4014 = vand.u32 %v3620, 4294901760
    %4015 = vmatpush1.xpose.msra.mxu0 %v4014
    %4016 = vmatprep.subr.mxu0 0.0
    %v4017 = vand.u32 %v3623, 4294901760
    %4018 = vmatpush1.xpose.msra.mxu0 %v4017
    %4019 = vmatprep.subr.mxu0 0.0
    %v4020 = vand.u32 %v3626, 4294901760
    %4021 = vmatpush1.xpose.msra.mxu0 %v4020
    %4022 = vmatprep.subr.mxu0 0.0
    %v4023 = vand.u32 %v3629, 4294901760
    %4024 = vmatpush1.xpose.msra.mxu0 %v4023
    %4025 = vmatprep.subr.mxu0 0.0
    %v4026 = vand.u32 %v3632, 4294901760
    %4027 = vmatpush1.xpose.msra.mxu0 %v4026
    %4028 = vmatprep.subr.mxu0 0.0
    %v4029 = vand.u32 %v3635, 4294901760
    %4030 = vmatpush1.xpose.msra.mxu0 %v4029
    %4031 = vmatprep.subr.mxu0 0.0
    %v4032 = vand.u32 %v3638, 4294901760
    %4033 = vmatpush1.xpose.msra.mxu0 %v4032
    %4034 = vmatprep.subr.mxu0 0.0
    %v4035 = vand.u32 %v3641, 4294901760
    %4036 = vmatpush1.xpose.msra.mxu0 %v4035
    %4037 = vmatprep.subr.mxu0 0.0
    %v4038 = vand.u32 %v3644, 4294901760
    %4039 = vmatpush1.xpose.msra.mxu0 %v4038
    %4040 = vmatprep.subr.mxu0 0.0
    %v4041 = vand.u32 %v3647, 4294901760
    %4042 = vmatpush1.xpose.msra.mxu0 %v4041
    %4043 = vmatprep.subr.mxu0 0.0
    %v4044 = vand.u32 %v3650, 4294901760
    %4045 = vmatpush1.xpose.msra.mxu0 %v4044
    %4046 = vmatprep.subr.mxu0 0.0
    %v4047 = vand.u32 %v3653, 4294901760
    %4048 = vmatpush1.xpose.msra.mxu0 %v4047
    %4049 = vmatprep.subr.mxu0 0.0
    %v4050 = vand.u32 %v3656, 4294901760
    %4051 = vmatpush1.xpose.msra.mxu0 %v4050
    %4052 = vmatprep.subr.mxu0 0.0
    %v4053 = vand.u32 %v3659, 4294901760
    %4054 = vmatpush1.xpose.msra.mxu0 %v4053
    %4055 = vmatprep.subr.mxu0 0.0
    %v4056 = vand.u32 %v3662, 4294901760
    %4057 = vmatpush1.xpose.msra.mxu0 %v4056
    %4058 = vmatprep.subr.mxu0 0.0
    %v4059 = vand.u32 %v3665, 4294901760
    %4060 = vmatpush1.xpose.msra.mxu0 %v4059
    %4061 = vmatprep.subr.mxu0 0.0
    %4062 = vmatpush1.xpose.msra.mxu0 0.0
    %4063 = vmatprep.subr.mxu0 0.0
    %4064 = vmatpush1.xpose.msra.mxu0 0.0
    %4065 = vmatprep.subr.mxu0 0.0
    %4066 = vmatpush1.xpose.msra.mxu0 0.0
    %4067 = vmatprep.subr.mxu0 0.0
    %4068 = vmatpush1.xpose.msra.mxu0 0.0
    %4069 = vmatprep.subr.mxu0 0.0
    %4070 = vmatpush1.xpose.msra.mxu0 0.0
    %4071 = vmatprep.subr.mxu0 0.0
    %4072 = vmatpush1.xpose.msra.mxu0 0.0
    %4073 = vmatprep.subr.mxu0 0.0
    %4074 = vmatpush1.xpose.msra.mxu0 0.0
    %4075 = vmatprep.subr.mxu0 0.0
    %4076 = vmatpush1.xpose.msra.mxu0 0.0
    %4077 = vmatprep.subr.mxu0 0.0
    %4078 = vmatpush1.xpose.msra.mxu0 0.0
    %4079 = vmatprep.subr.mxu0 0.0
    %4080 = vmatpush1.xpose.msra.mxu0 0.0
    %4081 = vmatprep.subr.mxu0 0.0
    %4082 = vmatpush1.xpose.msra.mxu0 0.0
    %4083 = vmatprep.subr.mxu0 0.0
    %4084 = vmatpush1.xpose.msra.mxu0 0.0
    %4085 = vmatprep.subr.mxu0 0.0
    %4086 = vmatpush1.xpose.msra.mxu0 0.0
    %4087 = vmatprep.subr.mxu0 0.0
    %4088 = vmatpush1.xpose.msra.mxu0 0.0
    %4089 = vmatprep.subr.mxu0 0.0
    %4090 = vmatpush1.xpose.msra.mxu0 0.0
    %4091 = vmatprep.subr.mxu0 0.0
    %4092 = vmatpush1.xpose.msra.mxu0 0.0
    %4093 = vmatprep.mubr.f32.mxu0 0.0
    %v4094 = vand.u32 %v3617, 4294901760
    %v4095 = vsub.f32 %v3617, %v4094
    %v4096 = vand.u32 %v4095, 4294901760
    %4097 = vmatmul.mubr.f32.gmra.mrb[0].mxu0 %v4096
    %v4098 = vpop.f32.mrb[0].mxu0
    %v4099 = vadd.f32 %v4010, %v4098
    %v4100 = vpop.f32.mrb[0].mxu0
    %4101 = vdwg.mxu0
    %4102 = vmatprep.subr.mxu0 0.0
    %v4103 = vand.u32 %v3620, 4294901760
    %v4104 = vsub.f32 %v3620, %v4103
    %v4105 = vand.u32 %v4104, 4294901760
    %4106 = vmatpush1.xpose.msra.mxu0 %v4105
    %4107 = vmatprep.subr.mxu0 0.0
    %v4108 = vand.u32 %v3623, 4294901760
    %v4109 = vsub.f32 %v3623, %v4108
    %v4110 = vand.u32 %v4109, 4294901760
    %4111 = vmatpush1.xpose.msra.mxu0 %v4110
    %4112 = vmatprep.subr.mxu0 0.0
    %v4113 = vand.u32 %v3626, 4294901760
    %v4114 = vsub.f32 %v3626, %v4113
    %v4115 = vand.u32 %v4114, 4294901760
    %4116 = vmatpush1.xpose.msra.mxu0 %v4115
    %4117 = vmatprep.subr.mxu0 0.0
    %v4118 = vand.u32 %v3629, 4294901760
    %v4119 = vsub.f32 %v3629, %v4118
    %v4120 = vand.u32 %v4119, 4294901760
    %4121 = vmatpush1.xpose.msra.mxu0 %v4120
    %4122 = vmatprep.subr.mxu0 0.0
    %v4123 = vand.u32 %v3632, 4294901760
    %v4124 = vsub.f32 %v3632, %v4123
    %v4125 = vand.u32 %v4124, 4294901760
    %4126 = vmatpush1.xpose.msra.mxu0 %v4125
    %4127 = vmatprep.subr.mxu0 0.0
    %v4128 = vand.u32 %v3635, 4294901760
    %v4129 = vsub.f32 %v3635, %v4128
    %v4130 = vand.u32 %v4129, 4294901760
    %4131 = vmatpush1.xpose.msra.mxu0 %v4130
    %4132 = vmatprep.subr.mxu0 0.0
    %v4133 = vand.u32 %v3638, 4294901760
    %v4134 = vsub.f32 %v3638, %v4133
    %v4135 = vand.u32 %v4134, 4294901760
    %4136 = vmatpush1.xpose.msra.mxu0 %v4135
    %4137 = vmatprep.subr.mxu0 0.0
    %v4138 = vand.u32 %v3641, 4294901760
    %v4139 = vsub.f32 %v3641, %v4138
    %v4140 = vand.u32 %v4139, 4294901760
    %4141 = vmatpush1.xpose.msra.mxu0 %v4140
    %4142 = vmatprep.subr.mxu0 0.0
    %v4143 = vand.u32 %v3644, 4294901760
    %v4144 = vsub.f32 %v3644, %v4143
    %v4145 = vand.u32 %v4144, 4294901760
    %4146 = vmatpush1.xpose.msra.mxu0 %v4145
    %4147 = vmatprep.subr.mxu0 0.0
    %v4148 = vand.u32 %v3647, 4294901760
    %v4149 = vsub.f32 %v3647, %v4148
    %v4150 = vand.u32 %v4149, 4294901760
    %4151 = vmatpush1.xpose.msra.mxu0 %v4150
    %4152 = vmatprep.subr.mxu0 0.0
    %v4153 = vand.u32 %v3650, 4294901760
    %v4154 = vsub.f32 %v3650, %v4153
    %v4155 = vand.u32 %v4154, 4294901760
    %4156 = vmatpush1.xpose.msra.mxu0 %v4155
    %4157 = vmatprep.subr.mxu0 0.0
    %v4158 = vand.u32 %v3653, 4294901760
    %v4159 = vsub.f32 %v3653, %v4158
    %v4160 = vand.u32 %v4159, 4294901760
    %4161 = vmatpush1.xpose.msra.mxu0 %v4160
    %4162 = vmatprep.subr.mxu0 0.0
    %v4163 = vand.u32 %v3656, 4294901760
    %v4164 = vsub.f32 %v3656, %v4163
    %v4165 = vand.u32 %v4164, 4294901760
    %4166 = vmatpush1.xpose.msra.mxu0 %v4165
    %4167 = vmatprep.subr.mxu0 0.0
    %v4168 = vand.u32 %v3659, 4294901760
    %v4169 = vsub.f32 %v3659, %v4168
    %v4170 = vand.u32 %v4169, 4294901760
    %4171 = vmatpush1.xpose.msra.mxu0 %v4170
    %4172 = vmatprep.subr.mxu0 0.0
    %v4173 = vand.u32 %v3662, 4294901760
    %v4174 = vsub.f32 %v3662, %v4173
    %v4175 = vand.u32 %v4174, 4294901760
    %4176 = vmatpush1.xpose.msra.mxu0 %v4175
    %4177 = vmatprep.subr.mxu0 0.0
    %v4178 = vand.u32 %v3665, 4294901760
    %v4179 = vsub.f32 %v3665, %v4178
    %v4180 = vand.u32 %v4179, 4294901760
    %4181 = vmatpush1.xpose.msra.mxu0 %v4180
    %4182 = vmatprep.subr.mxu0 0.0
    %4183 = vmatpush1.xpose.msra.mxu0 0.0
    %4184 = vmatprep.subr.mxu0 0.0
    %4185 = vmatpush1.xpose.msra.mxu0 0.0
    %4186 = vmatprep.subr.mxu0 0.0
    %4187 = vmatpush1.xpose.msra.mxu0 0.0
    %4188 = vmatprep.subr.mxu0 0.0
    %4189 = vmatpush1.xpose.msra.mxu0 0.0
    %4190 = vmatprep.subr.mxu0 0.0
    %4191 = vmatpush1.xpose.msra.mxu0 0.0
    %4192 = vmatprep.subr.mxu0 0.0
    %4193 = vmatpush1.xpose.msra.mxu0 0.0
    %4194 = vmatprep.subr.mxu0 0.0
    %4195 = vmatpush1.xpose.msra.mxu0 0.0
    %4196 = vmatprep.subr.mxu0 0.0
    %4197 = vmatpush1.xpose.msra.mxu0 0.0
    %4198 = vmatprep.subr.mxu0 0.0
    %4199 = vmatpush1.xpose.msra.mxu0 0.0
    %4200 = vmatprep.subr.mxu0 0.0
    %4201 = vmatpush1.xpose.msra.mxu0 0.0
    %4202 = vmatprep.subr.mxu0 0.0
    %4203 = vmatpush1.xpose.msra.mxu0 0.0
    %4204 = vmatprep.subr.mxu0 0.0
    %4205 = vmatpush1.xpose.msra.mxu0 0.0
    %4206 = vmatprep.subr.mxu0 0.0
    %4207 = vmatpush1.xpose.msra.mxu0 0.0
    %4208 = vmatprep.subr.mxu0 0.0
    %4209 = vmatpush1.xpose.msra.mxu0 0.0
    %4210 = vmatprep.subr.mxu0 0.0
    %4211 = vmatpush1.xpose.msra.mxu0 0.0
    %4212 = vmatprep.subr.mxu0 0.0
    %4213 = vmatpush1.xpose.msra.mxu0 0.0
    %4214 = vmatprep.mubr.f32.mxu0 0.0
    %v4215 = vand.u32 %v3617, 4294901760
    %4216 = vmatmul.mubr.f32.gmra.mrb[0].mxu0 %v4215
    %v4217 = vpop.f32.mrb[0].mxu0
    %v4218 = vadd.f32 %v4099, %v4217
    %v4219 = vpop.f32.mrb[0].mxu0
    %4220 = vdwg.mxu0
    %4221 = vmatprep.subr.mxu0 0.0
    %v4222 = vand.u32 %v3620, 4294901760
    %4223 = vmatpush1.xpose.msra.mxu0 %v4222
    %4224 = vmatprep.subr.mxu0 0.0
    %v4225 = vand.u32 %v3623, 4294901760
    %4226 = vmatpush1.xpose.msra.mxu0 %v4225
    %4227 = vmatprep.subr.mxu0 0.0
    %v4228 = vand.u32 %v3626, 4294901760
    %4229 = vmatpush1.xpose.msra.mxu0 %v4228
    %4230 = vmatprep.subr.mxu0 0.0
    %v4231 = vand.u32 %v3629, 4294901760
    %4232 = vmatpush1.xpose.msra.mxu0 %v4231
    %4233 = vmatprep.subr.mxu0 0.0
    %v4234 = vand.u32 %v3632, 4294901760
    %4235 = vmatpush1.xpose.msra.mxu0 %v4234
    %4236 = vmatprep.subr.mxu0 0.0
    %v4237 = vand.u32 %v3635, 4294901760
    %4238 = vmatpush1.xpose.msra.mxu0 %v4237
    %4239 = vmatprep.subr.mxu0 0.0
    %v4240 = vand.u32 %v3638, 4294901760
    %4241 = vmatpush1.xpose.msra.mxu0 %v4240
    %4242 = vmatprep.subr.mxu0 0.0
    %v4243 = vand.u32 %v3641, 4294901760
    %4244 = vmatpush1.xpose.msra.mxu0 %v4243
    %4245 = vmatprep.subr.mxu0 0.0
    %v4246 = vand.u32 %v3644, 4294901760
    %4247 = vmatpush1.xpose.msra.mxu0 %v4246
    %4248 = vmatprep.subr.mxu0 0.0
    %v4249 = vand.u32 %v3647, 4294901760
    %4250 = vmatpush1.xpose.msra.mxu0 %v4249
    %4251 = vmatprep.subr.mxu0 0.0
    %v4252 = vand.u32 %v3650, 4294901760
    %4253 = vmatpush1.xpose.msra.mxu0 %v4252
    %4254 = vmatprep.subr.mxu0 0.0
    %v4255 = vand.u32 %v3653, 4294901760
    %4256 = vmatpush1.xpose.msra.mxu0 %v4255
    %4257 = vmatprep.subr.mxu0 0.0
    %v4258 = vand.u32 %v3656, 4294901760
    %4259 = vmatpush1.xpose.msra.mxu0 %v4258
    %4260 = vmatprep.subr.mxu0 0.0
    %v4261 = vand.u32 %v3659, 4294901760
    %4262 = vmatpush1.xpose.msra.mxu0 %v4261
    %4263 = vmatprep.subr.mxu0 0.0
    %v4264 = vand.u32 %v3662, 4294901760
    %4265 = vmatpush1.xpose.msra.mxu0 %v4264
    %4266 = vmatprep.subr.mxu0 0.0
    %v4267 = vand.u32 %v3665, 4294901760
    %4268 = vmatpush1.xpose.msra.mxu0 %v4267
    %4269 = vmatprep.subr.mxu0 0.0
    %4270 = vmatpush1.xpose.msra.mxu0 0.0
    %4271 = vmatprep.subr.mxu0 0.0
    %4272 = vmatpush1.xpose.msra.mxu0 0.0
    %4273 = vmatprep.subr.mxu0 0.0
    %4274 = vmatpush1.xpose.msra.mxu0 0.0
    %4275 = vmatprep.subr.mxu0 0.0
    %4276 = vmatpush1.xpose.msra.mxu0 0.0
    %4277 = vmatprep.subr.mxu0 0.0
    %4278 = vmatpush1.xpose.msra.mxu0 0.0
    %4279 = vmatprep.subr.mxu0 0.0
    %4280 = vmatpush1.xpose.msra.mxu0 0.0
    %4281 = vmatprep.subr.mxu0 0.0
    %4282 = vmatpush1.xpose.msra.mxu0 0.0
    %4283 = vmatprep.subr.mxu0 0.0
    %4284 = vmatpush1.xpose.msra.mxu0 0.0
    %4285 = vmatprep.subr.mxu0 0.0
    %4286 = vmatpush1.xpose.msra.mxu0 0.0
    %4287 = vmatprep.subr.mxu0 0.0
    %4288 = vmatpush1.xpose.msra.mxu0 0.0
    %4289 = vmatprep.subr.mxu0 0.0
    %4290 = vmatpush1.xpose.msra.mxu0 0.0
    %4291 = vmatprep.subr.mxu0 0.0
    %4292 = vmatpush1.xpose.msra.mxu0 0.0
    %4293 = vmatprep.subr.mxu0 0.0
    %4294 = vmatpush1.xpose.msra.mxu0 0.0
    %4295 = vmatprep.subr.mxu0 0.0
    %4296 = vmatpush1.xpose.msra.mxu0 0.0
    %4297 = vmatprep.subr.mxu0 0.0
    %4298 = vmatpush1.xpose.msra.mxu0 0.0
    %4299 = vmatprep.subr.mxu0 0.0
    %4300 = vmatpush1.xpose.msra.mxu0 0.0
    %4301 = vmatprep.mubr.f32.mxu0 0.0
    %v4302 = vand.u32 %v3617, 4294901760
    %4303 = vmatmul.mubr.f32.gmra.mrb[0].mxu0 %v4302
    %v4304 = vpop.f32.mrb[0].mxu0
    %v4305 = vadd.f32 %v4218, %v4304
    %v4306 = vpop.f32.mrb[0].mxu0
    %4307 = vdwg.mxu0
    %v4309 = vsel %vm155, %v153, 0
    %v4312 = vsel %vm155, %v115, 0
    %v4315 = vsel %vm155, %v116, 0
    %v4318 = vsel %vm155, %v117, 0
    %v4321 = vsel %vm155, %v118, 0
    %v4324 = vsel %vm155, %v119, 0
    %v4327 = vsel %vm155, %v120, 0
    %v4330 = vsel %vm155, %v121, 0
    %v4333 = vsel %vm155, %v122, 0
    %v4336 = vsel %vm155, %v123, 0
    %v4339 = vsel %vm155, %v124, 0
    %v4342 = vsel %vm155, %v125, 0
    %v4345 = vsel %vm155, %v126, 0
    %v4348 = vsel %vm155, %v127, 0
    %v4351 = vsel %vm155, %v128, 0
    %v4354 = vsel %vm155, %v129, 0
    %v4357 = vsel %vm155, %v130, 0
    %4359 = vmatprep.subr.mxu0 0.0
    %v4360 = vand.u32 %v4312, 4294901760
    %4361 = vmatpush1.xpose.msra.mxu0 %v4360
    %4362 = vmatprep.subr.mxu0 0.0
    %v4363 = vand.u32 %v4315, 4294901760
    %4364 = vmatpush1.xpose.msra.mxu0 %v4363
    %4365 = vmatprep.subr.mxu0 0.0
    %v4366 = vand.u32 %v4318, 4294901760
    %4367 = vmatpush1.xpose.msra.mxu0 %v4366
    %4368 = vmatprep.subr.mxu0 0.0
    %v4369 = vand.u32 %v4321, 4294901760
    %4370 = vmatpush1.xpose.msra.mxu0 %v4369
    %4371 = vmatprep.subr.mxu0 0.0
    %v4372 = vand.u32 %v4324, 4294901760
    %4373 = vmatpush1.xpose.msra.mxu0 %v4372
    %4374 = vmatprep.subr.mxu0 0.0
    %v4375 = vand.u32 %v4327, 4294901760
    %4376 = vmatpush1.xpose.msra.mxu0 %v4375
    %4377 = vmatprep.subr.mxu0 0.0
    %v4378 = vand.u32 %v4330, 4294901760
    %4379 = vmatpush1.xpose.msra.mxu0 %v4378
    %4380 = vmatprep.subr.mxu0 0.0
    %v4381 = vand.u32 %v4333, 4294901760
    %4382 = vmatpush1.xpose.msra.mxu0 %v4381
    %4383 = vmatprep.subr.mxu0 0.0
    %v4384 = vand.u32 %v4336, 4294901760
    %4385 = vmatpush1.xpose.msra.mxu0 %v4384
    %4386 = vmatprep.subr.mxu0 0.0
    %v4387 = vand.u32 %v4339, 4294901760
    %4388 = vmatpush1.xpose.msra.mxu0 %v4387
    %4389 = vmatprep.subr.mxu0 0.0
    %v4390 = vand.u32 %v4342, 4294901760
    %4391 = vmatpush1.xpose.msra.mxu0 %v4390
    %4392 = vmatprep.subr.mxu0 0.0
    %v4393 = vand.u32 %v4345, 4294901760
    %4394 = vmatpush1.xpose.msra.mxu0 %v4393
    %4395 = vmatprep.subr.mxu0 0.0
    %v4396 = vand.u32 %v4348, 4294901760
    %4397 = vmatpush1.xpose.msra.mxu0 %v4396
    %4398 = vmatprep.subr.mxu0 0.0
    %v4399 = vand.u32 %v4351, 4294901760
    %4400 = vmatpush1.xpose.msra.mxu0 %v4399
    %4401 = vmatprep.subr.mxu0 0.0
    %v4402 = vand.u32 %v4354, 4294901760
    %4403 = vmatpush1.xpose.msra.mxu0 %v4402
    %4404 = vmatprep.subr.mxu0 0.0
    %v4405 = vand.u32 %v4357, 4294901760
    %4406 = vmatpush1.xpose.msra.mxu0 %v4405
    %4407 = vmatprep.subr.mxu0 0.0
    %4408 = vmatpush1.xpose.msra.mxu0 0.0
    %4409 = vmatprep.subr.mxu0 0.0
    %4410 = vmatpush1.xpose.msra.mxu0 0.0
    %4411 = vmatprep.subr.mxu0 0.0
    %4412 = vmatpush1.xpose.msra.mxu0 0.0
    %4413 = vmatprep.subr.mxu0 0.0
    %4414 = vmatpush1.xpose.msra.mxu0 0.0
    %4415 = vmatprep.subr.mxu0 0.0
    %4416 = vmatpush1.xpose.msra.mxu0 0.0
    %4417 = vmatprep.subr.mxu0 0.0
    %4418 = vmatpush1.xpose.msra.mxu0 0.0
    %4419 = vmatprep.subr.mxu0 0.0
    %4420 = vmatpush1.xpose.msra.mxu0 0.0
    %4421 = vmatprep.subr.mxu0 0.0
    %4422 = vmatpush1.xpose.msra.mxu0 0.0
    %4423 = vmatprep.subr.mxu0 0.0
    %4424 = vmatpush1.xpose.msra.mxu0 0.0
    %4425 = vmatprep.subr.mxu0 0.0
    %4426 = vmatpush1.xpose.msra.mxu0 0.0
    %4427 = vmatprep.subr.mxu0 0.0
    %4428 = vmatpush1.xpose.msra.mxu0 0.0
    %4429 = vmatprep.subr.mxu0 0.0
    %4430 = vmatpush1.xpose.msra.mxu0 0.0
    %4431 = vmatprep.subr.mxu0 0.0
    %4432 = vmatpush1.xpose.msra.mxu0 0.0
    %4433 = vmatprep.subr.mxu0 0.0
    %4434 = vmatpush1.xpose.msra.mxu0 0.0
    %4435 = vmatprep.subr.mxu0 0.0
    %4436 = vmatpush1.xpose.msra.mxu0 0.0
    %4437 = vmatprep.subr.mxu0 0.0
    %4438 = vmatpush1.xpose.msra.mxu0 0.0
    %4439 = vmatprep.mubr.f32.mxu0 0.0
    %v4440 = vand.u32 %v4309, 4294901760
    %v4441 = vsub.f32 %v4309, %v4440
    %v4442 = vand.u32 %v4441, 4294901760
    %v4443 = vsub.f32 %v4441, %v4442
    %v4444 = vand.u32 %v4443, 4294901760
    %4445 = vmatmul.mubr.f32.gmra.mrb[0].mxu0 %v4444
    %v4446 = vpop.f32.mrb[0].mxu0
    %v4447 = vadd.f32 0.0, %v4446
    %v4448 = vpop.f32.mrb[0].mxu0
    %4449 = vdwg.mxu0
    %4450 = vmatprep.subr.mxu0 0.0
    %v4451 = vand.u32 %v4312, 4294901760
    %v4452 = vsub.f32 %v4312, %v4451
    %v4453 = vand.u32 %v4452, 4294901760
    %v4454 = vsub.f32 %v4452, %v4453
    %v4455 = vand.u32 %v4454, 4294901760
    %4456 = vmatpush1.xpose.msra.mxu0 %v4455
    %4457 = vmatprep.subr.mxu0 0.0
    %v4458 = vand.u32 %v4315, 4294901760
    %v4459 = vsub.f32 %v4315, %v4458
    %v4460 = vand.u32 %v4459, 4294901760
    %v4461 = vsub.f32 %v4459, %v4460
    %v4462 = vand.u32 %v4461, 4294901760
    %4463 = vmatpush1.xpose.msra.mxu0 %v4462
    %4464 = vmatprep.subr.mxu0 0.0
    %v4465 = vand.u32 %v4318, 4294901760
    %v4466 = vsub.f32 %v4318, %v4465
    %v4467 = vand.u32 %v4466, 4294901760
    %v4468 = vsub.f32 %v4466, %v4467
    %v4469 = vand.u32 %v4468, 4294901760
    %4470 = vmatpush1.xpose.msra.mxu0 %v4469
    %4471 = vmatprep.subr.mxu0 0.0
    %v4472 = vand.u32 %v4321, 4294901760
    %v4473 = vsub.f32 %v4321, %v4472
    %v4474 = vand.u32 %v4473, 4294901760
    %v4475 = vsub.f32 %v4473, %v4474
    %v4476 = vand.u32 %v4475, 4294901760
    %4477 = vmatpush1.xpose.msra.mxu0 %v4476
    %4478 = vmatprep.subr.mxu0 0.0
    %v4479 = vand.u32 %v4324, 4294901760
    %v4480 = vsub.f32 %v4324, %v4479
    %v4481 = vand.u32 %v4480, 4294901760
    %v4482 = vsub.f32 %v4480, %v4481
    %v4483 = vand.u32 %v4482, 4294901760
    %4484 = vmatpush1.xpose.msra.mxu0 %v4483
    %4485 = vmatprep.subr.mxu0 0.0
    %v4486 = vand.u32 %v4327, 4294901760
    %v4487 = vsub.f32 %v4327, %v4486
    %v4488 = vand.u32 %v4487, 4294901760
    %v4489 = vsub.f32 %v4487, %v4488
    %v4490 = vand.u32 %v4489, 4294901760
    %4491 = vmatpush1.xpose.msra.mxu0 %v4490
    %4492 = vmatprep.subr.mxu0 0.0
    %v4493 = vand.u32 %v4330, 4294901760
    %v4494 = vsub.f32 %v4330, %v4493
    %v4495 = vand.u32 %v4494, 4294901760
    %v4496 = vsub.f32 %v4494, %v4495
    %v4497 = vand.u32 %v4496, 4294901760
    %4498 = vmatpush1.xpose.msra.mxu0 %v4497
    %4499 = vmatprep.subr.mxu0 0.0
    %v4500 = vand.u32 %v4333, 4294901760
    %v4501 = vsub.f32 %v4333, %v4500
    %v4502 = vand.u32 %v4501, 4294901760
    %v4503 = vsub.f32 %v4501, %v4502
    %v4504 = vand.u32 %v4503, 4294901760
    %4505 = vmatpush1.xpose.msra.mxu0 %v4504
    %4506 = vmatprep.subr.mxu0 0.0
    %v4507 = vand.u32 %v4336, 4294901760
    %v4508 = vsub.f32 %v4336, %v4507
    %v4509 = vand.u32 %v4508, 4294901760
    %v4510 = vsub.f32 %v4508, %v4509
    %v4511 = vand.u32 %v4510, 4294901760
    %4512 = vmatpush1.xpose.msra.mxu0 %v4511
    %4513 = vmatprep.subr.mxu0 0.0
    %v4514 = vand.u32 %v4339, 4294901760
    %v4515 = vsub.f32 %v4339, %v4514
    %v4516 = vand.u32 %v4515, 4294901760
    %v4517 = vsub.f32 %v4515, %v4516
    %v4518 = vand.u32 %v4517, 4294901760
    %4519 = vmatpush1.xpose.msra.mxu0 %v4518
    %4520 = vmatprep.subr.mxu0 0.0
    %v4521 = vand.u32 %v4342, 4294901760
    %v4522 = vsub.f32 %v4342, %v4521
    %v4523 = vand.u32 %v4522, 4294901760
    %v4524 = vsub.f32 %v4522, %v4523
    %v4525 = vand.u32 %v4524, 4294901760
    %4526 = vmatpush1.xpose.msra.mxu0 %v4525
    %4527 = vmatprep.subr.mxu0 0.0
    %v4528 = vand.u32 %v4345, 4294901760
    %v4529 = vsub.f32 %v4345, %v4528
    %v4530 = vand.u32 %v4529, 4294901760
    %v4531 = vsub.f32 %v4529, %v4530
    %v4532 = vand.u32 %v4531, 4294901760
    %4533 = vmatpush1.xpose.msra.mxu0 %v4532
    %4534 = vmatprep.subr.mxu0 0.0
    %v4535 = vand.u32 %v4348, 4294901760
    %v4536 = vsub.f32 %v4348, %v4535
    %v4537 = vand.u32 %v4536, 4294901760
    %v4538 = vsub.f32 %v4536, %v4537
    %v4539 = vand.u32 %v4538, 4294901760
    %4540 = vmatpush1.xpose.msra.mxu0 %v4539
    %4541 = vmatprep.subr.mxu0 0.0
    %v4542 = vand.u32 %v4351, 4294901760
    %v4543 = vsub.f32 %v4351, %v4542
    %v4544 = vand.u32 %v4543, 4294901760
    %v4545 = vsub.f32 %v4543, %v4544
    %v4546 = vand.u32 %v4545, 4294901760
    %4547 = vmatpush1.xpose.msra.mxu0 %v4546
    %4548 = vmatprep.subr.mxu0 0.0
    %v4549 = vand.u32 %v4354, 4294901760
    %v4550 = vsub.f32 %v4354, %v4549
    %v4551 = vand.u32 %v4550, 4294901760
    %v4552 = vsub.f32 %v4550, %v4551
    %v4553 = vand.u32 %v4552, 4294901760
    %4554 = vmatpush1.xpose.msra.mxu0 %v4553
    %4555 = vmatprep.subr.mxu0 0.0
    %v4556 = vand.u32 %v4357, 4294901760
    %v4557 = vsub.f32 %v4357, %v4556
    %v4558 = vand.u32 %v4557, 4294901760
    %v4559 = vsub.f32 %v4557, %v4558
    %v4560 = vand.u32 %v4559, 4294901760
    %4561 = vmatpush1.xpose.msra.mxu0 %v4560
    %4562 = vmatprep.subr.mxu0 0.0
    %4563 = vmatpush1.xpose.msra.mxu0 0.0
    %4564 = vmatprep.subr.mxu0 0.0
    %4565 = vmatpush1.xpose.msra.mxu0 0.0
    %4566 = vmatprep.subr.mxu0 0.0
    %4567 = vmatpush1.xpose.msra.mxu0 0.0
    %4568 = vmatprep.subr.mxu0 0.0
    %4569 = vmatpush1.xpose.msra.mxu0 0.0
    %4570 = vmatprep.subr.mxu0 0.0
    %4571 = vmatpush1.xpose.msra.mxu0 0.0
    %4572 = vmatprep.subr.mxu0 0.0
    %4573 = vmatpush1.xpose.msra.mxu0 0.0
    %4574 = vmatprep.subr.mxu0 0.0
    %4575 = vmatpush1.xpose.msra.mxu0 0.0
    %4576 = vmatprep.subr.mxu0 0.0
    %4577 = vmatpush1.xpose.msra.mxu0 0.0
    %4578 = vmatprep.subr.mxu0 0.0
    %4579 = vmatpush1.xpose.msra.mxu0 0.0
    %4580 = vmatprep.subr.mxu0 0.0
    %4581 = vmatpush1.xpose.msra.mxu0 0.0
    %4582 = vmatprep.subr.mxu0 0.0
    %4583 = vmatpush1.xpose.msra.mxu0 0.0
    %4584 = vmatprep.subr.mxu0 0.0
    %4585 = vmatpush1.xpose.msra.mxu0 0.0
    %4586 = vmatprep.subr.mxu0 0.0
    %4587 = vmatpush1.xpose.msra.mxu0 0.0
    %4588 = vmatprep.subr.mxu0 0.0
    %4589 = vmatpush1.xpose.msra.mxu0 0.0
    %4590 = vmatprep.subr.mxu0 0.0
    %4591 = vmatpush1.xpose.msra.mxu0 0.0
    %4592 = vmatprep.subr.mxu0 0.0
    %4593 = vmatpush1.xpose.msra.mxu0 0.0
    %4594 = vmatprep.mubr.f32.mxu0 0.0
    %v4595 = vand.u32 %v4309, 4294901760
    %4596 = vmatmul.mubr.f32.gmra.mrb[0].mxu0 %v4595
    %v4597 = vpop.f32.mrb[0].mxu0
    %v4598 = vadd.f32 %v4447, %v4597
    %v4599 = vpop.f32.mrb[0].mxu0
    %4600 = vdwg.mxu0
    %4601 = vmatprep.subr.mxu0 0.0
    %v4602 = vand.u32 %v4312, 4294901760
    %v4603 = vsub.f32 %v4312, %v4602
    %4604 = vmatpush1.xpose.msra.mxu0 %v4603
    %4605 = vmatprep.subr.mxu0 0.0
    %v4606 = vand.u32 %v4315, 4294901760
    %v4607 = vsub.f32 %v4315, %v4606
    %4608 = vmatpush1.xpose.msra.mxu0 %v4607
    %4609 = vmatprep.subr.mxu0 0.0
    %v4610 = vand.u32 %v4318, 4294901760
    %v4611 = vsub.f32 %v4318, %v4610
    %4612 = vmatpush1.xpose.msra.mxu0 %v4611
    %4613 = vmatprep.subr.mxu0 0.0
    %v4614 = vand.u32 %v4321, 4294901760
    %v4615 = vsub.f32 %v4321, %v4614
    %4616 = vmatpush1.xpose.msra.mxu0 %v4615
    %4617 = vmatprep.subr.mxu0 0.0
    %v4618 = vand.u32 %v4324, 4294901760
    %v4619 = vsub.f32 %v4324, %v4618
    %4620 = vmatpush1.xpose.msra.mxu0 %v4619
    %4621 = vmatprep.subr.mxu0 0.0
    %v4622 = vand.u32 %v4327, 4294901760
    %v4623 = vsub.f32 %v4327, %v4622
    %4624 = vmatpush1.xpose.msra.mxu0 %v4623
    %4625 = vmatprep.subr.mxu0 0.0
    %v4626 = vand.u32 %v4330, 4294901760
    %v4627 = vsub.f32 %v4330, %v4626
    %4628 = vmatpush1.xpose.msra.mxu0 %v4627
    %4629 = vmatprep.subr.mxu0 0.0
    %v4630 = vand.u32 %v4333, 4294901760
    %v4631 = vsub.f32 %v4333, %v4630
    %4632 = vmatpush1.xpose.msra.mxu0 %v4631
    %4633 = vmatprep.subr.mxu0 0.0
    %v4634 = vand.u32 %v4336, 4294901760
    %v4635 = vsub.f32 %v4336, %v4634
    %4636 = vmatpush1.xpose.msra.mxu0 %v4635
    %4637 = vmatprep.subr.mxu0 0.0
    %v4638 = vand.u32 %v4339, 4294901760
    %v4639 = vsub.f32 %v4339, %v4638
    %4640 = vmatpush1.xpose.msra.mxu0 %v4639
    %4641 = vmatprep.subr.mxu0 0.0
    %v4642 = vand.u32 %v4342, 4294901760
    %v4643 = vsub.f32 %v4342, %v4642
    %4644 = vmatpush1.xpose.msra.mxu0 %v4643
    %4645 = vmatprep.subr.mxu0 0.0
    %v4646 = vand.u32 %v4345, 4294901760
    %v4647 = vsub.f32 %v4345, %v4646
    %4648 = vmatpush1.xpose.msra.mxu0 %v4647
    %4649 = vmatprep.subr.mxu0 0.0
    %v4650 = vand.u32 %v4348, 4294901760
    %v4651 = vsub.f32 %v4348, %v4650
    %4652 = vmatpush1.xpose.msra.mxu0 %v4651
    %4653 = vmatprep.subr.mxu0 0.0
    %v4654 = vand.u32 %v4351, 4294901760
    %v4655 = vsub.f32 %v4351, %v4654
    %4656 = vmatpush1.xpose.msra.mxu0 %v4655
    %4657 = vmatprep.subr.mxu0 0.0
    %v4658 = vand.u32 %v4354, 4294901760
    %v4659 = vsub.f32 %v4354, %v4658
    %4660 = vmatpush1.xpose.msra.mxu0 %v4659
    %4661 = vmatprep.subr.mxu0 0.0
    %v4662 = vand.u32 %v4357, 4294901760
    %v4663 = vsub.f32 %v4357, %v4662
    %4664 = vmatpush1.xpose.msra.mxu0 %v4663
    %4665 = vmatprep.subr.mxu0 0.0
    %4666 = vmatpush1.xpose.msra.mxu0 0.0
    %4667 = vmatprep.subr.mxu0 0.0
    %4668 = vmatpush1.xpose.msra.mxu0 0.0
    %4669 = vmatprep.subr.mxu0 0.0
    %4670 = vmatpush1.xpose.msra.mxu0 0.0
    %4671 = vmatprep.subr.mxu0 0.0
    %4672 = vmatpush1.xpose.msra.mxu0 0.0
    %4673 = vmatprep.subr.mxu0 0.0
    %4674 = vmatpush1.xpose.msra.mxu0 0.0
    %4675 = vmatprep.subr.mxu0 0.0
    %4676 = vmatpush1.xpose.msra.mxu0 0.0
    %4677 = vmatprep.subr.mxu0 0.0
    %4678 = vmatpush1.xpose.msra.mxu0 0.0
    %4679 = vmatprep.subr.mxu0 0.0
    %4680 = vmatpush1.xpose.msra.mxu0 0.0
    %4681 = vmatprep.subr.mxu0 0.0
    %4682 = vmatpush1.xpose.msra.mxu0 0.0
    %4683 = vmatprep.subr.mxu0 0.0
    %4684 = vmatpush1.xpose.msra.mxu0 0.0
    %4685 = vmatprep.subr.mxu0 0.0
    %4686 = vmatpush1.xpose.msra.mxu0 0.0
    %4687 = vmatprep.subr.mxu0 0.0
    %4688 = vmatpush1.xpose.msra.mxu0 0.0
    %4689 = vmatprep.subr.mxu0 0.0
    %4690 = vmatpush1.xpose.msra.mxu0 0.0
    %4691 = vmatprep.subr.mxu0 0.0
    %4692 = vmatpush1.xpose.msra.mxu0 0.0
    %4693 = vmatprep.subr.mxu0 0.0
    %4694 = vmatpush1.xpose.msra.mxu0 0.0
    %4695 = vmatprep.subr.mxu0 0.0
    %4696 = vmatpush1.xpose.msra.mxu0 0.0
    %4697 = vmatprep.mubr.f32.mxu0 0.0
    %v4698 = vand.u32 %v4309, 4294901760
    %v4699 = vsub.f32 %v4309, %v4698
    %4700 = vmatmul.mubr.f32.gmra.mrb[0].mxu0 %v4699
    %v4701 = vpop.f32.mrb[0].mxu0
    %v4702 = vadd.f32 %v4598, %v4701
    %v4703 = vpop.f32.mrb[0].mxu0
    %4704 = vdwg.mxu0
    %4705 = vmatprep.subr.mxu0 0.0
    %v4706 = vand.u32 %v4312, 4294901760
    %4707 = vmatpush1.xpose.msra.mxu0 %v4706
    %4708 = vmatprep.subr.mxu0 0.0
    %v4709 = vand.u32 %v4315, 4294901760
    %4710 = vmatpush1.xpose.msra.mxu0 %v4709
    %4711 = vmatprep.subr.mxu0 0.0
    %v4712 = vand.u32 %v4318, 4294901760
    %4713 = vmatpush1.xpose.msra.mxu0 %v4712
    %4714 = vmatprep.subr.mxu0 0.0
    %v4715 = vand.u32 %v4321, 4294901760
    %4716 = vmatpush1.xpose.msra.mxu0 %v4715
    %4717 = vmatprep.subr.mxu0 0.0
    %v4718 = vand.u32 %v4324, 4294901760
    %4719 = vmatpush1.xpose.msra.mxu0 %v4718
    %4720 = vmatprep.subr.mxu0 0.0
    %v4721 = vand.u32 %v4327, 4294901760
    %4722 = vmatpush1.xpose.msra.mxu0 %v4721
    %4723 = vmatprep.subr.mxu0 0.0
    %v4724 = vand.u32 %v4330, 4294901760
    %4725 = vmatpush1.xpose.msra.mxu0 %v4724
    %4726 = vmatprep.subr.mxu0 0.0
    %v4727 = vand.u32 %v4333, 4294901760
    %4728 = vmatpush1.xpose.msra.mxu0 %v4727
    %4729 = vmatprep.subr.mxu0 0.0
    %v4730 = vand.u32 %v4336, 4294901760
    %4731 = vmatpush1.xpose.msra.mxu0 %v4730
    %4732 = vmatprep.subr.mxu0 0.0
    %v4733 = vand.u32 %v4339, 4294901760
    %4734 = vmatpush1.xpose.msra.mxu0 %v4733
    %4735 = vmatprep.subr.mxu0 0.0
    %v4736 = vand.u32 %v4342, 4294901760
    %4737 = vmatpush1.xpose.msra.mxu0 %v4736
    %4738 = vmatprep.subr.mxu0 0.0
    %v4739 = vand.u32 %v4345, 4294901760
    %4740 = vmatpush1.xpose.msra.mxu0 %v4739
    %4741 = vmatprep.subr.mxu0 0.0
    %v4742 = vand.u32 %v4348, 4294901760
    %4743 = vmatpush1.xpose.msra.mxu0 %v4742
    %4744 = vmatprep.subr.mxu0 0.0
    %v4745 = vand.u32 %v4351, 4294901760
    %4746 = vmatpush1.xpose.msra.mxu0 %v4745
    %4747 = vmatprep.subr.mxu0 0.0
    %v4748 = vand.u32 %v4354, 4294901760
    %4749 = vmatpush1.xpose.msra.mxu0 %v4748
    %4750 = vmatprep.subr.mxu0 0.0
    %v4751 = vand.u32 %v4357, 4294901760
    %4752 = vmatpush1.xpose.msra.mxu0 %v4751
    %4753 = vmatprep.subr.mxu0 0.0
    %4754 = vmatpush1.xpose.msra.mxu0 0.0
    %4755 = vmatprep.subr.mxu0 0.0
    %4756 = vmatpush1.xpose.msra.mxu0 0.0
    %4757 = vmatprep.subr.mxu0 0.0
    %4758 = vmatpush1.xpose.msra.mxu0 0.0
    %4759 = vmatprep.subr.mxu0 0.0
    %4760 = vmatpush1.xpose.msra.mxu0 0.0
    %4761 = vmatprep.subr.mxu0 0.0
    %4762 = vmatpush1.xpose.msra.mxu0 0.0
    %4763 = vmatprep.subr.mxu0 0.0
    %4764 = vmatpush1.xpose.msra.mxu0 0.0
    %4765 = vmatprep.subr.mxu0 0.0
    %4766 = vmatpush1.xpose.msra.mxu0 0.0
    %4767 = vmatprep.subr.mxu0 0.0
    %4768 = vmatpush1.xpose.msra.mxu0 0.0
    %4769 = vmatprep.subr.mxu0 0.0
    %4770 = vmatpush1.xpose.msra.mxu0 0.0
    %4771 = vmatprep.subr.mxu0 0.0
    %4772 = vmatpush1.xpose.msra.mxu0 0.0
    %4773 = vmatprep.subr.mxu0 0.0
    %4774 = vmatpush1.xpose.msra.mxu0 0.0
    %4775 = vmatprep.subr.mxu0 0.0
    %4776 = vmatpush1.xpose.msra.mxu0 0.0
    %4777 = vmatprep.subr.mxu0 0.0
    %4778 = vmatpush1.xpose.msra.mxu0 0.0
    %4779 = vmatprep.subr.mxu0 0.0
    %4780 = vmatpush1.xpose.msra.mxu0 0.0
    %4781 = vmatprep.subr.mxu0 0.0
    %4782 = vmatpush1.xpose.msra.mxu0 0.0
    %4783 = vmatprep.subr.mxu0 0.0
    %4784 = vmatpush1.xpose.msra.mxu0 0.0
    %4785 = vmatprep.mubr.f32.mxu0 0.0
    %v4786 = vand.u32 %v4309, 4294901760
    %v4787 = vsub.f32 %v4309, %v4786
    %v4788 = vand.u32 %v4787, 4294901760
    %4789 = vmatmul.mubr.f32.gmra.mrb[0].mxu0 %v4788
    %v4790 = vpop.f32.mrb[0].mxu0
    %v4791 = vadd.f32 %v4702, %v4790
    %v4792 = vpop.f32.mrb[0].mxu0
    %4793 = vdwg.mxu0
    %4794 = vmatprep.subr.mxu0 0.0
    %v4795 = vand.u32 %v4312, 4294901760
    %v4796 = vsub.f32 %v4312, %v4795
    %v4797 = vand.u32 %v4796, 4294901760
    %4798 = vmatpush1.xpose.msra.mxu0 %v4797
    %4799 = vmatprep.subr.mxu0 0.0
    %v4800 = vand.u32 %v4315, 4294901760
    %v4801 = vsub.f32 %v4315, %v4800
    %v4802 = vand.u32 %v4801, 4294901760
    %4803 = vmatpush1.xpose.msra.mxu0 %v4802
    %4804 = vmatprep.subr.mxu0 0.0
    %v4805 = vand.u32 %v4318, 4294901760
    %v4806 = vsub.f32 %v4318, %v4805
    %v4807 = vand.u32 %v4806, 4294901760
    %4808 = vmatpush1.xpose.msra.mxu0 %v4807
    %4809 = vmatprep.subr.mxu0 0.0
    %v4810 = vand.u32 %v4321, 4294901760
    %v4811 = vsub.f32 %v4321, %v4810
    %v4812 = vand.u32 %v4811, 4294901760
    %4813 = vmatpush1.xpose.msra.mxu0 %v4812
    %4814 = vmatprep.subr.mxu0 0.0
    %v4815 = vand.u32 %v4324, 4294901760
    %v4816 = vsub.f32 %v4324, %v4815
    %v4817 = vand.u32 %v4816, 4294901760
    %4818 = vmatpush1.xpose.msra.mxu0 %v4817
    %4819 = vmatprep.subr.mxu0 0.0
    %v4820 = vand.u32 %v4327, 4294901760
    %v4821 = vsub.f32 %v4327, %v4820
    %v4822 = vand.u32 %v4821, 4294901760
    %4823 = vmatpush1.xpose.msra.mxu0 %v4822
    %4824 = vmatprep.subr.mxu0 0.0
    %v4825 = vand.u32 %v4330, 4294901760
    %v4826 = vsub.f32 %v4330, %v4825
    %v4827 = vand.u32 %v4826, 4294901760
    %4828 = vmatpush1.xpose.msra.mxu0 %v4827
    %4829 = vmatprep.subr.mxu0 0.0
    %v4830 = vand.u32 %v4333, 4294901760
    %v4831 = vsub.f32 %v4333, %v4830
    %v4832 = vand.u32 %v4831, 4294901760
    %4833 = vmatpush1.xpose.msra.mxu0 %v4832
    %4834 = vmatprep.subr.mxu0 0.0
    %v4835 = vand.u32 %v4336, 4294901760
    %v4836 = vsub.f32 %v4336, %v4835
    %v4837 = vand.u32 %v4836, 4294901760
    %4838 = vmatpush1.xpose.msra.mxu0 %v4837
    %4839 = vmatprep.subr.mxu0 0.0
    %v4840 = vand.u32 %v4339, 4294901760
    %v4841 = vsub.f32 %v4339, %v4840
    %v4842 = vand.u32 %v4841, 4294901760
    %4843 = vmatpush1.xpose.msra.mxu0 %v4842
    %4844 = vmatprep.subr.mxu0 0.0
    %v4845 = vand.u32 %v4342, 4294901760
    %v4846 = vsub.f32 %v4342, %v4845
    %v4847 = vand.u32 %v4846, 4294901760
    %4848 = vmatpush1.xpose.msra.mxu0 %v4847
    %4849 = vmatprep.subr.mxu0 0.0
    %v4850 = vand.u32 %v4345, 4294901760
    %v4851 = vsub.f32 %v4345, %v4850
    %v4852 = vand.u32 %v4851, 4294901760
    %4853 = vmatpush1.xpose.msra.mxu0 %v4852
    %4854 = vmatprep.subr.mxu0 0.0
    %v4855 = vand.u32 %v4348, 4294901760
    %v4856 = vsub.f32 %v4348, %v4855
    %v4857 = vand.u32 %v4856, 4294901760
    %4858 = vmatpush1.xpose.msra.mxu0 %v4857
    %4859 = vmatprep.subr.mxu0 0.0
    %v4860 = vand.u32 %v4351, 4294901760
    %v4861 = vsub.f32 %v4351, %v4860
    %v4862 = vand.u32 %v4861, 4294901760
    %4863 = vmatpush1.xpose.msra.mxu0 %v4862
    %4864 = vmatprep.subr.mxu0 0.0
    %v4865 = vand.u32 %v4354, 4294901760
    %v4866 = vsub.f32 %v4354, %v4865
    %v4867 = vand.u32 %v4866, 4294901760
    %4868 = vmatpush1.xpose.msra.mxu0 %v4867
    %4869 = vmatprep.subr.mxu0 0.0
    %v4870 = vand.u32 %v4357, 4294901760
    %v4871 = vsub.f32 %v4357, %v4870
    %v4872 = vand.u32 %v4871, 4294901760
    %4873 = vmatpush1.xpose.msra.mxu0 %v4872
    %4874 = vmatprep.subr.mxu0 0.0
    %4875 = vmatpush1.xpose.msra.mxu0 0.0
    %4876 = vmatprep.subr.mxu0 0.0
    %4877 = vmatpush1.xpose.msra.mxu0 0.0
    %4878 = vmatprep.subr.mxu0 0.0
    %4879 = vmatpush1.xpose.msra.mxu0 0.0
    %4880 = vmatprep.subr.mxu0 0.0
    %4881 = vmatpush1.xpose.msra.mxu0 0.0
    %4882 = vmatprep.subr.mxu0 0.0
    %4883 = vmatpush1.xpose.msra.mxu0 0.0
    %4884 = vmatprep.subr.mxu0 0.0
    %4885 = vmatpush1.xpose.msra.mxu0 0.0
    %4886 = vmatprep.subr.mxu0 0.0
    %4887 = vmatpush1.xpose.msra.mxu0 0.0
    %4888 = vmatprep.subr.mxu0 0.0
    %4889 = vmatpush1.xpose.msra.mxu0 0.0
    %4890 = vmatprep.subr.mxu0 0.0
    %4891 = vmatpush1.xpose.msra.mxu0 0.0
    %4892 = vmatprep.subr.mxu0 0.0
    %4893 = vmatpush1.xpose.msra.mxu0 0.0
    %4894 = vmatprep.subr.mxu0 0.0
    %4895 = vmatpush1.xpose.msra.mxu0 0.0
    %4896 = vmatprep.subr.mxu0 0.0
    %4897 = vmatpush1.xpose.msra.mxu0 0.0
    %4898 = vmatprep.subr.mxu0 0.0
    %4899 = vmatpush1.xpose.msra.mxu0 0.0
    %4900 = vmatprep.subr.mxu0 0.0
    %4901 = vmatpush1.xpose.msra.mxu0 0.0
    %4902 = vmatprep.subr.mxu0 0.0
    %4903 = vmatpush1.xpose.msra.mxu0 0.0
    %4904 = vmatprep.subr.mxu0 0.0
    %4905 = vmatpush1.xpose.msra.mxu0 0.0
    %4906 = vmatprep.mubr.f32.mxu0 0.0
    %v4907 = vand.u32 %v4309, 4294901760
    %4908 = vmatmul.mubr.f32.gmra.mrb[0].mxu0 %v4907
    %v4909 = vpop.f32.mrb[0].mxu0
    %v4910 = vadd.f32 %v4791, %v4909
    %v4911 = vpop.f32.mrb[0].mxu0
    %4912 = vdwg.mxu0
    %4913 = vmatprep.subr.mxu0 0.0
    %v4914 = vand.u32 %v4312, 4294901760
    %4915 = vmatpush1.xpose.msra.mxu0 %v4914
    %4916 = vmatprep.subr.mxu0 0.0
    %v4917 = vand.u32 %v4315, 4294901760
    %4918 = vmatpush1.xpose.msra.mxu0 %v4917
    %4919 = vmatprep.subr.mxu0 0.0
    %v4920 = vand.u32 %v4318, 4294901760
    %4921 = vmatpush1.xpose.msra.mxu0 %v4920
    %4922 = vmatprep.subr.mxu0 0.0
    %v4923 = vand.u32 %v4321, 4294901760
    %4924 = vmatpush1.xpose.msra.mxu0 %v4923
    %4925 = vmatprep.subr.mxu0 0.0
    %v4926 = vand.u32 %v4324, 4294901760
    %4927 = vmatpush1.xpose.msra.mxu0 %v4926
    %4928 = vmatprep.subr.mxu0 0.0
    %v4929 = vand.u32 %v4327, 4294901760
    %4930 = vmatpush1.xpose.msra.mxu0 %v4929
    %4931 = vmatprep.subr.mxu0 0.0
    %v4932 = vand.u32 %v4330, 4294901760
    %4933 = vmatpush1.xpose.msra.mxu0 %v4932
    %4934 = vmatprep.subr.mxu0 0.0
    %v4935 = vand.u32 %v4333, 4294901760
    %4936 = vmatpush1.xpose.msra.mxu0 %v4935
    %4937 = vmatprep.subr.mxu0 0.0
    %v4938 = vand.u32 %v4336, 4294901760
    %4939 = vmatpush1.xpose.msra.mxu0 %v4938
    %4940 = vmatprep.subr.mxu0 0.0
    %v4941 = vand.u32 %v4339, 4294901760
    %4942 = vmatpush1.xpose.msra.mxu0 %v4941
    %4943 = vmatprep.subr.mxu0 0.0
    %v4944 = vand.u32 %v4342, 4294901760
    %4945 = vmatpush1.xpose.msra.mxu0 %v4944
    %4946 = vmatprep.subr.mxu0 0.0
    %v4947 = vand.u32 %v4345, 4294901760
    %4948 = vmatpush1.xpose.msra.mxu0 %v4947
    %4949 = vmatprep.subr.mxu0 0.0
    %v4950 = vand.u32 %v4348, 4294901760
    %4951 = vmatpush1.xpose.msra.mxu0 %v4950
    %4952 = vmatprep.subr.mxu0 0.0
    %v4953 = vand.u32 %v4351, 4294901760
    %4954 = vmatpush1.xpose.msra.mxu0 %v4953
    %4955 = vmatprep.subr.mxu0 0.0
    %v4956 = vand.u32 %v4354, 4294901760
    %4957 = vmatpush1.xpose.msra.mxu0 %v4956
    %4958 = vmatprep.subr.mxu0 0.0
    %v4959 = vand.u32 %v4357, 4294901760
    %4960 = vmatpush1.xpose.msra.mxu0 %v4959
    %4961 = vmatprep.subr.mxu0 0.0
    %4962 = vmatpush1.xpose.msra.mxu0 0.0
    %4963 = vmatprep.subr.mxu0 0.0
    %4964 = vmatpush1.xpose.msra.mxu0 0.0
    %4965 = vmatprep.subr.mxu0 0.0
    %4966 = vmatpush1.xpose.msra.mxu0 0.0
    %4967 = vmatprep.subr.mxu0 0.0
    %4968 = vmatpush1.xpose.msra.mxu0 0.0
    %4969 = vmatprep.subr.mxu0 0.0
    %4970 = vmatpush1.xpose.msra.mxu0 0.0
    %4971 = vmatprep.subr.mxu0 0.0
    %4972 = vmatpush1.xpose.msra.mxu0 0.0
    %4973 = vmatprep.subr.mxu0 0.0
    %4974 = vmatpush1.xpose.msra.mxu0 0.0
    %4975 = vmatprep.subr.mxu0 0.0
    %4976 = vmatpush1.xpose.msra.mxu0 0.0
    %4977 = vmatprep.subr.mxu0 0.0
    %4978 = vmatpush1.xpose.msra.mxu0 0.0
    %4979 = vmatprep.subr.mxu0 0.0
    %4980 = vmatpush1.xpose.msra.mxu0 0.0
    %4981 = vmatprep.subr.mxu0 0.0
    %4982 = vmatpush1.xpose.msra.mxu0 0.0
    %4983 = vmatprep.subr.mxu0 0.0
    %4984 = vmatpush1.xpose.msra.mxu0 0.0
    %4985 = vmatprep.subr.mxu0 0.0
    %4986 = vmatpush1.xpose.msra.mxu0 0.0
    %4987 = vmatprep.subr.mxu0 0.0
    %4988 = vmatpush1.xpose.msra.mxu0 0.0
    %4989 = vmatprep.subr.mxu0 0.0
    %4990 = vmatpush1.xpose.msra.mxu0 0.0
    %4991 = vmatprep.subr.mxu0 0.0
    %4992 = vmatpush1.xpose.msra.mxu0 0.0
    %4993 = vmatprep.mubr.f32.mxu0 0.0
    %v4994 = vand.u32 %v4309, 4294901760
    %4995 = vmatmul.mubr.f32.gmra.mrb[0].mxu0 %v4994
    %v4996 = vpop.f32.mrb[0].mxu0
    %v4997 = vadd.f32 %v4910, %v4996
    %v4998 = vpop.f32.mrb[0].mxu0
    %4999 = vdwg.mxu0
    %v5001 = vsel %vm155, %v154, 0
    %v5004 = vsel %vm155, %v131, 0
    %v5007 = vsel %vm155, %v132, 0
    %v5010 = vsel %vm155, %v133, 0
    %v5013 = vsel %vm155, %v134, 0
    %v5016 = vsel %vm155, %v135, 0
    %v5019 = vsel %vm155, %v136, 0
    %v5022 = vsel %vm155, %v137, 0
    %v5025 = vsel %vm155, %v138, 0
    %v5028 = vsel %vm155, %v139, 0
    %v5031 = vsel %vm155, %v140, 0
    %v5034 = vsel %vm155, %v141, 0
    %v5037 = vsel %vm155, %v142, 0
    %v5040 = vsel %vm155, %v143, 0
    %v5043 = vsel %vm155, %v144, 0
    %v5046 = vsel %vm155, %v145, 0
    %v5049 = vsel %vm155, %v146, 0
    %5051 = vmatprep.subr.mxu0 0.0
    %v5052 = vand.u32 %v5004, 4294901760
    %5053 = vmatpush1.xpose.msra.mxu0 %v5052
    %5054 = vmatprep.subr.mxu0 0.0
    %v5055 = vand.u32 %v5007, 4294901760
    %5056 = vmatpush1.xpose.msra.mxu0 %v5055
    %5057 = vmatprep.subr.mxu0 0.0
    %v5058 = vand.u32 %v5010, 4294901760
    %5059 = vmatpush1.xpose.msra.mxu0 %v5058
    %5060 = vmatprep.subr.mxu0 0.0
    %v5061 = vand.u32 %v5013, 4294901760
    %5062 = vmatpush1.xpose.msra.mxu0 %v5061
    %5063 = vmatprep.subr.mxu0 0.0
    %v5064 = vand.u32 %v5016, 4294901760
    %5065 = vmatpush1.xpose.msra.mxu0 %v5064
    %5066 = vmatprep.subr.mxu0 0.0
    %v5067 = vand.u32 %v5019, 4294901760
    %5068 = vmatpush1.xpose.msra.mxu0 %v5067
    %5069 = vmatprep.subr.mxu0 0.0
    %v5070 = vand.u32 %v5022, 4294901760
    %5071 = vmatpush1.xpose.msra.mxu0 %v5070
    %5072 = vmatprep.subr.mxu0 0.0
    %v5073 = vand.u32 %v5025, 4294901760
    %5074 = vmatpush1.xpose.msra.mxu0 %v5073
    %5075 = vmatprep.subr.mxu0 0.0
    %v5076 = vand.u32 %v5028, 4294901760
    %5077 = vmatpush1.xpose.msra.mxu0 %v5076
    %5078 = vmatprep.subr.mxu0 0.0
    %v5079 = vand.u32 %v5031, 4294901760
    %5080 = vmatpush1.xpose.msra.mxu0 %v5079
    %5081 = vmatprep.subr.mxu0 0.0
    %v5082 = vand.u32 %v5034, 4294901760
    %5083 = vmatpush1.xpose.msra.mxu0 %v5082
    %5084 = vmatprep.subr.mxu0 0.0
    %v5085 = vand.u32 %v5037, 4294901760
    %5086 = vmatpush1.xpose.msra.mxu0 %v5085
    %5087 = vmatprep.subr.mxu0 0.0
    %v5088 = vand.u32 %v5040, 4294901760
    %5089 = vmatpush1.xpose.msra.mxu0 %v5088
    %5090 = vmatprep.subr.mxu0 0.0
    %v5091 = vand.u32 %v5043, 4294901760
    %5092 = vmatpush1.xpose.msra.mxu0 %v5091
    %5093 = vmatprep.subr.mxu0 0.0
    %v5094 = vand.u32 %v5046, 4294901760
    %5095 = vmatpush1.xpose.msra.mxu0 %v5094
    %5096 = vmatprep.subr.mxu0 0.0
    %v5097 = vand.u32 %v5049, 4294901760
    %5098 = vmatpush1.xpose.msra.mxu0 %v5097
    %5099 = vmatprep.subr.mxu0 0.0
    %5100 = vmatpush1.xpose.msra.mxu0 0.0
    %5101 = vmatprep.subr.mxu0 0.0
    %5102 = vmatpush1.xpose.msra.mxu0 0.0
    %5103 = vmatprep.subr.mxu0 0.0
    %5104 = vmatpush1.xpose.msra.mxu0 0.0
    %5105 = vmatprep.subr.mxu0 0.0
    %5106 = vmatpush1.xpose.msra.mxu0 0.0
    %5107 = vmatprep.subr.mxu0 0.0
    %5108 = vmatpush1.xpose.msra.mxu0 0.0
    %5109 = vmatprep.subr.mxu0 0.0
    %5110 = vmatpush1.xpose.msra.mxu0 0.0
    %5111 = vmatprep.subr.mxu0 0.0
    %5112 = vmatpush1.xpose.msra.mxu0 0.0
    %5113 = vmatprep.subr.mxu0 0.0
    %5114 = vmatpush1.xpose.msra.mxu0 0.0
    %5115 = vmatprep.subr.mxu0 0.0
    %5116 = vmatpush1.xpose.msra.mxu0 0.0
    %5117 = vmatprep.subr.mxu0 0.0
    %5118 = vmatpush1.xpose.msra.mxu0 0.0
    %5119 = vmatprep.subr.mxu0 0.0
    %5120 = vmatpush1.xpose.msra.mxu0 0.0
    %5121 = vmatprep.subr.mxu0 0.0
    %5122 = vmatpush1.xpose.msra.mxu0 0.0
    %5123 = vmatprep.subr.mxu0 0.0
    %5124 = vmatpush1.xpose.msra.mxu0 0.0
    %5125 = vmatprep.subr.mxu0 0.0
    %5126 = vmatpush1.xpose.msra.mxu0 0.0
    %5127 = vmatprep.subr.mxu0 0.0
    %5128 = vmatpush1.xpose.msra.mxu0 0.0
    %5129 = vmatprep.subr.mxu0 0.0
    %5130 = vmatpush1.xpose.msra.mxu0 0.0
    %5131 = vmatprep.mubr.f32.mxu0 0.0
    %v5132 = vand.u32 %v5001, 4294901760
    %v5133 = vsub.f32 %v5001, %v5132
    %v5134 = vand.u32 %v5133, 4294901760
    %v5135 = vsub.f32 %v5133, %v5134
    %v5136 = vand.u32 %v5135, 4294901760
    %5137 = vmatmul.mubr.f32.gmra.mrb[0].mxu0 %v5136
    %v5138 = vpop.f32.mrb[0].mxu0
    %v5139 = vadd.f32 0.0, %v5138
    %v5140 = vpop.f32.mrb[0].mxu0
    %5141 = vdwg.mxu0
    %5142 = vmatprep.subr.mxu0 0.0
    %v5143 = vand.u32 %v5004, 4294901760
    %v5144 = vsub.f32 %v5004, %v5143
    %v5145 = vand.u32 %v5144, 4294901760
    %v5146 = vsub.f32 %v5144, %v5145
    %v5147 = vand.u32 %v5146, 4294901760
    %5148 = vmatpush1.xpose.msra.mxu0 %v5147
    %5149 = vmatprep.subr.mxu0 0.0
    %v5150 = vand.u32 %v5007, 4294901760
    %v5151 = vsub.f32 %v5007, %v5150
    %v5152 = vand.u32 %v5151, 4294901760
    %v5153 = vsub.f32 %v5151, %v5152
    %v5154 = vand.u32 %v5153, 4294901760
    %5155 = vmatpush1.xpose.msra.mxu0 %v5154
    %5156 = vmatprep.subr.mxu0 0.0
    %v5157 = vand.u32 %v5010, 4294901760
    %v5158 = vsub.f32 %v5010, %v5157
    %v5159 = vand.u32 %v5158, 4294901760
    %v5160 = vsub.f32 %v5158, %v5159
    %v5161 = vand.u32 %v5160, 4294901760
    %5162 = vmatpush1.xpose.msra.mxu0 %v5161
    %5163 = vmatprep.subr.mxu0 0.0
    %v5164 = vand.u32 %v5013, 4294901760
    %v5165 = vsub.f32 %v5013, %v5164
    %v5166 = vand.u32 %v5165, 4294901760
    %v5167 = vsub.f32 %v5165, %v5166
    %v5168 = vand.u32 %v5167, 4294901760
    %5169 = vmatpush1.xpose.msra.mxu0 %v5168
    %5170 = vmatprep.subr.mxu0 0.0
    %v5171 = vand.u32 %v5016, 4294901760
    %v5172 = vsub.f32 %v5016, %v5171
    %v5173 = vand.u32 %v5172, 4294901760
    %v5174 = vsub.f32 %v5172, %v5173
    %v5175 = vand.u32 %v5174, 4294901760
    %5176 = vmatpush1.xpose.msra.mxu0 %v5175
    %5177 = vmatprep.subr.mxu0 0.0
    %v5178 = vand.u32 %v5019, 4294901760
    %v5179 = vsub.f32 %v5019, %v5178
    %v5180 = vand.u32 %v5179, 4294901760
    %v5181 = vsub.f32 %v5179, %v5180
    %v5182 = vand.u32 %v5181, 4294901760
    %5183 = vmatpush1.xpose.msra.mxu0 %v5182
    %5184 = vmatprep.subr.mxu0 0.0
    %v5185 = vand.u32 %v5022, 4294901760
    %v5186 = vsub.f32 %v5022, %v5185
    %v5187 = vand.u32 %v5186, 4294901760
    %v5188 = vsub.f32 %v5186, %v5187
    %v5189 = vand.u32 %v5188, 4294901760
    %5190 = vmatpush1.xpose.msra.mxu0 %v5189
    %5191 = vmatprep.subr.mxu0 0.0
    %v5192 = vand.u32 %v5025, 4294901760
    %v5193 = vsub.f32 %v5025, %v5192
    %v5194 = vand.u32 %v5193, 4294901760
    %v5195 = vsub.f32 %v5193, %v5194
    %v5196 = vand.u32 %v5195, 4294901760
    %5197 = vmatpush1.xpose.msra.mxu0 %v5196
    %5198 = vmatprep.subr.mxu0 0.0
    %v5199 = vand.u32 %v5028, 4294901760
    %v5200 = vsub.f32 %v5028, %v5199
    %v5201 = vand.u32 %v5200, 4294901760
    %v5202 = vsub.f32 %v5200, %v5201
    %v5203 = vand.u32 %v5202, 4294901760
    %5204 = vmatpush1.xpose.msra.mxu0 %v5203
    %5205 = vmatprep.subr.mxu0 0.0
    %v5206 = vand.u32 %v5031, 4294901760
    %v5207 = vsub.f32 %v5031, %v5206
    %v5208 = vand.u32 %v5207, 4294901760
    %v5209 = vsub.f32 %v5207, %v5208
    %v5210 = vand.u32 %v5209, 4294901760
    %5211 = vmatpush1.xpose.msra.mxu0 %v5210
    %5212 = vmatprep.subr.mxu0 0.0
    %v5213 = vand.u32 %v5034, 4294901760
    %v5214 = vsub.f32 %v5034, %v5213
    %v5215 = vand.u32 %v5214, 4294901760
    %v5216 = vsub.f32 %v5214, %v5215
    %v5217 = vand.u32 %v5216, 4294901760
    %5218 = vmatpush1.xpose.msra.mxu0 %v5217
    %5219 = vmatprep.subr.mxu0 0.0
    %v5220 = vand.u32 %v5037, 4294901760
    %v5221 = vsub.f32 %v5037, %v5220
    %v5222 = vand.u32 %v5221, 4294901760
    %v5223 = vsub.f32 %v5221, %v5222
    %v5224 = vand.u32 %v5223, 4294901760
    %5225 = vmatpush1.xpose.msra.mxu0 %v5224
    %5226 = vmatprep.subr.mxu0 0.0
    %v5227 = vand.u32 %v5040, 4294901760
    %v5228 = vsub.f32 %v5040, %v5227
    %v5229 = vand.u32 %v5228, 4294901760
    %v5230 = vsub.f32 %v5228, %v5229
    %v5231 = vand.u32 %v5230, 4294901760
    %5232 = vmatpush1.xpose.msra.mxu0 %v5231
    %5233 = vmatprep.subr.mxu0 0.0
    %v5234 = vand.u32 %v5043, 4294901760
    %v5235 = vsub.f32 %v5043, %v5234
    %v5236 = vand.u32 %v5235, 4294901760
    %v5237 = vsub.f32 %v5235, %v5236
    %v5238 = vand.u32 %v5237, 4294901760
    %5239 = vmatpush1.xpose.msra.mxu0 %v5238
    %5240 = vmatprep.subr.mxu0 0.0
    %v5241 = vand.u32 %v5046, 4294901760
    %v5242 = vsub.f32 %v5046, %v5241
    %v5243 = vand.u32 %v5242, 4294901760
    %v5244 = vsub.f32 %v5242, %v5243
    %v5245 = vand.u32 %v5244, 4294901760
    %5246 = vmatpush1.xpose.msra.mxu0 %v5245
    %5247 = vmatprep.subr.mxu0 0.0
    %v5248 = vand.u32 %v5049, 4294901760
    %v5249 = vsub.f32 %v5049, %v5248
    %v5250 = vand.u32 %v5249, 4294901760
    %v5251 = vsub.f32 %v5249, %v5250
    %v5252 = vand.u32 %v5251, 4294901760
    %5253 = vmatpush1.xpose.msra.mxu0 %v5252
    %5254 = vmatprep.subr.mxu0 0.0
    %5255 = vmatpush1.xpose.msra.mxu0 0.0
    %5256 = vmatprep.subr.mxu0 0.0
    %5257 = vmatpush1.xpose.msra.mxu0 0.0
    %5258 = vmatprep.subr.mxu0 0.0
    %5259 = vmatpush1.xpose.msra.mxu0 0.0
    %5260 = vmatprep.subr.mxu0 0.0
    %5261 = vmatpush1.xpose.msra.mxu0 0.0
    %5262 = vmatprep.subr.mxu0 0.0
    %5263 = vmatpush1.xpose.msra.mxu0 0.0
    %5264 = vmatprep.subr.mxu0 0.0
    %5265 = vmatpush1.xpose.msra.mxu0 0.0
    %5266 = vmatprep.subr.mxu0 0.0
    %5267 = vmatpush1.xpose.msra.mxu0 0.0
    %5268 = vmatprep.subr.mxu0 0.0
    %5269 = vmatpush1.xpose.msra.mxu0 0.0
    %5270 = vmatprep.subr.mxu0 0.0
    %5271 = vmatpush1.xpose.msra.mxu0 0.0
    %5272 = vmatprep.subr.mxu0 0.0
    %5273 = vmatpush1.xpose.msra.mxu0 0.0
    %5274 = vmatprep.subr.mxu0 0.0
    %5275 = vmatpush1.xpose.msra.mxu0 0.0
    %5276 = vmatprep.subr.mxu0 0.0
    %5277 = vmatpush1.xpose.msra.mxu0 0.0
    %5278 = vmatprep.subr.mxu0 0.0
    %5279 = vmatpush1.xpose.msra.mxu0 0.0
    %5280 = vmatprep.subr.mxu0 0.0
    %5281 = vmatpush1.xpose.msra.mxu0 0.0
    %5282 = vmatprep.subr.mxu0 0.0
    %5283 = vmatpush1.xpose.msra.mxu0 0.0
    %5284 = vmatprep.subr.mxu0 0.0
    %5285 = vmatpush1.xpose.msra.mxu0 0.0
    %5286 = vmatprep.mubr.f32.mxu0 0.0
    %v5287 = vand.u32 %v5001, 4294901760
    %5288 = vmatmul.mubr.f32.gmra.mrb[0].mxu0 %v5287
    %v5289 = vpop.f32.mrb[0].mxu0
    %v5290 = vadd.f32 %v5139, %v5289
    %v5291 = vpop.f32.mrb[0].mxu0
    %5292 = vdwg.mxu0
    %5293 = vmatprep.subr.mxu0 0.0
    %v5294 = vand.u32 %v5004, 4294901760
    %v5295 = vsub.f32 %v5004, %v5294
    %5296 = vmatpush1.xpose.msra.mxu0 %v5295
    %5297 = vmatprep.subr.mxu0 0.0
    %v5298 = vand.u32 %v5007, 4294901760
    %v5299 = vsub.f32 %v5007, %v5298
    %5300 = vmatpush1.xpose.msra.mxu0 %v5299
    %5301 = vmatprep.subr.mxu0 0.0
    %v5302 = vand.u32 %v5010, 4294901760
    %v5303 = vsub.f32 %v5010, %v5302
    %5304 = vmatpush1.xpose.msra.mxu0 %v5303
    %5305 = vmatprep.subr.mxu0 0.0
    %v5306 = vand.u32 %v5013, 4294901760
    %v5307 = vsub.f32 %v5013, %v5306
    %5308 = vmatpush1.xpose.msra.mxu0 %v5307
    %5309 = vmatprep.subr.mxu0 0.0
    %v5310 = vand.u32 %v5016, 4294901760
    %v5311 = vsub.f32 %v5016, %v5310
    %5312 = vmatpush1.xpose.msra.mxu0 %v5311
    %5313 = vmatprep.subr.mxu0 0.0
    %v5314 = vand.u32 %v5019, 4294901760
    %v5315 = vsub.f32 %v5019, %v5314
    %5316 = vmatpush1.xpose.msra.mxu0 %v5315
    %5317 = vmatprep.subr.mxu0 0.0
    %v5318 = vand.u32 %v5022, 4294901760
    %v5319 = vsub.f32 %v5022, %v5318
    %5320 = vmatpush1.xpose.msra.mxu0 %v5319
    %5321 = vmatprep.subr.mxu0 0.0
    %v5322 = vand.u32 %v5025, 4294901760
    %v5323 = vsub.f32 %v5025, %v5322
    %5324 = vmatpush1.xpose.msra.mxu0 %v5323
    %5325 = vmatprep.subr.mxu0 0.0
    %v5326 = vand.u32 %v5028, 4294901760
    %v5327 = vsub.f32 %v5028, %v5326
    %5328 = vmatpush1.xpose.msra.mxu0 %v5327
    %5329 = vmatprep.subr.mxu0 0.0
    %v5330 = vand.u32 %v5031, 4294901760
    %v5331 = vsub.f32 %v5031, %v5330
    %5332 = vmatpush1.xpose.msra.mxu0 %v5331
    %5333 = vmatprep.subr.mxu0 0.0
    %v5334 = vand.u32 %v5034, 4294901760
    %v5335 = vsub.f32 %v5034, %v5334
    %5336 = vmatpush1.xpose.msra.mxu0 %v5335
    %5337 = vmatprep.subr.mxu0 0.0
    %v5338 = vand.u32 %v5037, 4294901760
    %v5339 = vsub.f32 %v5037, %v5338
    %5340 = vmatpush1.xpose.msra.mxu0 %v5339
    %5341 = vmatprep.subr.mxu0 0.0
    %v5342 = vand.u32 %v5040, 4294901760
    %v5343 = vsub.f32 %v5040, %v5342
    %5344 = vmatpush1.xpose.msra.mxu0 %v5343
    %5345 = vmatprep.subr.mxu0 0.0
    %v5346 = vand.u32 %v5043, 4294901760
    %v5347 = vsub.f32 %v5043, %v5346
    %5348 = vmatpush1.xpose.msra.mxu0 %v5347
    %5349 = vmatprep.subr.mxu0 0.0
    %v5350 = vand.u32 %v5046, 4294901760
    %v5351 = vsub.f32 %v5046, %v5350
    %5352 = vmatpush1.xpose.msra.mxu0 %v5351
    %5353 = vmatprep.subr.mxu0 0.0
    %v5354 = vand.u32 %v5049, 4294901760
    %v5355 = vsub.f32 %v5049, %v5354
    %5356 = vmatpush1.xpose.msra.mxu0 %v5355
    %5357 = vmatprep.subr.mxu0 0.0
    %5358 = vmatpush1.xpose.msra.mxu0 0.0
    %5359 = vmatprep.subr.mxu0 0.0
    %5360 = vmatpush1.xpose.msra.mxu0 0.0
    %5361 = vmatprep.subr.mxu0 0.0
    %5362 = vmatpush1.xpose.msra.mxu0 0.0
    %5363 = vmatprep.subr.mxu0 0.0
    %5364 = vmatpush1.xpose.msra.mxu0 0.0
    %5365 = vmatprep.subr.mxu0 0.0
    %5366 = vmatpush1.xpose.msra.mxu0 0.0
    %5367 = vmatprep.subr.mxu0 0.0
    %5368 = vmatpush1.xpose.msra.mxu0 0.0
    %5369 = vmatprep.subr.mxu0 0.0
    %5370 = vmatpush1.xpose.msra.mxu0 0.0
    %5371 = vmatprep.subr.mxu0 0.0
    %5372 = vmatpush1.xpose.msra.mxu0 0.0
    %5373 = vmatprep.subr.mxu0 0.0
    %5374 = vmatpush1.xpose.msra.mxu0 0.0
    %5375 = vmatprep.subr.mxu0 0.0
    %5376 = vmatpush1.xpose.msra.mxu0 0.0
    %5377 = vmatprep.subr.mxu0 0.0
    %5378 = vmatpush1.xpose.msra.mxu0 0.0
    %5379 = vmatprep.subr.mxu0 0.0
    %5380 = vmatpush1.xpose.msra.mxu0 0.0
    %5381 = vmatprep.subr.mxu0 0.0
    %5382 = vmatpush1.xpose.msra.mxu0 0.0
    %5383 = vmatprep.subr.mxu0 0.0
    %5384 = vmatpush1.xpose.msra.mxu0 0.0
    %5385 = vmatprep.subr.mxu0 0.0
    %5386 = vmatpush1.xpose.msra.mxu0 0.0
    %5387 = vmatprep.subr.mxu0 0.0
    %5388 = vmatpush1.xpose.msra.mxu0 0.0
    %5389 = vmatprep.mubr.f32.mxu0 0.0
    %v5390 = vand.u32 %v5001, 4294901760
    %v5391 = vsub.f32 %v5001, %v5390
    %5392 = vmatmul.mubr.f32.gmra.mrb[0].mxu0 %v5391
    %v5393 = vpop.f32.mrb[0].mxu0
    %v5394 = vadd.f32 %v5290, %v5393
    %v5395 = vpop.f32.mrb[0].mxu0
    %5396 = vdwg.mxu0
    %5397 = vmatprep.subr.mxu0 0.0
    %v5398 = vand.u32 %v5004, 4294901760
    %5399 = vmatpush1.xpose.msra.mxu0 %v5398
    %5400 = vmatprep.subr.mxu0 0.0
    %v5401 = vand.u32 %v5007, 4294901760
    %5402 = vmatpush1.xpose.msra.mxu0 %v5401
    %5403 = vmatprep.subr.mxu0 0.0
    %v5404 = vand.u32 %v5010, 4294901760
    %5405 = vmatpush1.xpose.msra.mxu0 %v5404
    %5406 = vmatprep.subr.mxu0 0.0
    %v5407 = vand.u32 %v5013, 4294901760
    %5408 = vmatpush1.xpose.msra.mxu0 %v5407
    %5409 = vmatprep.subr.mxu0 0.0
    %v5410 = vand.u32 %v5016, 4294901760
    %5411 = vmatpush1.xpose.msra.mxu0 %v5410
    %5412 = vmatprep.subr.mxu0 0.0
    %v5413 = vand.u32 %v5019, 4294901760
    %5414 = vmatpush1.xpose.msra.mxu0 %v5413
    %5415 = vmatprep.subr.mxu0 0.0
    %v5416 = vand.u32 %v5022, 4294901760
    %5417 = vmatpush1.xpose.msra.mxu0 %v5416
    %5418 = vmatprep.subr.mxu0 0.0
    %v5419 = vand.u32 %v5025, 4294901760
    %5420 = vmatpush1.xpose.msra.mxu0 %v5419
    %5421 = vmatprep.subr.mxu0 0.0
    %v5422 = vand.u32 %v5028, 4294901760
    %5423 = vmatpush1.xpose.msra.mxu0 %v5422
    %5424 = vmatprep.subr.mxu0 0.0
    %v5425 = vand.u32 %v5031, 4294901760
    %5426 = vmatpush1.xpose.msra.mxu0 %v5425
    %5427 = vmatprep.subr.mxu0 0.0
    %v5428 = vand.u32 %v5034, 4294901760
    %5429 = vmatpush1.xpose.msra.mxu0 %v5428
    %5430 = vmatprep.subr.mxu0 0.0
    %v5431 = vand.u32 %v5037, 4294901760
    %5432 = vmatpush1.xpose.msra.mxu0 %v5431
    %5433 = vmatprep.subr.mxu0 0.0
    %v5434 = vand.u32 %v5040, 4294901760
    %5435 = vmatpush1.xpose.msra.mxu0 %v5434
    %5436 = vmatprep.subr.mxu0 0.0
    %v5437 = vand.u32 %v5043, 4294901760
    %5438 = vmatpush1.xpose.msra.mxu0 %v5437
    %5439 = vmatprep.subr.mxu0 0.0
    %v5440 = vand.u32 %v5046, 4294901760
    %5441 = vmatpush1.xpose.msra.mxu0 %v5440
    %5442 = vmatprep.subr.mxu0 0.0
    %v5443 = vand.u32 %v5049, 4294901760
    %5444 = vmatpush1.xpose.msra.mxu0 %v5443
    %5445 = vmatprep.subr.mxu0 0.0
    %5446 = vmatpush1.xpose.msra.mxu0 0.0
    %5447 = vmatprep.subr.mxu0 0.0
    %5448 = vmatpush1.xpose.msra.mxu0 0.0
    %5449 = vmatprep.subr.mxu0 0.0
    %5450 = vmatpush1.xpose.msra.mxu0 0.0
    %5451 = vmatprep.subr.mxu0 0.0
    %5452 = vmatpush1.xpose.msra.mxu0 0.0
    %5453 = vmatprep.subr.mxu0 0.0
    %5454 = vmatpush1.xpose.msra.mxu0 0.0
    %5455 = vmatprep.subr.mxu0 0.0
    %5456 = vmatpush1.xpose.msra.mxu0 0.0
    %5457 = vmatprep.subr.mxu0 0.0
    %5458 = vmatpush1.xpose.msra.mxu0 0.0
    %5459 = vmatprep.subr.mxu0 0.0
    %5460 = vmatpush1.xpose.msra.mxu0 0.0
    %5461 = vmatprep.subr.mxu0 0.0
    %5462 = vmatpush1.xpose.msra.mxu0 0.0
    %5463 = vmatprep.subr.mxu0 0.0
    %5464 = vmatpush1.xpose.msra.mxu0 0.0
    %5465 = vmatprep.subr.mxu0 0.0
    %5466 = vmatpush1.xpose.msra.mxu0 0.0
    %5467 = vmatprep.subr.mxu0 0.0
    %5468 = vmatpush1.xpose.msra.mxu0 0.0
    %5469 = vmatprep.subr.mxu0 0.0
    %5470 = vmatpush1.xpose.msra.mxu0 0.0
    %5471 = vmatprep.subr.mxu0 0.0
    %5472 = vmatpush1.xpose.msra.mxu0 0.0
    %5473 = vmatprep.subr.mxu0 0.0
    %5474 = vmatpush1.xpose.msra.mxu0 0.0
    %5475 = vmatprep.subr.mxu0 0.0
    %5476 = vmatpush1.xpose.msra.mxu0 0.0
    %5477 = vmatprep.mubr.f32.mxu0 0.0
    %v5478 = vand.u32 %v5001, 4294901760
    %v5479 = vsub.f32 %v5001, %v5478
    %v5480 = vand.u32 %v5479, 4294901760
    %5481 = vmatmul.mubr.f32.gmra.mrb[0].mxu0 %v5480
    %v5482 = vpop.f32.mrb[0].mxu0
    %v5483 = vadd.f32 %v5394, %v5482
    %v5484 = vpop.f32.mrb[0].mxu0
    %5485 = vdwg.mxu0
    %5486 = vmatprep.subr.mxu0 0.0
    %v5487 = vand.u32 %v5004, 4294901760
    %v5488 = vsub.f32 %v5004, %v5487
    %v5489 = vand.u32 %v5488, 4294901760
    %5490 = vmatpush1.xpose.msra.mxu0 %v5489
    %5491 = vmatprep.subr.mxu0 0.0
    %v5492 = vand.u32 %v5007, 4294901760
    %v5493 = vsub.f32 %v5007, %v5492
    %v5494 = vand.u32 %v5493, 4294901760
    %5495 = vmatpush1.xpose.msra.mxu0 %v5494
    %5496 = vmatprep.subr.mxu0 0.0
    %v5497 = vand.u32 %v5010, 4294901760
    %v5498 = vsub.f32 %v5010, %v5497
    %v5499 = vand.u32 %v5498, 4294901760
    %5500 = vmatpush1.xpose.msra.mxu0 %v5499
    %5501 = vmatprep.subr.mxu0 0.0
    %v5502 = vand.u32 %v5013, 4294901760
    %v5503 = vsub.f32 %v5013, %v5502
    %v5504 = vand.u32 %v5503, 4294901760
    %5505 = vmatpush1.xpose.msra.mxu0 %v5504
    %5506 = vmatprep.subr.mxu0 0.0
    %v5507 = vand.u32 %v5016, 4294901760
    %v5508 = vsub.f32 %v5016, %v5507
    %v5509 = vand.u32 %v5508, 4294901760
    %5510 = vmatpush1.xpose.msra.mxu0 %v5509
    %5511 = vmatprep.subr.mxu0 0.0
    %v5512 = vand.u32 %v5019, 4294901760
    %v5513 = vsub.f32 %v5019, %v5512
    %v5514 = vand.u32 %v5513, 4294901760
    %5515 = vmatpush1.xpose.msra.mxu0 %v5514
    %5516 = vmatprep.subr.mxu0 0.0
    %v5517 = vand.u32 %v5022, 4294901760
    %v5518 = vsub.f32 %v5022, %v5517
    %v5519 = vand.u32 %v5518, 4294901760
    %5520 = vmatpush1.xpose.msra.mxu0 %v5519
    %5521 = vmatprep.subr.mxu0 0.0
    %v5522 = vand.u32 %v5025, 4294901760
    %v5523 = vsub.f32 %v5025, %v5522
    %v5524 = vand.u32 %v5523, 4294901760
    %5525 = vmatpush1.xpose.msra.mxu0 %v5524
    %5526 = vmatprep.subr.mxu0 0.0
    %v5527 = vand.u32 %v5028, 4294901760
    %v5528 = vsub.f32 %v5028, %v5527
    %v5529 = vand.u32 %v5528, 4294901760
    %5530 = vmatpush1.xpose.msra.mxu0 %v5529
    %5531 = vmatprep.subr.mxu0 0.0
    %v5532 = vand.u32 %v5031, 4294901760
    %v5533 = vsub.f32 %v5031, %v5532
    %v5534 = vand.u32 %v5533, 4294901760
    %5535 = vmatpush1.xpose.msra.mxu0 %v5534
    %5536 = vmatprep.subr.mxu0 0.0
    %v5537 = vand.u32 %v5034, 4294901760
    %v5538 = vsub.f32 %v5034, %v5537
    %v5539 = vand.u32 %v5538, 4294901760
    %5540 = vmatpush1.xpose.msra.mxu0 %v5539
    %5541 = vmatprep.subr.mxu0 0.0
    %v5542 = vand.u32 %v5037, 4294901760
    %v5543 = vsub.f32 %v5037, %v5542
    %v5544 = vand.u32 %v5543, 4294901760
    %5545 = vmatpush1.xpose.msra.mxu0 %v5544
    %5546 = vmatprep.subr.mxu0 0.0
    %v5547 = vand.u32 %v5040, 4294901760
    %v5548 = vsub.f32 %v5040, %v5547
    %v5549 = vand.u32 %v5548, 4294901760
    %5550 = vmatpush1.xpose.msra.mxu0 %v5549
    %5551 = vmatprep.subr.mxu0 0.0
    %v5552 = vand.u32 %v5043, 4294901760
    %v5553 = vsub.f32 %v5043, %v5552
    %v5554 = vand.u32 %v5553, 4294901760
    %5555 = vmatpush1.xpose.msra.mxu0 %v5554
    %5556 = vmatprep.subr.mxu0 0.0
    %v5557 = vand.u32 %v5046, 4294901760
    %v5558 = vsub.f32 %v5046, %v5557
    %v5559 = vand.u32 %v5558, 4294901760
    %5560 = vmatpush1.xpose.msra.mxu0 %v5559
    %5561 = vmatprep.subr.mxu0 0.0
    %v5562 = vand.u32 %v5049, 4294901760
    %v5563 = vsub.f32 %v5049, %v5562
    %v5564 = vand.u32 %v5563, 4294901760
    %5565 = vmatpush1.xpose.msra.mxu0 %v5564
    %5566 = vmatprep.subr.mxu0 0.0
    %5567 = vmatpush1.xpose.msra.mxu0 0.0
    %5568 = vmatprep.subr.mxu0 0.0
    %5569 = vmatpush1.xpose.msra.mxu0 0.0
    %5570 = vmatprep.subr.mxu0 0.0
    %5571 = vmatpush1.xpose.msra.mxu0 0.0
    %5572 = vmatprep.subr.mxu0 0.0
    %5573 = vmatpush1.xpose.msra.mxu0 0.0
    %5574 = vmatprep.subr.mxu0 0.0
    %5575 = vmatpush1.xpose.msra.mxu0 0.0
    %5576 = vmatprep.subr.mxu0 0.0
    %5577 = vmatpush1.xpose.msra.mxu0 0.0
    %5578 = vmatprep.subr.mxu0 0.0
    %5579 = vmatpush1.xpose.msra.mxu0 0.0
    %5580 = vmatprep.subr.mxu0 0.0
    %5581 = vmatpush1.xpose.msra.mxu0 0.0
    %5582 = vmatprep.subr.mxu0 0.0
    %5583 = vmatpush1.xpose.msra.mxu0 0.0
    %5584 = vmatprep.subr.mxu0 0.0
    %5585 = vmatpush1.xpose.msra.mxu0 0.0
    %5586 = vmatprep.subr.mxu0 0.0
    %5587 = vmatpush1.xpose.msra.mxu0 0.0
    %5588 = vmatprep.subr.mxu0 0.0
    %5589 = vmatpush1.xpose.msra.mxu0 0.0
    %5590 = vmatprep.subr.mxu0 0.0
    %5591 = vmatpush1.xpose.msra.mxu0 0.0
    %5592 = vmatprep.subr.mxu0 0.0
    %5593 = vmatpush1.xpose.msra.mxu0 0.0
    %5594 = vmatprep.subr.mxu0 0.0
    %5595 = vmatpush1.xpose.msra.mxu0 0.0
    %5596 = vmatprep.subr.mxu0 0.0
    %5597 = vmatpush1.xpose.msra.mxu0 0.0
    %5598 = vmatprep.mubr.f32.mxu0 0.0
    %v5599 = vand.u32 %v5001, 4294901760
    %5600 = vmatmul.mubr.f32.gmra.mrb[0].mxu0 %v5599
    %v5601 = vpop.f32.mrb[0].mxu0
    %v5602 = vadd.f32 %v5483, %v5601
    %v5603 = vpop.f32.mrb[0].mxu0
    %5604 = vdwg.mxu0
    %5605 = vmatprep.subr.mxu0 0.0
    %v5606 = vand.u32 %v5004, 4294901760
    %5607 = vmatpush1.xpose.msra.mxu0 %v5606
    %5608 = vmatprep.subr.mxu0 0.0
    %v5609 = vand.u32 %v5007, 4294901760
    %5610 = vmatpush1.xpose.msra.mxu0 %v5609
    %5611 = vmatprep.subr.mxu0 0.0
    %v5612 = vand.u32 %v5010, 4294901760
    %5613 = vmatpush1.xpose.msra.mxu0 %v5612
    %5614 = vmatprep.subr.mxu0 0.0
    %v5615 = vand.u32 %v5013, 4294901760
    %5616 = vmatpush1.xpose.msra.mxu0 %v5615
    %5617 = vmatprep.subr.mxu0 0.0
    %v5618 = vand.u32 %v5016, 4294901760
    %5619 = vmatpush1.xpose.msra.mxu0 %v5618
    %5620 = vmatprep.subr.mxu0 0.0
    %v5621 = vand.u32 %v5019, 4294901760
    %5622 = vmatpush1.xpose.msra.mxu0 %v5621
    %5623 = vmatprep.subr.mxu0 0.0
    %v5624 = vand.u32 %v5022, 4294901760
    %5625 = vmatpush1.xpose.msra.mxu0 %v5624
    %5626 = vmatprep.subr.mxu0 0.0
    %v5627 = vand.u32 %v5025, 4294901760
    %5628 = vmatpush1.xpose.msra.mxu0 %v5627
    %5629 = vmatprep.subr.mxu0 0.0
    %v5630 = vand.u32 %v5028, 4294901760
    %5631 = vmatpush1.xpose.msra.mxu0 %v5630
    %5632 = vmatprep.subr.mxu0 0.0
    %v5633 = vand.u32 %v5031, 4294901760
    %5634 = vmatpush1.xpose.msra.mxu0 %v5633
    %5635 = vmatprep.subr.mxu0 0.0
    %v5636 = vand.u32 %v5034, 4294901760
    %5637 = vmatpush1.xpose.msra.mxu0 %v5636
    %5638 = vmatprep.subr.mxu0 0.0
    %v5639 = vand.u32 %v5037, 4294901760
    %5640 = vmatpush1.xpose.msra.mxu0 %v5639
    %5641 = vmatprep.subr.mxu0 0.0
    %v5642 = vand.u32 %v5040, 4294901760
    %5643 = vmatpush1.xpose.msra.mxu0 %v5642
    %5644 = vmatprep.subr.mxu0 0.0
    %v5645 = vand.u32 %v5043, 4294901760
    %5646 = vmatpush1.xpose.msra.mxu0 %v5645
    %5647 = vmatprep.subr.mxu0 0.0
    %v5648 = vand.u32 %v5046, 4294901760
    %5649 = vmatpush1.xpose.msra.mxu0 %v5648
    %5650 = vmatprep.subr.mxu0 0.0
    %v5651 = vand.u32 %v5049, 4294901760
    %5652 = vmatpush1.xpose.msra.mxu0 %v5651
    %5653 = vmatprep.subr.mxu0 0.0
    %5654 = vmatpush1.xpose.msra.mxu0 0.0
    %5655 = vmatprep.subr.mxu0 0.0
    %5656 = vmatpush1.xpose.msra.mxu0 0.0
    %5657 = vmatprep.subr.mxu0 0.0
    %5658 = vmatpush1.xpose.msra.mxu0 0.0
    %5659 = vmatprep.subr.mxu0 0.0
    %5660 = vmatpush1.xpose.msra.mxu0 0.0
    %5661 = vmatprep.subr.mxu0 0.0
    %5662 = vmatpush1.xpose.msra.mxu0 0.0
    %5663 = vmatprep.subr.mxu0 0.0
    %5664 = vmatpush1.xpose.msra.mxu0 0.0
    %5665 = vmatprep.subr.mxu0 0.0
    %5666 = vmatpush1.xpose.msra.mxu0 0.0
    %5667 = vmatprep.subr.mxu0 0.0
    %5668 = vmatpush1.xpose.msra.mxu0 0.0
    %5669 = vmatprep.subr.mxu0 0.0
    %5670 = vmatpush1.xpose.msra.mxu0 0.0
    %5671 = vmatprep.subr.mxu0 0.0
    %5672 = vmatpush1.xpose.msra.mxu0 0.0
    %5673 = vmatprep.subr.mxu0 0.0
    %5674 = vmatpush1.xpose.msra.mxu0 0.0
    %5675 = vmatprep.subr.mxu0 0.0
    %5676 = vmatpush1.xpose.msra.mxu0 0.0
    %5677 = vmatprep.subr.mxu0 0.0
    %5678 = vmatpush1.xpose.msra.mxu0 0.0
    %5679 = vmatprep.subr.mxu0 0.0
    %5680 = vmatpush1.xpose.msra.mxu0 0.0
    %5681 = vmatprep.subr.mxu0 0.0
    %5682 = vmatpush1.xpose.msra.mxu0 0.0
    %5683 = vmatprep.subr.mxu0 0.0
    %5684 = vmatpush1.xpose.msra.mxu0 0.0
    %5685 = vmatprep.mubr.f32.mxu0 0.0
    %v5686 = vand.u32 %v5001, 4294901760
    %5687 = vmatmul.mubr.f32.gmra.mrb[0].mxu0 %v5686
    %v5688 = vpop.f32.mrb[0].mxu0
    %v5689 = vadd.f32 %v5602, %v5688
    %v5690 = vpop.f32.mrb[0].mxu0
    %5691 = vdwg.mxu0
    %v5692 = vmul.f32 %v845, 0.03125
    %v5693 = vmul.f32 %v1537, 0.03125
    %v5694 = vmul.f32 %v2229, 0.03125
    %v5695 = vmul.f32 %v2921, 0.03125
    %v5696 = vmul.f32 %v3613, 0.03125
    %v5697 = vmul.f32 %v4305, 0.03125
    %v5698 = vmul.f32 %v4997, 0.03125
    %v5699 = vmul.f32 %v5689, 0.03125
    %s5700 = smul.u32 0, 8
    %v5701 = vlaneseq
    %v5702 = vshrl.u32 %v5701, 7
    %vm5703 = vcmp.eq.s32.totalorder %v5702, 0
    %s5704 = sld [smem:[#allocation3 + %s5700]]
    %v5705 = vstv %s5704
    %v5706 = vsel %vm5703, %v5705, 0
    %vm5707 = vcmp.eq.s32.totalorder %v5702, 1
    %s5708 = sadd.s32 %s5700, 1
    %s5709 = sld [smem:[#allocation3 + %s5708]]
    %v5710 = vstv %s5709
    %v5711 = vsel %vm5707, %v5710, %v5706
    %vm5712 = vcmp.eq.s32.totalorder %v5702, 2
    %s5713 = sadd.s32 %s5700, 2
    %s5714 = sld [smem:[#allocation3 + %s5713]]
    %v5715 = vstv %s5714
    %v5716 = vsel %vm5712, %v5715, %v5711
    %vm5717 = vcmp.eq.s32.totalorder %v5702, 3
    %s5718 = sadd.s32 %s5700, 3
    %s5719 = sld [smem:[#allocation3 + %s5718]]
    %v5720 = vstv %s5719
    %v5721 = vsel %vm5717, %v5720, %v5716
    %vm5722 = vcmp.eq.s32.totalorder %v5702, 4
    %s5723 = sadd.s32 %s5700, 4
    %s5724 = sld [smem:[#allocation3 + %s5723]]
    %v5725 = vstv %s5724
    %v5726 = vsel %vm5722, %v5725, %v5721
    %vm5727 = vcmp.eq.s32.totalorder %v5702, 5
    %s5728 = sadd.s32 %s5700, 5
    %s5729 = sld [smem:[#allocation3 + %s5728]]
    %v5730 = vstv %s5729
    %v5731 = vsel %vm5727, %v5730, %v5726
    %vm5732 = vcmp.eq.s32.totalorder %v5702, 6
    %s5733 = sadd.s32 %s5700, 6
    %s5734 = sld [smem:[#allocation3 + %s5733]]
    %v5735 = vstv %s5734
    %v5736 = vsel %vm5732, %v5735, %v5731
    %vm5737 = vcmp.eq.s32.totalorder %v5702, 7
    %s5738 = sadd.s32 %s5700, 7
    %s5739 = sld [smem:[#allocation3 + %s5738]]
    %v5740 = vstv %s5739
    %v5741 = vsel %vm5737, %v5740, %v5736
    %v5742 = vlaneseq
    %v5743 = vand.u32 %v5742, 127
    %vm5744 = vcmp.lt.s32.totalorder %v5743, %v5741
    %v5745 = vsel %vm5744, 1, 0
    %v5746 = vcvt.s32.f32 %v5745
    %v5747 = vmul.f32 %v5692, 1.442695
    %v5748 = vpow.pop %v5747
    %v5749 = vmul.f32 %v5693, 1.442695
    %v5750 = vpow.pop %v5749
    %v5751 = vmul.f32 %v5694, 1.442695
    %v5752 = vpow.pop %v5751
    %v5753 = vmul.f32 %v5695, 1.442695
    %v5754 = vpow.pop %v5753
    %v5755 = vmul.f32 %v5696, 1.442695
    %v5756 = vpow.pop %v5755
    %v5757 = vmul.f32 %v5697, 1.442695
    %v5758 = vpow.pop %v5757
    %v5759 = vmul.f32 %v5698, 1.442695
    %v5760 = vpow.pop %v5759
    %v5761 = vmul.f32 %v5699, 1.442695
    %v5762 = vpow.pop %v5761
    %v5764 = vrot.slane %v5746, 1
    %v5765 = vrot.slane %v5746, 2
    %v5766 = vrot.slane %v5746, 3
    %v5767 = vrot.slane %v5746, 4
    %v5768 = vrot.slane %v5746, 5
    %v5769 = vrot.slane %v5746, 6
    %v5770 = vrot.slane %v5746, 7
    %v5779 = vmul.f32 %v5748, %v5746
    %v5780 = vmul.f32 %v5750, %v5764
    %v5781 = vmul.f32 %v5752, %v5765
    %v5782 = vmul.f32 %v5754, %v5766
    %v5783 = vmul.f32 %v5756, %v5767
    %v5784 = vmul.f32 %v5758, %v5768
    %v5785 = vmul.f32 %v5760, %v5769
    %v5786 = vmul.f32 %v5762, %v5770
    %v5795 = vrot.slane %v5780, 7
    %vm5796 = vcmask 1041409
    %v5797 = vsel %vm5796, %v5795, %v5779
    %v5798 = vrot.slane %v5781, 6
    %vm5799 = vcmask 1042434
    %v5800 = vsel %vm5799, %v5798, %v5797
    %v5801 = vrot.slane %v5782, 5
    %vm5802 = vcmask 1043459
    %v5803 = vsel %vm5802, %v5801, %v5800
    %v5804 = vrot.slane %v5783, 4
    %vm5805 = vcmask 1044484
    %v5806 = vsel %vm5805, %v5804, %v5803
    %v5807 = vrot.slane %v5784, 3
    %vm5808 = vcmask 1045509
    %v5809 = vsel %vm5808, %v5807, %v5806
    %v5810 = vrot.slane %v5785, 2
    %vm5811 = vcmask 1046534
    %v5812 = vsel %vm5811, %v5810, %v5809
    %v5813 = vrot.slane %v5786, 1
    %vm5814 = vcmask 1047559
    %v5815 = vsel %vm5814, %v5813, %v5812
    %5817 = vadd.xlane.f32.xlu0 %v5815
    %v5818 = vpop.xlane.xlu0 %5817
    %v5819 = vadd.f32 %v5818, 0.0001
    %v5820 = vrcp.pop %v5819
    %v5821 = vmul.f32 %v5819, %v5820
    %v5822 = vsub.f32 2.0, %v5821
    %v5823 = vmul.f32 %v5820, %v5822
    %v5825 = vrot.slane %v5823, 1
    %v5826 = vrot.slane %v5823, 2
    %v5827 = vrot.slane %v5823, 3
    %v5828 = vrot.slane %v5823, 4
    %v5829 = vrot.slane %v5823, 5
    %v5830 = vrot.slane %v5823, 6
    %v5831 = vrot.slane %v5823, 7
    %v5840 = vmul.f32 %v5779, %v5823
    %v5841 = vmul.f32 %v5780, %v5825
    %v5842 = vmul.f32 %v5781, %v5826
    %v5843 = vmul.f32 %v5782, %v5827
    %v5844 = vmul.f32 %v5783, %v5828
    %v5845 = vmul.f32 %v5784, %v5829
    %v5846 = vmul.f32 %v5785, %v5830
    %v5847 = vmul.f32 %v5786, %v5831
    %v5856 = vrot.slane %v5841, 7
    %v5857 = vsel %vm5796, %v5856, %v5840
    %v5858 = vrot.slane %v5842, 6
    %v5859 = vsel %vm5799, %v5858, %v5857
    %v5860 = vrot.slane %v5843, 5
    %v5861 = vsel %vm5802, %v5860, %v5859
    %v5862 = vrot.slane %v5844, 4
    %v5863 = vsel %vm5805, %v5862, %v5861
    %v5864 = vrot.slane %v5845, 3
    %v5865 = vsel %vm5808, %v5864, %v5863
    %v5866 = vrot.slane %v5846, 2
    %v5867 = vsel %vm5811, %v5866, %v5865
    %v5868 = vrot.slane %v5847, 1
    %v5869 = vsel %vm5814, %v5868, %v5867
    %5871 = vst [vmem:[#allocation4] sm:$0xff] %v5869
    // Predicated region
    $region10: #{tpu_custom_call.1} parent=1 // pred_check
      _
    $region11: #{tpu_custom_call.1} parent=1 // pred_check_branch
      %5873 = sbr.rel (0) target = $region13
    $region12: #{tpu_custom_call.1} parent=1 // pred_region
      %s5875 = ssub.s32 128, 128
      %5876 = vsyncadd [#allocation5], %s5875
      %s5878 = sshll.u32 [#allocation4], 4
      %s5879 = int_to_ptr.vmem [resolvable:$true] %s5878
      %5881 = dma.vmem_to_hbm [thread:$0]  %s5879, 128, %s3, [#allocation5]
    $region13: #{tpu_custom_call.1} parent=1 // pred_fallthru
      _
    // Predicated region
    $region14: #{tpu_custom_call.1} parent=1 // pred_check
      _
    $region15: #{tpu_custom_call.1} parent=1 // pred_check_branch
      %5883 = sbr.rel (0) target = $region17
    $region16: #{tpu_custom_call.1} parent=1 // pred_region
      %5884 = dma.done [#allocation5], 128
    $region17: #{tpu_custom_call.1} parent=1 // pred_fallthru
      _
    %5885 = vsyncpa [#allocation5], 1

</llo_original>
